<compile_context>
chip_gen: v7x
topology: tpu7x:2x2x1
jax: 0.10.0
libtpu: 0.0.40
codegen_flags: <defaults>
</compile_context>

<pallas_src>
import jax
import jax.numpy as jnp
from jax.experimental import pallas as pl
from jax.experimental.pallas import tpu as pltpu


def rnn_kernel(x_ref, wih_ref, whh_ref, b_ref, wo_ref, bo_ref,
               allout_ref, hn_ref, xw_scr, hall_scr):
    Bp, H = hn_ref.shape          # padded batch, hidden size
    TBp = xw_scr.shape[0]
    T = TBp // Bp                 # static timestep count

    # ---- hoisted input projection: one matmul covering all timesteps ----
    xw_scr[...] = (jnp.dot(x_ref[...], wih_ref[...],
                           preferred_element_type=jnp.float32)
                   + b_ref[...])

    whh = whh_ref[...]            # (H, H), loaded once, reused every step

    # ---- sequential recurrence: only h @ W_hh^T per step ----
    def step(t, h):
        row = t * Bp
        pre = xw_scr[pl.ds(row, Bp), :] + jnp.dot(
            h, whh, preferred_element_type=jnp.float32)
        h_new = jnp.maximum(pre, 0.0)           # relu nonlinearity
        hall_scr[pl.ds(row, Bp), :] = h_new
        return h_new

    h_final = jax.lax.fori_loop(0, T, step,
                                jnp.zeros((Bp, H), jnp.float32),  # h0=None -> zeros
                                unroll=True)
    hn_ref[...] = h_final

    # ---- batched output projection + log_softmax, single bulk store ----
    logits = (jnp.dot(hall_scr[...], wo_ref[...],
                      preferred_element_type=jnp.float32)
              + bo_ref[...])                     # (T*Bp, O)
    m = jnp.max(logits, axis=-1, keepdims=True)
    lse = jnp.log(jnp.sum(jnp.exp(logits - m), axis=-1, keepdims=True)) + m
    allout_ref[...] = logits - lse


@jax.jit
def rnn_forward(x_btI, W_ih, W_hh, b_ih, b_hh, W_o, b_o):
    """x_btI: (B, T, I) batch-first, like the PyTorch module (h0=None path).

    Returns (all_out, last_out, h_n) with all_out stacked as a (T, B, O) array
    (all_out[t] == log_softmax(W_o(output[:, t, :]))).
    """
    B, T, I = x_btI.shape
    H = W_ih.shape[0]
    O = W_o.shape[0]
    Bp = ((B + 7) // 8) * 8          # pad batch to a sublane multiple (aligned slices)

    # Time-major, batch-padded, flattened to rows ordered (t, b): (T*Bp, I).
    x_tb = jnp.zeros((T, Bp, I), jnp.float32)
    x_tb = x_tb.at[:, :B, :].set(jnp.transpose(x_btI, (1, 0, 2)).astype(jnp.float32))
    x2 = x_tb.reshape(T * Bp, I)

    b = (b_ih + b_hh).reshape(1, H).astype(jnp.float32)
    bo = b_o.reshape(1, O).astype(jnp.float32)

    allout, hn = pl.pallas_call(
        rnn_kernel,
        out_shape=(
            jax.ShapeDtypeStruct((T * Bp, O), jnp.float32),   # all timesteps, bulk
            jax.ShapeDtypeStruct((Bp, H), jnp.float32),       # final hidden state
        ),
        in_specs=[pl.BlockSpec(memory_space=pltpu.MemorySpace.VMEM)] * 6,
        out_specs=(pl.BlockSpec(memory_space=pltpu.MemorySpace.VMEM),
                   pl.BlockSpec(memory_space=pltpu.MemorySpace.VMEM)),
        scratch_shapes=[
            pltpu.VMEM((T * Bp, H), jnp.float32),   # x @ W_ih^T + b for all steps
            pltpu.VMEM((T * Bp, H), jnp.float32),   # hidden states for all steps
        ],
    )(x2, W_ih.T.astype(jnp.float32), W_hh.T.astype(jnp.float32), b,
      W_o.T.astype(jnp.float32), bo)

    all_out = allout.reshape(T, Bp, O)[:, :B, :]     # (T, B, O)
    last_out = all_out[T - 1]                        # == log_softmax(W_o(h_n))
    h_n = hn[:B][None, :, :]                         # (1, B, H)
    return all_out, last_out, h_n


def rnn_reference(x_btI, W_ih, W_hh, b_ih, b_hh, W_o, b_o):
    """Pure-JAX reference matching nn.RNN(relu) + Linear + LogSoftmax."""
    B, T, I = x_btI.shape
    H = W_ih.shape[0]
    h = jnp.zeros((B, H), jnp.float32)
    outs = []
    for t in range(T):
        pre = x_btI[:, t, :] @ W_ih.T + b_ih + h @ W_hh.T + b_hh
        h = jnp.maximum(pre, 0.0)
        logits = h @ W_o.T + b_o
        outs.append(jax.nn.log_softmax(logits, axis=-1))
    last_logits = h @ W_o.T + b_o
    last_out = jax.nn.log_softmax(last_logits, axis=-1)
    return jnp.stack(outs, axis=0), last_out, h[None]


if __name__ == "__main__":
    # Small shapes consistent with the module: seq must be >= 30 (range(30) in forward).
    batch, seq, input_size, hidden_size, output_size = 4, 30, 8, 32, 16

    key = jax.random.PRNGKey(0)
    k = jax.random.split(key, 8)
    scale = 1.0 / jnp.sqrt(hidden_size)
    x = jax.random.normal(k[0], (batch, seq, input_size), jnp.float32)
    W_ih = jax.random.uniform(k[1], (hidden_size, input_size), jnp.float32, -scale, scale)
    W_hh = jax.random.uniform(k[2], (hidden_size, hidden_size), jnp.float32, -scale, scale)
    b_ih = jax.random.uniform(k[3], (hidden_size,), jnp.float32, -scale, scale)
    b_hh = jax.random.uniform(k[4], (hidden_size,), jnp.float32, -scale, scale)
    W_o = jax.random.uniform(k[5], (output_size, hidden_size), jnp.float32, -scale, scale)
    b_o = jax.random.uniform(k[6], (output_size,), jnp.float32, -scale, scale)

    all_out, last_out, h_n = rnn_forward(x, W_ih, W_hh, b_ih, b_hh, W_o, b_o)
    jax.block_until_ready(all_out)
    jax.block_until_ready(last_out)
    jax.block_until_ready(h_n)

    # Correctness check against pure-JAX reference.
    ref_all, ref_last, ref_hn = rnn_reference(x, W_ih, W_hh, b_ih, b_hh, W_o, b_o)
    assert all_out.shape == (seq, batch, output_size)
    assert last_out.shape == (batch, output_size)
    assert h_n.shape == (1, batch, hidden_size)
    assert jnp.allclose(all_out, ref_all, atol=1e-4, rtol=1e-4)
    assert jnp.allclose(last_out, ref_last, atol=1e-4, rtol=1e-4)
    assert jnp.allclose(h_n, ref_hn, atol=1e-4, rtol=1e-4)

    print("KERNEL_OK")
</pallas_src>

<mosaic_0001>
module attributes {stable_mosaic.version = 11 : i64} {
  func.func @rnn_kernel(%arg0: memref<240x8xf32, #tpu.memory_space<vmem>>, %arg1: memref<8x32xf32, #tpu.memory_space<vmem>>, %arg2: memref<32x32xf32, #tpu.memory_space<vmem>>, %arg3: memref<1x32xf32, #tpu.memory_space<vmem>>, %arg4: memref<32x16xf32, #tpu.memory_space<vmem>>, %arg5: memref<1x16xf32, #tpu.memory_space<vmem>>, %arg6: memref<240x16xf32, #tpu.memory_space<vmem>>, %arg7: memref<8x32xf32, #tpu.memory_space<vmem>>, %arg8: memref<240x32xf32, #tpu.memory_space<vmem>>, %arg9: memref<240x32xf32, #tpu.memory_space<vmem>>) attributes {dimension_semantics = [], scalar_prefetch = 0 : i64, scratch_operands = 2 : i64, tpu.core_type = #tpu.core_type<tc>} {
    %c0 = arith.constant 0 : index
    %c0_0 = arith.constant 0 : index
    %0 = vector.load %arg0[%c0, %c0_0] : memref<240x8xf32, #tpu.memory_space<vmem>>, vector<240x8xf32>
    %c0_1 = arith.constant 0 : index
    %c0_2 = arith.constant 0 : index
    %1 = vector.load %arg1[%c0_1, %c0_2] : memref<8x32xf32, #tpu.memory_space<vmem>>, vector<8x32xf32>
    %cst = arith.constant dense<0.000000e+00> : vector<240x32xf32>
    %2 = tpu.matmul %0, %1, %cst {dimension_numbers = #tpu.dot_dimension_numbers<[1], [0], [0], [1], [0, 0, 1, 1], [], []>} : vector<240x8xf32>, vector<8x32xf32>, vector<240x32xf32> -> vector<240x32xf32>
    %c0_3 = arith.constant 0 : index
    %c0_4 = arith.constant 0 : index
    %3 = vector.load %arg3[%c0_3, %c0_4] : memref<1x32xf32, #tpu.memory_space<vmem>>, vector<1x32xf32>
    %4 = vector.broadcast %3 : vector<1x32xf32> to vector<240x32xf32>
    %5 = arith.addf %2, %4 : vector<240x32xf32>
    %c0_5 = arith.constant 0 : index
    %c0_6 = arith.constant 0 : index
    %6 = vector.load %arg8[%c0_5, %c0_6] : memref<240x32xf32, #tpu.memory_space<vmem>>, vector<240x32xf32>
    tpu.vector_store %arg8[%c0_5, %c0_6], %5 {strides = array<i32>} : memref<240x32xf32, #tpu.memory_space<vmem>>, vector<240x32xf32>,
    %c0_7 = arith.constant 0 : index
    %c0_8 = arith.constant 0 : index
    %7 = vector.load %arg2[%c0_7, %c0_8] : memref<32x32xf32, #tpu.memory_space<vmem>>, vector<32x32xf32>
    %cst_9 = arith.constant 0.000000e+00 : f32
    %8 = vector.broadcast %cst_9 : f32 to vector<8x32xf32>
    %c0_i32 = arith.constant 0 : i32
    %c8_i32 = arith.constant 8 : i32
    %9 = arith.muli %c0_i32, %c8_i32 : i32
    %10 = arith.index_cast %9 : i32 to index
    %c0_10 = arith.constant 0 : index
    %11 = vector.load %arg8[%10, %c0_10] : memref<240x32xf32, #tpu.memory_space<vmem>>, vector<8x32xf32>
    %cst_11 = arith.constant dense<0.000000e+00> : vector<8x32xf32>
    %12 = tpu.matmul %8, %7, %cst_11 {dimension_numbers = #tpu.dot_dimension_numbers<[1], [0], [0], [1], [0, 0, 1, 1], [], []>} : vector<8x32xf32>, vector<32x32xf32>, vector<8x32xf32> -> vector<8x32xf32>
    %13 = arith.addf %11, %12 : vector<8x32xf32>
    %cst_12 = arith.constant 0.000000e+00 : f32
    %14 = vector.broadcast %cst_12 : f32 to vector<8x32xf32>
    %15 = arith.maximumf %13, %14 : vector<8x32xf32>
    %16 = arith.index_cast %9 : i32 to index
    %c0_13 = arith.constant 0 : index
    %17 = vector.load %arg9[%16, %c0_13] : memref<240x32xf32, #tpu.memory_space<vmem>>, vector<8x32xf32>
    tpu.vector_store %arg9[%16, %c0_13], %15 {strides = array<i32>} : memref<240x32xf32, #tpu.memory_space<vmem>>, vector<8x32xf32>,
    %c1_i32 = arith.constant 1 : i32
    %c8_i32_14 = arith.constant 8 : i32
    %18 = arith.muli %c1_i32, %c8_i32_14 : i32
    %19 = arith.index_cast %18 : i32 to index
    %c0_15 = arith.constant 0 : index
    %20 = vector.load %arg8[%19, %c0_15] : memref<240x32xf32, #tpu.memory_space<vmem>>, vector<8x32xf32>
    %cst_16 = arith.constant dense<0.000000e+00> : vector<8x32xf32>
    %21 = tpu.matmul %15, %7, %cst_16 {dimension_numbers = #tpu.dot_dimension_numbers<[1], [0], [0], [1], [0, 0, 1, 1], [], []>} : vector<8x32xf32>, vector<32x32xf32>, vector<8x32xf32> -> vector<8x32xf32>
    %22 = arith.addf %20, %21 : vector<8x32xf32>
    %cst_17 = arith.constant 0.000000e+00 : f32
    %23 = vector.broadcast %cst_17 : f32 to vector<8x32xf32>
    %24 = arith.maximumf %22, %23 : vector<8x32xf32>
    %25 = arith.index_cast %18 : i32 to index
    %c0_18 = arith.constant 0 : index
    %26 = vector.load %arg9[%25, %c0_18] : memref<240x32xf32, #tpu.memory_space<vmem>>, vector<8x32xf32>
    tpu.vector_store %arg9[%25, %c0_18], %24 {strides = array<i32>} : memref<240x32xf32, #tpu.memory_space<vmem>>, vector<8x32xf32>,
    %c2_i32 = arith.constant 2 : i32
    %c8_i32_19 = arith.constant 8 : i32
    %27 = arith.muli %c2_i32, %c8_i32_19 : i32
    %28 = arith.index_cast %27 : i32 to index
    %c0_20 = arith.constant 0 : index
    %29 = vector.load %arg8[%28, %c0_20] : memref<240x32xf32, #tpu.memory_space<vmem>>, vector<8x32xf32>
    %cst_21 = arith.constant dense<0.000000e+00> : vector<8x32xf32>
    %30 = tpu.matmul %24, %7, %cst_21 {dimension_numbers = #tpu.dot_dimension_numbers<[1], [0], [0], [1], [0, 0, 1, 1], [], []>} : vector<8x32xf32>, vector<32x32xf32>, vector<8x32xf32> -> vector<8x32xf32>
    %31 = arith.addf %29, %30 : vector<8x32xf32>
    %cst_22 = arith.constant 0.000000e+00 : f32
    %32 = vector.broadcast %cst_22 : f32 to vector<8x32xf32>
    %33 = arith.maximumf %31, %32 : vector<8x32xf32>
    %34 = arith.index_cast %27 : i32 to index
    %c0_23 = arith.constant 0 : index
    %35 = vector.load %arg9[%34, %c0_23] : memref<240x32xf32, #tpu.memory_space<vmem>>, vector<8x32xf32>
    tpu.vector_store %arg9[%34, %c0_23], %33 {strides = array<i32>} : memref<240x32xf32, #tpu.memory_space<vmem>>, vector<8x32xf32>,
    %c3_i32 = arith.constant 3 : i32
    %c8_i32_24 = arith.constant 8 : i32
    %36 = arith.muli %c3_i32, %c8_i32_24 : i32
    %37 = arith.index_cast %36 : i32 to index
    %c0_25 = arith.constant 0 : index
    %38 = vector.load %arg8[%37, %c0_25] : memref<240x32xf32, #tpu.memory_space<vmem>>, vector<8x32xf32>
    %cst_26 = arith.constant dense<0.000000e+00> : vector<8x32xf32>
    %39 = tpu.matmul %33, %7, %cst_26 {dimension_numbers = #tpu.dot_dimension_numbers<[1], [0], [0], [1], [0, 0, 1, 1], [], []>} : vector<8x32xf32>, vector<32x32xf32>, vector<8x32xf32> -> vector<8x32xf32>
    %40 = arith.addf %38, %39 : vector<8x32xf32>
    %cst_27 = arith.constant 0.000000e+00 : f32
    %41 = vector.broadcast %cst_27 : f32 to vector<8x32xf32>
    %42 = arith.maximumf %40, %41 : vector<8x32xf32>
    %43 = arith.index_cast %36 : i32 to index
    %c0_28 = arith.constant 0 : index
    %44 = vector.load %arg9[%43, %c0_28] : memref<240x32xf32, #tpu.memory_space<vmem>>, vector<8x32xf32>
    tpu.vector_store %arg9[%43, %c0_28], %42 {strides = array<i32>} : memref<240x32xf32, #tpu.memory_space<vmem>>, vector<8x32xf32>,
    %c4_i32 = arith.constant 4 : i32
    %c8_i32_29 = arith.constant 8 : i32
    %45 = arith.muli %c4_i32, %c8_i32_29 : i32
    %46 = arith.index_cast %45 : i32 to index
    %c0_30 = arith.constant 0 : index
    %47 = vector.load %arg8[%46, %c0_30] : memref<240x32xf32, #tpu.memory_space<vmem>>, vector<8x32xf32>
    %cst_31 = arith.constant dense<0.000000e+00> : vector<8x32xf32>
    %48 = tpu.matmul %42, %7, %cst_31 {dimension_numbers = #tpu.dot_dimension_numbers<[1], [0], [0], [1], [0, 0, 1, 1], [], []>} : vector<8x32xf32>, vector<32x32xf32>, vector<8x32xf32> -> vector<8x32xf32>
    %49 = arith.addf %47, %48 : vector<8x32xf32>
    %cst_32 = arith.constant 0.000000e+00 : f32
    %50 = vector.broadcast %cst_32 : f32 to vector<8x32xf32>
    %51 = arith.maximumf %49, %50 : vector<8x32xf32>
    %52 = arith.index_cast %45 : i32 to index
    %c0_33 = arith.constant 0 : index
    %53 = vector.load %arg9[%52, %c0_33] : memref<240x32xf32, #tpu.memory_space<vmem>>, vector<8x32xf32>
    tpu.vector_store %arg9[%52, %c0_33], %51 {strides = array<i32>} : memref<240x32xf32, #tpu.memory_space<vmem>>, vector<8x32xf32>,
    %c5_i32 = arith.constant 5 : i32
    %c8_i32_34 = arith.constant 8 : i32
    %54 = arith.muli %c5_i32, %c8_i32_34 : i32
    %55 = arith.index_cast %54 : i32 to index
    %c0_35 = arith.constant 0 : index
    %56 = vector.load %arg8[%55, %c0_35] : memref<240x32xf32, #tpu.memory_space<vmem>>, vector<8x32xf32>
    %cst_36 = arith.constant dense<0.000000e+00> : vector<8x32xf32>
    %57 = tpu.matmul %51, %7, %cst_36 {dimension_numbers = #tpu.dot_dimension_numbers<[1], [0], [0], [1], [0, 0, 1, 1], [], []>} : vector<8x32xf32>, vector<32x32xf32>, vector<8x32xf32> -> vector<8x32xf32>
    %58 = arith.addf %56, %57 : vector<8x32xf32>
    %cst_37 = arith.constant 0.000000e+00 : f32
    %59 = vector.broadcast %cst_37 : f32 to vector<8x32xf32>
    %60 = arith.maximumf %58, %59 : vector<8x32xf32>
    %61 = arith.index_cast %54 : i32 to index
    %c0_38 = arith.constant 0 : index
    %62 = vector.load %arg9[%61, %c0_38] : memref<240x32xf32, #tpu.memory_space<vmem>>, vector<8x32xf32>
    tpu.vector_store %arg9[%61, %c0_38], %60 {strides = array<i32>} : memref<240x32xf32, #tpu.memory_space<vmem>>, vector<8x32xf32>,
    %c6_i32 = arith.constant 6 : i32
    %c8_i32_39 = arith.constant 8 : i32
    %63 = arith.muli %c6_i32, %c8_i32_39 : i32
    %64 = arith.index_cast %63 : i32 to index
    %c0_40 = arith.constant 0 : index
    %65 = vector.load %arg8[%64, %c0_40] : memref<240x32xf32, #tpu.memory_space<vmem>>, vector<8x32xf32>
    %cst_41 = arith.constant dense<0.000000e+00> : vector<8x32xf32>
    %66 = tpu.matmul %60, %7, %cst_41 {dimension_numbers = #tpu.dot_dimension_numbers<[1], [0], [0], [1], [0, 0, 1, 1], [], []>} : vector<8x32xf32>, vector<32x32xf32>, vector<8x32xf32> -> vector<8x32xf32>
    %67 = arith.addf %65, %66 : vector<8x32xf32>
    %cst_42 = arith.constant 0.000000e+00 : f32
    %68 = vector.broadcast %cst_42 : f32 to vector<8x32xf32>
    %69 = arith.maximumf %67, %68 : vector<8x32xf32>
    %70 = arith.index_cast %63 : i32 to index
    %c0_43 = arith.constant 0 : index
    %71 = vector.load %arg9[%70, %c0_43] : memref<240x32xf32, #tpu.memory_space<vmem>>, vector<8x32xf32>
    tpu.vector_store %arg9[%70, %c0_43], %69 {strides = array<i32>} : memref<240x32xf32, #tpu.memory_space<vmem>>, vector<8x32xf32>,
    %c7_i32 = arith.constant 7 : i32
    %c8_i32_44 = arith.constant 8 : i32
    %72 = arith.muli %c7_i32, %c8_i32_44 : i32
    %73 = arith.index_cast %72 : i32 to index
    %c0_45 = arith.constant 0 : index
    %74 = vector.load %arg8[%73, %c0_45] : memref<240x32xf32, #tpu.memory_space<vmem>>, vector<8x32xf32>
    %cst_46 = arith.constant dense<0.000000e+00> : vector<8x32xf32>
    %75 = tpu.matmul %69, %7, %cst_46 {dimension_numbers = #tpu.dot_dimension_numbers<[1], [0], [0], [1], [0, 0, 1, 1], [], []>} : vector<8x32xf32>, vector<32x32xf32>, vector<8x32xf32> -> vector<8x32xf32>
    %76 = arith.addf %74, %75 : vector<8x32xf32>
    %cst_47 = arith.constant 0.000000e+00 : f32
    %77 = vector.broadcast %cst_47 : f32 to vector<8x32xf32>
    %78 = arith.maximumf %76, %77 : vector<8x32xf32>
    %79 = arith.index_cast %72 : i32 to index
    %c0_48 = arith.constant 0 : index
    %80 = vector.load %arg9[%79, %c0_48] : memref<240x32xf32, #tpu.memory_space<vmem>>, vector<8x32xf32>
    tpu.vector_store %arg9[%79, %c0_48], %78 {strides = array<i32>} : memref<240x32xf32, #tpu.memory_space<vmem>>, vector<8x32xf32>,
    %c8_i32_49 = arith.constant 8 : i32
    %c8_i32_50 = arith.constant 8 : i32
    %81 = arith.muli %c8_i32_49, %c8_i32_50 : i32
    %82 = arith.index_cast %81 : i32 to index
    %c0_51 = arith.constant 0 : index
    %83 = vector.load %arg8[%82, %c0_51] : memref<240x32xf32, #tpu.memory_space<vmem>>, vector<8x32xf32>
    %cst_52 = arith.constant dense<0.000000e+00> : vector<8x32xf32>
    %84 = tpu.matmul %78, %7, %cst_52 {dimension_numbers = #tpu.dot_dimension_numbers<[1], [0], [0], [1], [0, 0, 1, 1], [], []>} : vector<8x32xf32>, vector<32x32xf32>, vector<8x32xf32> -> vector<8x32xf32>
    %85 = arith.addf %83, %84 : vector<8x32xf32>
    %cst_53 = arith.constant 0.000000e+00 : f32
    %86 = vector.broadcast %cst_53 : f32 to vector<8x32xf32>
    %87 = arith.maximumf %85, %86 : vector<8x32xf32>
    %88 = arith.index_cast %81 : i32 to index
    %c0_54 = arith.constant 0 : index
    %89 = vector.load %arg9[%88, %c0_54] : memref<240x32xf32, #tpu.memory_space<vmem>>, vector<8x32xf32>
    tpu.vector_store %arg9[%88, %c0_54], %87 {strides = array<i32>} : memref<240x32xf32, #tpu.memory_space<vmem>>, vector<8x32xf32>,
    %c9_i32 = arith.constant 9 : i32
    %c8_i32_55 = arith.constant 8 : i32
    %90 = arith.muli %c9_i32, %c8_i32_55 : i32
    %91 = arith.index_cast %90 : i32 to index
    %c0_56 = arith.constant 0 : index
    %92 = vector.load %arg8[%91, %c0_56] : memref<240x32xf32, #tpu.memory_space<vmem>>, vector<8x32xf32>
    %cst_57 = arith.constant dense<0.000000e+00> : vector<8x32xf32>
    %93 = tpu.matmul %87, %7, %cst_57 {dimension_numbers = #tpu.dot_dimension_numbers<[1], [0], [0], [1], [0, 0, 1, 1], [], []>} : vector<8x32xf32>, vector<32x32xf32>, vector<8x32xf32> -> vector<8x32xf32>
    %94 = arith.addf %92, %93 : vector<8x32xf32>
    %cst_58 = arith.constant 0.000000e+00 : f32
    %95 = vector.broadcast %cst_58 : f32 to vector<8x32xf32>
    %96 = arith.maximumf %94, %95 : vector<8x32xf32>
    %97 = arith.index_cast %90 : i32 to index
    %c0_59 = arith.constant 0 : index
    %98 = vector.load %arg9[%97, %c0_59] : memref<240x32xf32, #tpu.memory_space<vmem>>, vector<8x32xf32>
    tpu.vector_store %arg9[%97, %c0_59], %96 {strides = array<i32>} : memref<240x32xf32, #tpu.memory_space<vmem>>, vector<8x32xf32>,
    %c10_i32 = arith.constant 10 : i32
    %c8_i32_60 = arith.constant 8 : i32
    %99 = arith.muli %c10_i32, %c8_i32_60 : i32
    %100 = arith.index_cast %99 : i32 to index
    %c0_61 = arith.constant 0 : index
    %101 = vector.load %arg8[%100, %c0_61] : memref<240x32xf32, #tpu.memory_space<vmem>>, vector<8x32xf32>
    %cst_62 = arith.constant dense<0.000000e+00> : vector<8x32xf32>
    %102 = tpu.matmul %96, %7, %cst_62 {dimension_numbers = #tpu.dot_dimension_numbers<[1], [0], [0], [1], [0, 0, 1, 1], [], []>} : vector<8x32xf32>, vector<32x32xf32>, vector<8x32xf32> -> vector<8x32xf32>
    %103 = arith.addf %101, %102 : vector<8x32xf32>
    %cst_63 = arith.constant 0.000000e+00 : f32
    %104 = vector.broadcast %cst_63 : f32 to vector<8x32xf32>
    %105 = arith.maximumf %103, %104 : vector<8x32xf32>
    %106 = arith.index_cast %99 : i32 to index
    %c0_64 = arith.constant 0 : index
    %107 = vector.load %arg9[%106, %c0_64] : memref<240x32xf32, #tpu.memory_space<vmem>>, vector<8x32xf32>
    tpu.vector_store %arg9[%106, %c0_64], %105 {strides = array<i32>} : memref<240x32xf32, #tpu.memory_space<vmem>>, vector<8x32xf32>,
    %c11_i32 = arith.constant 11 : i32
    %c8_i32_65 = arith.constant 8 : i32
    %108 = arith.muli %c11_i32, %c8_i32_65 : i32
    %109 = arith.index_cast %108 : i32 to index
    %c0_66 = arith.constant 0 : index
    %110 = vector.load %arg8[%109, %c0_66] : memref<240x32xf32, #tpu.memory_space<vmem>>, vector<8x32xf32>
    %cst_67 = arith.constant dense<0.000000e+00> : vector<8x32xf32>
    %111 = tpu.matmul %105, %7, %cst_67 {dimension_numbers = #tpu.dot_dimension_numbers<[1], [0], [0], [1], [0, 0, 1, 1], [], []>} : vector<8x32xf32>, vector<32x32xf32>, vector<8x32xf32> -> vector<8x32xf32>
    %112 = arith.addf %110, %111 : vector<8x32xf32>
    %cst_68 = arith.constant 0.000000e+00 : f32
    %113 = vector.broadcast %cst_68 : f32 to vector<8x32xf32>
    %114 = arith.maximumf %112, %113 : vector<8x32xf32>
    %115 = arith.index_cast %108 : i32 to index
    %c0_69 = arith.constant 0 : index
    %116 = vector.load %arg9[%115, %c0_69] : memref<240x32xf32, #tpu.memory_space<vmem>>, vector<8x32xf32>
    tpu.vector_store %arg9[%115, %c0_69], %114 {strides = array<i32>} : memref<240x32xf32, #tpu.memory_space<vmem>>, vector<8x32xf32>,
    %c12_i32 = arith.constant 12 : i32
    %c8_i32_70 = arith.constant 8 : i32
    %117 = arith.muli %c12_i32, %c8_i32_70 : i32
    %118 = arith.index_cast %117 : i32 to index
    %c0_71 = arith.constant 0 : index
    %119 = vector.load %arg8[%118, %c0_71] : memref<240x32xf32, #tpu.memory_space<vmem>>, vector<8x32xf32>
    %cst_72 = arith.constant dense<0.000000e+00> : vector<8x32xf32>
    %120 = tpu.matmul %114, %7, %cst_72 {dimension_numbers = #tpu.dot_dimension_numbers<[1], [0], [0], [1], [0, 0, 1, 1], [], []>} : vector<8x32xf32>, vector<32x32xf32>, vector<8x32xf32> -> vector<8x32xf32>
    %121 = arith.addf %119, %120 : vector<8x32xf32>
    %cst_73 = arith.constant 0.000000e+00 : f32
    %122 = vector.broadcast %cst_73 : f32 to vector<8x32xf32>
    %123 = arith.maximumf %121, %122 : vector<8x32xf32>
    %124 = arith.index_cast %117 : i32 to index
    %c0_74 = arith.constant 0 : index
    %125 = vector.load %arg9[%124, %c0_74] : memref<240x32xf32, #tpu.memory_space<vmem>>, vector<8x32xf32>
    tpu.vector_store %arg9[%124, %c0_74], %123 {strides = array<i32>} : memref<240x32xf32, #tpu.memory_space<vmem>>, vector<8x32xf32>,
    %c13_i32 = arith.constant 13 : i32
    %c8_i32_75 = arith.constant 8 : i32
    %126 = arith.muli %c13_i32, %c8_i32_75 : i32
    %127 = arith.index_cast %126 : i32 to index
    %c0_76 = arith.constant 0 : index
    %128 = vector.load %arg8[%127, %c0_76] : memref<240x32xf32, #tpu.memory_space<vmem>>, vector<8x32xf32>
    %cst_77 = arith.constant dense<0.000000e+00> : vector<8x32xf32>
    %129 = tpu.matmul %123, %7, %cst_77 {dimension_numbers = #tpu.dot_dimension_numbers<[1], [0], [0], [1], [0, 0, 1, 1], [], []>} : vector<8x32xf32>, vector<32x32xf32>, vector<8x32xf32> -> vector<8x32xf32>
    %130 = arith.addf %128, %129 : vector<8x32xf32>
    %cst_78 = arith.constant 0.000000e+00 : f32
    %131 = vector.broadcast %cst_78 : f32 to vector<8x32xf32>
    %132 = arith.maximumf %130, %131 : vector<8x32xf32>
    %133 = arith.index_cast %126 : i32 to index
    %c0_79 = arith.constant 0 : index
    %134 = vector.load %arg9[%133, %c0_79] : memref<240x32xf32, #tpu.memory_space<vmem>>, vector<8x32xf32>
    tpu.vector_store %arg9[%133, %c0_79], %132 {strides = array<i32>} : memref<240x32xf32, #tpu.memory_space<vmem>>, vector<8x32xf32>,
    %c14_i32 = arith.constant 14 : i32
    %c8_i32_80 = arith.constant 8 : i32
    %135 = arith.muli %c14_i32, %c8_i32_80 : i32
    %136 = arith.index_cast %135 : i32 to index
    %c0_81 = arith.constant 0 : index
    %137 = vector.load %arg8[%136, %c0_81] : memref<240x32xf32, #tpu.memory_space<vmem>>, vector<8x32xf32>
    %cst_82 = arith.constant dense<0.000000e+00> : vector<8x32xf32>
    %138 = tpu.matmul %132, %7, %cst_82 {dimension_numbers = #tpu.dot_dimension_numbers<[1], [0], [0], [1], [0, 0, 1, 1], [], []>} : vector<8x32xf32>, vector<32x32xf32>, vector<8x32xf32> -> vector<8x32xf32>
    %139 = arith.addf %137, %138 : vector<8x32xf32>
    %cst_83 = arith.constant 0.000000e+00 : f32
    %140 = vector.broadcast %cst_83 : f32 to vector<8x32xf32>
    %141 = arith.maximumf %139, %140 : vector<8x32xf32>
    %142 = arith.index_cast %135 : i32 to index
    %c0_84 = arith.constant 0 : index
    %143 = vector.load %arg9[%142, %c0_84] : memref<240x32xf32, #tpu.memory_space<vmem>>, vector<8x32xf32>
    tpu.vector_store %arg9[%142, %c0_84], %141 {strides = array<i32>} : memref<240x32xf32, #tpu.memory_space<vmem>>, vector<8x32xf32>,
    %c15_i32 = arith.constant 15 : i32
    %c8_i32_85 = arith.constant 8 : i32
    %144 = arith.muli %c15_i32, %c8_i32_85 : i32
    %145 = arith.index_cast %144 : i32 to index
    %c0_86 = arith.constant 0 : index
    %146 = vector.load %arg8[%145, %c0_86] : memref<240x32xf32, #tpu.memory_space<vmem>>, vector<8x32xf32>
    %cst_87 = arith.constant dense<0.000000e+00> : vector<8x32xf32>
    %147 = tpu.matmul %141, %7, %cst_87 {dimension_numbers = #tpu.dot_dimension_numbers<[1], [0], [0], [1], [0, 0, 1, 1], [], []>} : vector<8x32xf32>, vector<32x32xf32>, vector<8x32xf32> -> vector<8x32xf32>
    %148 = arith.addf %146, %147 : vector<8x32xf32>
    %cst_88 = arith.constant 0.000000e+00 : f32
    %149 = vector.broadcast %cst_88 : f32 to vector<8x32xf32>
    %150 = arith.maximumf %148, %149 : vector<8x32xf32>
    %151 = arith.index_cast %144 : i32 to index
    %c0_89 = arith.constant 0 : index
    %152 = vector.load %arg9[%151, %c0_89] : memref<240x32xf32, #tpu.memory_space<vmem>>, vector<8x32xf32>
    tpu.vector_store %arg9[%151, %c0_89], %150 {strides = array<i32>} : memref<240x32xf32, #tpu.memory_space<vmem>>, vector<8x32xf32>,
    %c16_i32 = arith.constant 16 : i32
    %c8_i32_90 = arith.constant 8 : i32
    %153 = arith.muli %c16_i32, %c8_i32_90 : i32
    %154 = arith.index_cast %153 : i32 to index
    %c0_91 = arith.constant 0 : index
    %155 = vector.load %arg8[%154, %c0_91] : memref<240x32xf32, #tpu.memory_space<vmem>>, vector<8x32xf32>
    %cst_92 = arith.constant dense<0.000000e+00> : vector<8x32xf32>
    %156 = tpu.matmul %150, %7, %cst_92 {dimension_numbers = #tpu.dot_dimension_numbers<[1], [0], [0], [1], [0, 0, 1, 1], [], []>} : vector<8x32xf32>, vector<32x32xf32>, vector<8x32xf32> -> vector<8x32xf32>
    %157 = arith.addf %155, %156 : vector<8x32xf32>
    %cst_93 = arith.constant 0.000000e+00 : f32
    %158 = vector.broadcast %cst_93 : f32 to vector<8x32xf32>
    %159 = arith.maximumf %157, %158 : vector<8x32xf32>
    %160 = arith.index_cast %153 : i32 to index
    %c0_94 = arith.constant 0 : index
    %161 = vector.load %arg9[%160, %c0_94] : memref<240x32xf32, #tpu.memory_space<vmem>>, vector<8x32xf32>
    tpu.vector_store %arg9[%160, %c0_94], %159 {strides = array<i32>} : memref<240x32xf32, #tpu.memory_space<vmem>>, vector<8x32xf32>,
    %c17_i32 = arith.constant 17 : i32
    %c8_i32_95 = arith.constant 8 : i32
    %162 = arith.muli %c17_i32, %c8_i32_95 : i32
    %163 = arith.index_cast %162 : i32 to index
    %c0_96 = arith.constant 0 : index
    %164 = vector.load %arg8[%163, %c0_96] : memref<240x32xf32, #tpu.memory_space<vmem>>, vector<8x32xf32>
    %cst_97 = arith.constant dense<0.000000e+00> : vector<8x32xf32>
    %165 = tpu.matmul %159, %7, %cst_97 {dimension_numbers = #tpu.dot_dimension_numbers<[1], [0], [0], [1], [0, 0, 1, 1], [], []>} : vector<8x32xf32>, vector<32x32xf32>, vector<8x32xf32> -> vector<8x32xf32>
    %166 = arith.addf %164, %165 : vector<8x32xf32>
    %cst_98 = arith.constant 0.000000e+00 : f32
    %167 = vector.broadcast %cst_98 : f32 to vector<8x32xf32>
    %168 = arith.maximumf %166, %167 : vector<8x32xf32>
    %169 = arith.index_cast %162 : i32 to index
    %c0_99 = arith.constant 0 : index
    %170 = vector.load %arg9[%169, %c0_99] : memref<240x32xf32, #tpu.memory_space<vmem>>, vector<8x32xf32>
    tpu.vector_store %arg9[%169, %c0_99], %168 {strides = array<i32>} : memref<240x32xf32, #tpu.memory_space<vmem>>, vector<8x32xf32>,
    %c18_i32 = arith.constant 18 : i32
    %c8_i32_100 = arith.constant 8 : i32
    %171 = arith.muli %c18_i32, %c8_i32_100 : i32
    %172 = arith.index_cast %171 : i32 to index
    %c0_101 = arith.constant 0 : index
    %173 = vector.load %arg8[%172, %c0_101] : memref<240x32xf32, #tpu.memory_space<vmem>>, vector<8x32xf32>
    %cst_102 = arith.constant dense<0.000000e+00> : vector<8x32xf32>
    %174 = tpu.matmul %168, %7, %cst_102 {dimension_numbers = #tpu.dot_dimension_numbers<[1], [0], [0], [1], [0, 0, 1, 1], [], []>} : vector<8x32xf32>, vector<32x32xf32>, vector<8x32xf32> -> vector<8x32xf32>
    %175 = arith.addf %173, %174 : vector<8x32xf32>
    %cst_103 = arith.constant 0.000000e+00 : f32
    %176 = vector.broadcast %cst_103 : f32 to vector<8x32xf32>
    %177 = arith.maximumf %175, %176 : vector<8x32xf32>
    %178 = arith.index_cast %171 : i32 to index
    %c0_104 = arith.constant 0 : index
    %179 = vector.load %arg9[%178, %c0_104] : memref<240x32xf32, #tpu.memory_space<vmem>>, vector<8x32xf32>
    tpu.vector_store %arg9[%178, %c0_104], %177 {strides = array<i32>} : memref<240x32xf32, #tpu.memory_space<vmem>>, vector<8x32xf32>,
    %c19_i32 = arith.constant 19 : i32
    %c8_i32_105 = arith.constant 8 : i32
    %180 = arith.muli %c19_i32, %c8_i32_105 : i32
    %181 = arith.index_cast %180 : i32 to index
    %c0_106 = arith.constant 0 : index
    %182 = vector.load %arg8[%181, %c0_106] : memref<240x32xf32, #tpu.memory_space<vmem>>, vector<8x32xf32>
    %cst_107 = arith.constant dense<0.000000e+00> : vector<8x32xf32>
    %183 = tpu.matmul %177, %7, %cst_107 {dimension_numbers = #tpu.dot_dimension_numbers<[1], [0], [0], [1], [0, 0, 1, 1], [], []>} : vector<8x32xf32>, vector<32x32xf32>, vector<8x32xf32> -> vector<8x32xf32>
    %184 = arith.addf %182, %183 : vector<8x32xf32>
    %cst_108 = arith.constant 0.000000e+00 : f32
    %185 = vector.broadcast %cst_108 : f32 to vector<8x32xf32>
    %186 = arith.maximumf %184, %185 : vector<8x32xf32>
    %187 = arith.index_cast %180 : i32 to index
    %c0_109 = arith.constant 0 : index
    %188 = vector.load %arg9[%187, %c0_109] : memref<240x32xf32, #tpu.memory_space<vmem>>, vector<8x32xf32>
    tpu.vector_store %arg9[%187, %c0_109], %186 {strides = array<i32>} : memref<240x32xf32, #tpu.memory_space<vmem>>, vector<8x32xf32>,
    %c20_i32 = arith.constant 20 : i32
    %c8_i32_110 = arith.constant 8 : i32
    %189 = arith.muli %c20_i32, %c8_i32_110 : i32
    %190 = arith.index_cast %189 : i32 to index
    %c0_111 = arith.constant 0 : index
    %191 = vector.load %arg8[%190, %c0_111] : memref<240x32xf32, #tpu.memory_space<vmem>>, vector<8x32xf32>
    %cst_112 = arith.constant dense<0.000000e+00> : vector<8x32xf32>
    %192 = tpu.matmul %186, %7, %cst_112 {dimension_numbers = #tpu.dot_dimension_numbers<[1], [0], [0], [1], [0, 0, 1, 1], [], []>} : vector<8x32xf32>, vector<32x32xf32>, vector<8x32xf32> -> vector<8x32xf32>
    %193 = arith.addf %191, %192 : vector<8x32xf32>
    %cst_113 = arith.constant 0.000000e+00 : f32
    %194 = vector.broadcast %cst_113 : f32 to vector<8x32xf32>
    %195 = arith.maximumf %193, %194 : vector<8x32xf32>
    %196 = arith.index_cast %189 : i32 to index
    %c0_114 = arith.constant 0 : index
    %197 = vector.load %arg9[%196, %c0_114] : memref<240x32xf32, #tpu.memory_space<vmem>>, vector<8x32xf32>
    tpu.vector_store %arg9[%196, %c0_114], %195 {strides = array<i32>} : memref<240x32xf32, #tpu.memory_space<vmem>>, vector<8x32xf32>,
    %c21_i32 = arith.constant 21 : i32
    %c8_i32_115 = arith.constant 8 : i32
    %198 = arith.muli %c21_i32, %c8_i32_115 : i32
    %199 = arith.index_cast %198 : i32 to index
    %c0_116 = arith.constant 0 : index
    %200 = vector.load %arg8[%199, %c0_116] : memref<240x32xf32, #tpu.memory_space<vmem>>, vector<8x32xf32>
    %cst_117 = arith.constant dense<0.000000e+00> : vector<8x32xf32>
    %201 = tpu.matmul %195, %7, %cst_117 {dimension_numbers = #tpu.dot_dimension_numbers<[1], [0], [0], [1], [0, 0, 1, 1], [], []>} : vector<8x32xf32>, vector<32x32xf32>, vector<8x32xf32> -> vector<8x32xf32>
    %202 = arith.addf %200, %201 : vector<8x32xf32>
    %cst_118 = arith.constant 0.000000e+00 : f32
    %203 = vector.broadcast %cst_118 : f32 to vector<8x32xf32>
    %204 = arith.maximumf %202, %203 : vector<8x32xf32>
    %205 = arith.index_cast %198 : i32 to index
    %c0_119 = arith.constant 0 : index
    %206 = vector.load %arg9[%205, %c0_119] : memref<240x32xf32, #tpu.memory_space<vmem>>, vector<8x32xf32>
    tpu.vector_store %arg9[%205, %c0_119], %204 {strides = array<i32>} : memref<240x32xf32, #tpu.memory_space<vmem>>, vector<8x32xf32>,
    %c22_i32 = arith.constant 22 : i32
    %c8_i32_120 = arith.constant 8 : i32
    %207 = arith.muli %c22_i32, %c8_i32_120 : i32
    %208 = arith.index_cast %207 : i32 to index
    %c0_121 = arith.constant 0 : index
    %209 = vector.load %arg8[%208, %c0_121] : memref<240x32xf32, #tpu.memory_space<vmem>>, vector<8x32xf32>
    %cst_122 = arith.constant dense<0.000000e+00> : vector<8x32xf32>
    %210 = tpu.matmul %204, %7, %cst_122 {dimension_numbers = #tpu.dot_dimension_numbers<[1], [0], [0], [1], [0, 0, 1, 1], [], []>} : vector<8x32xf32>, vector<32x32xf32>, vector<8x32xf32> -> vector<8x32xf32>
    %211 = arith.addf %209, %210 : vector<8x32xf32>
    %cst_123 = arith.constant 0.000000e+00 : f32
    %212 = vector.broadcast %cst_123 : f32 to vector<8x32xf32>
    %213 = arith.maximumf %211, %212 : vector<8x32xf32>
    %214 = arith.index_cast %207 : i32 to index
    %c0_124 = arith.constant 0 : index
    %215 = vector.load %arg9[%214, %c0_124] : memref<240x32xf32, #tpu.memory_space<vmem>>, vector<8x32xf32>
    tpu.vector_store %arg9[%214, %c0_124], %213 {strides = array<i32>} : memref<240x32xf32, #tpu.memory_space<vmem>>, vector<8x32xf32>,
    %c23_i32 = arith.constant 23 : i32
    %c8_i32_125 = arith.constant 8 : i32
    %216 = arith.muli %c23_i32, %c8_i32_125 : i32
    %217 = arith.index_cast %216 : i32 to index
    %c0_126 = arith.constant 0 : index
    %218 = vector.load %arg8[%217, %c0_126] : memref<240x32xf32, #tpu.memory_space<vmem>>, vector<8x32xf32>
    %cst_127 = arith.constant dense<0.000000e+00> : vector<8x32xf32>
    %219 = tpu.matmul %213, %7, %cst_127 {dimension_numbers = #tpu.dot_dimension_numbers<[1], [0], [0], [1], [0, 0, 1, 1], [], []>} : vector<8x32xf32>, vector<32x32xf32>, vector<8x32xf32> -> vector<8x32xf32>
    %220 = arith.addf %218, %219 : vector<8x32xf32>
    %cst_128 = arith.constant 0.000000e+00 : f32
    %221 = vector.broadcast %cst_128 : f32 to vector<8x32xf32>
    %222 = arith.maximumf %220, %221 : vector<8x32xf32>
    %223 = arith.index_cast %216 : i32 to index
    %c0_129 = arith.constant 0 : index
    %224 = vector.load %arg9[%223, %c0_129] : memref<240x32xf32, #tpu.memory_space<vmem>>, vector<8x32xf32>
    tpu.vector_store %arg9[%223, %c0_129], %222 {strides = array<i32>} : memref<240x32xf32, #tpu.memory_space<vmem>>, vector<8x32xf32>,
    %c24_i32 = arith.constant 24 : i32
    %c8_i32_130 = arith.constant 8 : i32
    %225 = arith.muli %c24_i32, %c8_i32_130 : i32
    %226 = arith.index_cast %225 : i32 to index
    %c0_131 = arith.constant 0 : index
    %227 = vector.load %arg8[%226, %c0_131] : memref<240x32xf32, #tpu.memory_space<vmem>>, vector<8x32xf32>
    %cst_132 = arith.constant dense<0.000000e+00> : vector<8x32xf32>
    %228 = tpu.matmul %222, %7, %cst_132 {dimension_numbers = #tpu.dot_dimension_numbers<[1], [0], [0], [1], [0, 0, 1, 1], [], []>} : vector<8x32xf32>, vector<32x32xf32>, vector<8x32xf32> -> vector<8x32xf32>
    %229 = arith.addf %227, %228 : vector<8x32xf32>
    %cst_133 = arith.constant 0.000000e+00 : f32
    %230 = vector.broadcast %cst_133 : f32 to vector<8x32xf32>
    %231 = arith.maximumf %229, %230 : vector<8x32xf32>
    %232 = arith.index_cast %225 : i32 to index
    %c0_134 = arith.constant 0 : index
    %233 = vector.load %arg9[%232, %c0_134] : memref<240x32xf32, #tpu.memory_space<vmem>>, vector<8x32xf32>
    tpu.vector_store %arg9[%232, %c0_134], %231 {strides = array<i32>} : memref<240x32xf32, #tpu.memory_space<vmem>>, vector<8x32xf32>,
    %c25_i32 = arith.constant 25 : i32
    %c8_i32_135 = arith.constant 8 : i32
    %234 = arith.muli %c25_i32, %c8_i32_135 : i32
    %235 = arith.index_cast %234 : i32 to index
    %c0_136 = arith.constant 0 : index
    %236 = vector.load %arg8[%235, %c0_136] : memref<240x32xf32, #tpu.memory_space<vmem>>, vector<8x32xf32>
    %cst_137 = arith.constant dense<0.000000e+00> : vector<8x32xf32>
    %237 = tpu.matmul %231, %7, %cst_137 {dimension_numbers = #tpu.dot_dimension_numbers<[1], [0], [0], [1], [0, 0, 1, 1], [], []>} : vector<8x32xf32>, vector<32x32xf32>, vector<8x32xf32> -> vector<8x32xf32>
    %238 = arith.addf %236, %237 : vector<8x32xf32>
    %cst_138 = arith.constant 0.000000e+00 : f32
    %239 = vector.broadcast %cst_138 : f32 to vector<8x32xf32>
    %240 = arith.maximumf %238, %239 : vector<8x32xf32>
    %241 = arith.index_cast %234 : i32 to index
    %c0_139 = arith.constant 0 : index
    %242 = vector.load %arg9[%241, %c0_139] : memref<240x32xf32, #tpu.memory_space<vmem>>, vector<8x32xf32>
    tpu.vector_store %arg9[%241, %c0_139], %240 {strides = array<i32>} : memref<240x32xf32, #tpu.memory_space<vmem>>, vector<8x32xf32>,
    %c26_i32 = arith.constant 26 : i32
    %c8_i32_140 = arith.constant 8 : i32
    %243 = arith.muli %c26_i32, %c8_i32_140 : i32
    %244 = arith.index_cast %243 : i32 to index
    %c0_141 = arith.constant 0 : index
    %245 = vector.load %arg8[%244, %c0_141] : memref<240x32xf32, #tpu.memory_space<vmem>>, vector<8x32xf32>
    %cst_142 = arith.constant dense<0.000000e+00> : vector<8x32xf32>
    %246 = tpu.matmul %240, %7, %cst_142 {dimension_numbers = #tpu.dot_dimension_numbers<[1], [0], [0], [1], [0, 0, 1, 1], [], []>} : vector<8x32xf32>, vector<32x32xf32>, vector<8x32xf32> -> vector<8x32xf32>
    %247 = arith.addf %245, %246 : vector<8x32xf32>
    %cst_143 = arith.constant 0.000000e+00 : f32
    %248 = vector.broadcast %cst_143 : f32 to vector<8x32xf32>
    %249 = arith.maximumf %247, %248 : vector<8x32xf32>
    %250 = arith.index_cast %243 : i32 to index
    %c0_144 = arith.constant 0 : index
    %251 = vector.load %arg9[%250, %c0_144] : memref<240x32xf32, #tpu.memory_space<vmem>>, vector<8x32xf32>
    tpu.vector_store %arg9[%250, %c0_144], %249 {strides = array<i32>} : memref<240x32xf32, #tpu.memory_space<vmem>>, vector<8x32xf32>,
    %c27_i32 = arith.constant 27 : i32
    %c8_i32_145 = arith.constant 8 : i32
    %252 = arith.muli %c27_i32, %c8_i32_145 : i32
    %253 = arith.index_cast %252 : i32 to index
    %c0_146 = arith.constant 0 : index
    %254 = vector.load %arg8[%253, %c0_146] : memref<240x32xf32, #tpu.memory_space<vmem>>, vector<8x32xf32>
    %cst_147 = arith.constant dense<0.000000e+00> : vector<8x32xf32>
    %255 = tpu.matmul %249, %7, %cst_147 {dimension_numbers = #tpu.dot_dimension_numbers<[1], [0], [0], [1], [0, 0, 1, 1], [], []>} : vector<8x32xf32>, vector<32x32xf32>, vector<8x32xf32> -> vector<8x32xf32>
    %256 = arith.addf %254, %255 : vector<8x32xf32>
    %cst_148 = arith.constant 0.000000e+00 : f32
    %257 = vector.broadcast %cst_148 : f32 to vector<8x32xf32>
    %258 = arith.maximumf %256, %257 : vector<8x32xf32>
    %259 = arith.index_cast %252 : i32 to index
    %c0_149 = arith.constant 0 : index
    %260 = vector.load %arg9[%259, %c0_149] : memref<240x32xf32, #tpu.memory_space<vmem>>, vector<8x32xf32>
    tpu.vector_store %arg9[%259, %c0_149], %258 {strides = array<i32>} : memref<240x32xf32, #tpu.memory_space<vmem>>, vector<8x32xf32>,
    %c28_i32 = arith.constant 28 : i32
    %c8_i32_150 = arith.constant 8 : i32
    %261 = arith.muli %c28_i32, %c8_i32_150 : i32
    %262 = arith.index_cast %261 : i32 to index
    %c0_151 = arith.constant 0 : index
    %263 = vector.load %arg8[%262, %c0_151] : memref<240x32xf32, #tpu.memory_space<vmem>>, vector<8x32xf32>
    %cst_152 = arith.constant dense<0.000000e+00> : vector<8x32xf32>
    %264 = tpu.matmul %258, %7, %cst_152 {dimension_numbers = #tpu.dot_dimension_numbers<[1], [0], [0], [1], [0, 0, 1, 1], [], []>} : vector<8x32xf32>, vector<32x32xf32>, vector<8x32xf32> -> vector<8x32xf32>
    %265 = arith.addf %263, %264 : vector<8x32xf32>
    %cst_153 = arith.constant 0.000000e+00 : f32
    %266 = vector.broadcast %cst_153 : f32 to vector<8x32xf32>
    %267 = arith.maximumf %265, %266 : vector<8x32xf32>
    %268 = arith.index_cast %261 : i32 to index
    %c0_154 = arith.constant 0 : index
    %269 = vector.load %arg9[%268, %c0_154] : memref<240x32xf32, #tpu.memory_space<vmem>>, vector<8x32xf32>
    tpu.vector_store %arg9[%268, %c0_154], %267 {strides = array<i32>} : memref<240x32xf32, #tpu.memory_space<vmem>>, vector<8x32xf32>,
    %c29_i32 = arith.constant 29 : i32
    %c8_i32_155 = arith.constant 8 : i32
    %270 = arith.muli %c29_i32, %c8_i32_155 : i32
    %271 = arith.index_cast %270 : i32 to index
    %c0_156 = arith.constant 0 : index
    %272 = vector.load %arg8[%271, %c0_156] : memref<240x32xf32, #tpu.memory_space<vmem>>, vector<8x32xf32>
    %cst_157 = arith.constant dense<0.000000e+00> : vector<8x32xf32>
    %273 = tpu.matmul %267, %7, %cst_157 {dimension_numbers = #tpu.dot_dimension_numbers<[1], [0], [0], [1], [0, 0, 1, 1], [], []>} : vector<8x32xf32>, vector<32x32xf32>, vector<8x32xf32> -> vector<8x32xf32>
    %274 = arith.addf %272, %273 : vector<8x32xf32>
    %cst_158 = arith.constant 0.000000e+00 : f32
    %275 = vector.broadcast %cst_158 : f32 to vector<8x32xf32>
    %276 = arith.maximumf %274, %275 : vector<8x32xf32>
    %277 = arith.index_cast %270 : i32 to index
    %c0_159 = arith.constant 0 : index
    %278 = vector.load %arg9[%277, %c0_159] : memref<240x32xf32, #tpu.memory_space<vmem>>, vector<8x32xf32>
    tpu.vector_store %arg9[%277, %c0_159], %276 {strides = array<i32>} : memref<240x32xf32, #tpu.memory_space<vmem>>, vector<8x32xf32>,
    %c30_i32 = arith.constant 30 : i32
    %c0_160 = arith.constant 0 : index
    %c0_161 = arith.constant 0 : index
    %279 = vector.load %arg7[%c0_160, %c0_161] : memref<8x32xf32, #tpu.memory_space<vmem>>, vector<8x32xf32>
    tpu.vector_store %arg7[%c0_160, %c0_161], %276 {strides = array<i32>} : memref<8x32xf32, #tpu.memory_space<vmem>>, vector<8x32xf32>,
    %c0_162 = arith.constant 0 : index
    %c0_163 = arith.constant 0 : index
    %280 = vector.load %arg9[%c0_162, %c0_163] : memref<240x32xf32, #tpu.memory_space<vmem>>, vector<240x32xf32>
    %c0_164 = arith.constant 0 : index
    %c0_165 = arith.constant 0 : index
    %281 = vector.load %arg4[%c0_164, %c0_165] : memref<32x16xf32, #tpu.memory_space<vmem>>, vector<32x16xf32>
    %cst_166 = arith.constant dense<0.000000e+00> : vector<240x16xf32>
    %282 = tpu.matmul %280, %281, %cst_166 {dimension_numbers = #tpu.dot_dimension_numbers<[1], [0], [0], [1], [0, 0, 1, 1], [], []>} : vector<240x32xf32>, vector<32x16xf32>, vector<240x16xf32> -> vector<240x16xf32>
    %c0_167 = arith.constant 0 : index
    %c0_168 = arith.constant 0 : index
    %283 = vector.load %arg5[%c0_167, %c0_168] : memref<1x16xf32, #tpu.memory_space<vmem>>, vector<1x16xf32>
    %284 = vector.broadcast %283 : vector<1x16xf32> to vector<240x16xf32>
    %285 = arith.addf %282, %284 : vector<240x16xf32>
    %cst_169 = arith.constant dense<0xFF800000> : vector<240xf32>
    %286 = vector.multi_reduction <maximumf>, %285, %cst_169 [1] : vector<240x16xf32> to vector<240xf32>
    %287 = vector.shape_cast %286 : vector<240xf32> to vector<240x1xf32>
    %288 = vector.broadcast %287 : vector<240x1xf32> to vector<240x16xf32>
    %289 = arith.subf %285, %288 : vector<240x16xf32>
    %290 = math.exp %289 : vector<240x16xf32>
    %cst_170 = arith.constant dense<0.000000e+00> : vector<240xf32>
    %291 = vector.multi_reduction <add>, %290, %cst_170 [1] : vector<240x16xf32> to vector<240xf32>
    %292 = vector.shape_cast %291 : vector<240xf32> to vector<240x1xf32>
    %293 = math.log %292 : vector<240x1xf32>
    %294 = arith.addf %293, %287 : vector<240x1xf32>
    %295 = vector.broadcast %294 : vector<240x1xf32> to vector<240x16xf32>
    %296 = arith.subf %285, %295 : vector<240x16xf32>
    %c0_171 = arith.constant 0 : index
    %c0_172 = arith.constant 0 : index
    %297 = vector.load %arg6[%c0_171, %c0_172] : memref<240x16xf32, #tpu.memory_space<vmem>>, vector<240x16xf32>
    tpu.vector_store %arg6[%c0_171, %c0_172], %296 {strides = array<i32>} : memref<240x16xf32, #tpu.memory_space<vmem>>, vector<240x16xf32>,
    return
  }
}

</mosaic_0001>

<llo_original>
// kernel: rnn_forward.1
$region0: #{rnn_forward.1}
  #allocation0 [shape = 'u32[]', space=smem, size = 0x4, offset = 0x4, fixed_abs, tag = 'smem constant byte address 0x4 - core index']
  #allocation1 [shape = 'u32[144,128]{1,0:T(1,128)}', space=vmem, size = 0x12000, scoped, tag = 'internal scratch']
  #allocation2 [shape = 'f32[240,32]{1,0:T(8,128)}', space=vmem, size = 0x1e000, scoped, tag = 'scratch operand']
  #allocation3 [shape = 'f32[240,32]{1,0:T(8,128)}', space=vmem, size = 0x1e000, scoped, tag = 'scratch operand']
  %s0 = inlined_call_operand.vmem [shape: f32[240,8], index: 0, kind: input, shape index: {}]
  %s1 = inlined_call_operand.vmem [shape: f32[8,32], index: 1, kind: input, shape index: {}]
  %s2 = inlined_call_operand.vmem [shape: f32[32,32], index: 2, kind: input, shape index: {}]
  %s3 = inlined_call_operand.vmem [shape: f32[1,32], index: 3, kind: input, shape index: {}]
  %s4 = inlined_call_operand.vmem [shape: f32[32,16], index: 4, kind: input, shape index: {}]
  %s5 = inlined_call_operand.vmem [shape: f32[1,16], index: 5, kind: input, shape index: {}]
  %s6 = inlined_call_operand.vmem [shape: f32[240,16], index: 6, kind: output, shape index: {0}]
  %s7 = inlined_call_operand.vmem [shape: f32[8,32], index: 7, kind: output, shape index: {1}]
  %8 = xla_tuple %s6, %s7
  %s9 = sld [smem:[#allocation0]]
  $region42: #{rnn_forward.1} parent=0
    _
  %s11 = ssub.s32 1, %s9
  %s12 = scalar_select 0, %s11, %s9
  // Predicated region
  $region2: #{rnn_forward.1} parent=0 // pred_check
    _
  $region3: #{rnn_forward.1} parent=0 // pred_check_branch
    %14 = sbr.rel (0) target = $region5
  $region4: #{rnn_forward.1} parent=0 // pred_region
    _
  $region5: #{rnn_forward.1} parent=0 // pred_fallthru
    _
  // Predicated region
  $region6: #{rnn_forward.1} parent=0 // pred_check
    _
  $region7: #{rnn_forward.1} parent=0 // pred_check_branch
    %16 = sbr.rel (0) target = $region9
  $region8: #{rnn_forward.1} parent=0 // pred_region
    _
  $region9: #{rnn_forward.1} parent=0 // pred_fallthru
    _
  // Predicated region
  $region10: #{rnn_forward.1} parent=0 // pred_check
    _
  $region11: #{rnn_forward.1} parent=0 // pred_check_branch
    %18 = sbr.rel (0) target = $region13
  $region12: #{rnn_forward.1} parent=0 // pred_region
    _
  $region13: #{rnn_forward.1} parent=0 // pred_fallthru
    _
  // Predicated region
  $region14: #{rnn_forward.1} parent=0 // pred_check
    _
  $region15: #{rnn_forward.1} parent=0 // pred_check_branch
    %20 = sbr.rel (0) target = $region17
  $region16: #{rnn_forward.1} parent=0 // pred_region
    _
  $region17: #{rnn_forward.1} parent=0 // pred_fallthru
    _
  // Predicated region
  $region18: #{rnn_forward.1} parent=0 // pred_check
    _
  $region19: #{rnn_forward.1} parent=0 // pred_check_branch
    %22 = sbr.rel (0) target = $region21
  $region20: #{rnn_forward.1} parent=0 // pred_region
    _
  $region21: #{rnn_forward.1} parent=0 // pred_fallthru
    _
  // Predicated region
  $region22: #{rnn_forward.1} parent=0 // pred_check
    _
  $region23: #{rnn_forward.1} parent=0 // pred_check_branch
    %24 = sbr.rel (0) target = $region25
  $region24: #{rnn_forward.1} parent=0 // pred_region
    _
  $region25: #{rnn_forward.1} parent=0 // pred_fallthru
    _
  %v25 = vld [vmem:[%s0] sm:$0xff]
  %v26 = vld [vmem:[%s0 + $0x8] sm:$0xff]
  %v27 = vld [vmem:[%s0 + $0x10] sm:$0xff]
  %v28 = vld [vmem:[%s0 + $0x18] sm:$0xff]
  %v29 = vld [vmem:[%s0 + $0x20] sm:$0xff]
  %v30 = vld [vmem:[%s0 + $0x28] sm:$0xff]
  %v31 = vld [vmem:[%s0 + $0x30] sm:$0xff]
  %v32 = vld [vmem:[%s0 + $0x38] sm:$0xff]
  %v33 = vld [vmem:[%s0 + $0x40] sm:$0xff]
  %v34 = vld [vmem:[%s0 + $0x48] sm:$0xff]
  %v35 = vld [vmem:[%s0 + $0x50] sm:$0xff]
  %v36 = vld [vmem:[%s0 + $0x58] sm:$0xff]
  %v37 = vld [vmem:[%s0 + $0x60] sm:$0xff]
  %v38 = vld [vmem:[%s0 + $0x68] sm:$0xff]
  %v39 = vld [vmem:[%s0 + $0x70] sm:$0xff]
  %v40 = vld [vmem:[%s0 + $0x78] sm:$0xff]
  %v41 = vld [vmem:[%s0 + $0x80] sm:$0xff]
  %v42 = vld [vmem:[%s0 + $0x88] sm:$0xff]
  %v43 = vld [vmem:[%s0 + $0x90] sm:$0xff]
  %v44 = vld [vmem:[%s0 + $0x98] sm:$0xff]
  %v45 = vld [vmem:[%s0 + $0xa0] sm:$0xff]
  %v46 = vld [vmem:[%s0 + $0xa8] sm:$0xff]
  %v47 = vld [vmem:[%s0 + $0xb0] sm:$0xff]
  %v48 = vld [vmem:[%s0 + $0xb8] sm:$0xff]
  %v49 = vld [vmem:[%s0 + $0xc0] sm:$0xff]
  %v50 = vld [vmem:[%s0 + $0xc8] sm:$0xff]
  %v51 = vld [vmem:[%s0 + $0xd0] sm:$0xff]
  %v52 = vld [vmem:[%s0 + $0xd8] sm:$0xff]
  %v53 = vld [vmem:[%s0 + $0xe0] sm:$0xff]
  %v54 = vld [vmem:[%s0 + $0xe8] sm:$0xff]
  %v55 = vld [vmem:[%s1] sm:$0xff]
  %v56 = vld [vmem:[%s3] sm:$0x1]
  %v58 = vlaneseq
  %v59 = vshrl.u32 %v58, 7
  %v60 = vsub.s32 0, %v59
  %v61 = vrot.slane %v56, %v60
  %vm63 = vcmask 64512
  %v65 = vsel %vm63, %v25, 0
  %v68 = vsel %vm63, %v26, 0
  %v71 = vsel %vm63, %v27, 0
  %v74 = vsel %vm63, %v28, 0
  %v77 = vsel %vm63, %v29, 0
  %v80 = vsel %vm63, %v30, 0
  %v83 = vsel %vm63, %v31, 0
  %v86 = vsel %vm63, %v32, 0
  %v89 = vsel %vm63, %v33, 0
  %v92 = vsel %vm63, %v34, 0
  %v95 = vsel %vm63, %v35, 0
  %v98 = vsel %vm63, %v36, 0
  %v101 = vsel %vm63, %v37, 0
  %v104 = vsel %vm63, %v38, 0
  %v107 = vsel %vm63, %v39, 0
  %v110 = vsel %vm63, %v40, 0
  %v113 = vsel %vm63, %v41, 0
  %v116 = vsel %vm63, %v42, 0
  %v119 = vsel %vm63, %v43, 0
  %v122 = vsel %vm63, %v44, 0
  %v125 = vsel %vm63, %v45, 0
  %v128 = vsel %vm63, %v46, 0
  %v131 = vsel %vm63, %v47, 0
  %v134 = vsel %vm63, %v48, 0
  %v137 = vsel %vm63, %v49, 0
  %v140 = vsel %vm63, %v50, 0
  %v143 = vsel %vm63, %v51, 0
  %v146 = vsel %vm63, %v52, 0
  %v149 = vsel %vm63, %v53, 0
  %v152 = vsel %vm63, %v54, 0
  %154 = vmatprep.subr.mxu0 0.0
  %155 = vmatpush1.msra.mxu0 %v55
  %156 = vmatprep.subr.mxu0 0.0
  %157 = vmatpush1.msra.mxu0 0.0
  %158 = vmatprep.subr.mxu0 0.0
  %159 = vmatpush1.msra.mxu0 0.0
  %160 = vmatprep.subr.mxu0 0.0
  %161 = vmatpush1.msra.mxu0 0.0
  %162 = vmatprep.subr.mxu0 0.0
  %163 = vmatpush1.msra.mxu0 0.0
  %164 = vmatprep.subr.mxu0 0.0
  %165 = vmatpush1.msra.mxu0 0.0
  %166 = vmatprep.subr.mxu0 0.0
  %167 = vmatpush1.msra.mxu0 0.0
  %168 = vmatprep.subr.mxu0 0.0
  %169 = vmatpush1.msra.mxu0 0.0
  %170 = vmatprep.subr.mxu0 0.0
  %171 = vmatpush1.msra.mxu0 0.0
  %172 = vmatprep.subr.mxu0 0.0
  %173 = vmatpush1.msra.mxu0 0.0
  %174 = vmatprep.subr.mxu0 0.0
  %175 = vmatpush1.msra.mxu0 0.0
  %176 = vmatprep.subr.mxu0 0.0
  %177 = vmatpush1.msra.mxu0 0.0
  %178 = vmatprep.subr.mxu0 0.0
  %179 = vmatpush1.msra.mxu0 0.0
  %180 = vmatprep.subr.mxu0 0.0
  %181 = vmatpush1.msra.mxu0 0.0
  %182 = vmatprep.subr.mxu0 0.0
  %183 = vmatpush1.msra.mxu0 0.0
  %184 = vmatprep.subr.mxu0 0.0
  %185 = vmatpush1.msra.mxu0 0.0
  %186 = vmatprep.subr.mxu0 0.0
  %187 = vmatpush1.msra.mxu0 0.0
  %188 = vmatprep.subr.mxu0 0.0
  %189 = vmatpush1.msra.mxu0 0.0
  %190 = vmatprep.subr.mxu0 0.0
  %191 = vmatpush1.msra.mxu0 0.0
  %192 = vmatprep.subr.mxu0 0.0
  %193 = vmatpush1.msra.mxu0 0.0
  %194 = vmatprep.subr.mxu0 0.0
  %195 = vmatpush1.msra.mxu0 0.0
  %196 = vmatprep.subr.mxu0 0.0
  %197 = vmatpush1.msra.mxu0 0.0
  %198 = vmatprep.subr.mxu0 0.0
  %199 = vmatpush1.msra.mxu0 0.0
  %200 = vmatprep.subr.mxu0 0.0
  %201 = vmatpush1.msra.mxu0 0.0
  %202 = vmatprep.subr.mxu0 0.0
  %203 = vmatpush1.msra.mxu0 0.0
  %204 = vmatprep.subr.mxu0 0.0
  %205 = vmatpush1.msra.mxu0 0.0
  %206 = vmatprep.subr.mxu0 0.0
  %207 = vmatpush1.msra.mxu0 0.0
  %208 = vmatprep.subr.mxu0 0.0
  %209 = vmatpush1.msra.mxu0 0.0
  %210 = vmatprep.subr.mxu0 0.0
  %211 = vmatpush1.msra.mxu0 0.0
  %212 = vmatprep.subr.mxu0 0.0
  %213 = vmatpush1.msra.mxu0 0.0
  %214 = vmatprep.subr.mxu0 0.0
  %215 = vmatpush1.msra.mxu0 0.0
  %216 = vmatprep.subr.mxu0 0.0
  %217 = vmatpush1.msra.mxu0 0.0
  %218 = vmatprep.mubr.f32.mxu0 0.0
  %219 = vmatmul.mubr.f32.gmra.mrb[0].mxu0 %v65
  %v220 = vpop.f32.mrb[0].mxu0
  %v221 = vadd.f32 %v61, %v220
  %v222 = vpop.f32.mrb[0].mxu0
  %223 = vmatprep.mubr.f32.mxu0 0.0
  %224 = vmatmul.mubr.f32.gmra.mrb[0].mxu0 %v68
  %v225 = vpop.f32.mrb[0].mxu0
  %v226 = vadd.f32 %v61, %v225
  %v227 = vpop.f32.mrb[0].mxu0
  %228 = vmatprep.mubr.f32.mxu0 0.0
  %229 = vmatmul.mubr.f32.gmra.mrb[0].mxu0 %v71
  %v230 = vpop.f32.mrb[0].mxu0
  %v231 = vadd.f32 %v61, %v230
  %v232 = vpop.f32.mrb[0].mxu0
  %233 = vmatprep.mubr.f32.mxu0 0.0
  %234 = vmatmul.mubr.f32.gmra.mrb[0].mxu0 %v74
  %v235 = vpop.f32.mrb[0].mxu0
  %v236 = vadd.f32 %v61, %v235
  %v237 = vpop.f32.mrb[0].mxu0
  %238 = vmatprep.mubr.f32.mxu0 0.0
  %239 = vmatmul.mubr.f32.gmra.mrb[0].mxu0 %v77
  %v240 = vpop.f32.mrb[0].mxu0
  %v241 = vadd.f32 %v61, %v240
  %v242 = vpop.f32.mrb[0].mxu0
  %243 = vmatprep.mubr.f32.mxu0 0.0
  %244 = vmatmul.mubr.f32.gmra.mrb[0].mxu0 %v80
  %v245 = vpop.f32.mrb[0].mxu0
  %v246 = vadd.f32 %v61, %v245
  %v247 = vpop.f32.mrb[0].mxu0
  %248 = vmatprep.mubr.f32.mxu0 0.0
  %249 = vmatmul.mubr.f32.gmra.mrb[0].mxu0 %v83
  %v250 = vpop.f32.mrb[0].mxu0
  %v251 = vadd.f32 %v61, %v250
  %v252 = vpop.f32.mrb[0].mxu0
  %253 = vmatprep.mubr.f32.mxu0 0.0
  %254 = vmatmul.mubr.f32.gmra.mrb[0].mxu0 %v86
  %v255 = vpop.f32.mrb[0].mxu0
  %v256 = vadd.f32 %v61, %v255
  %v257 = vpop.f32.mrb[0].mxu0
  %258 = vmatprep.mubr.f32.mxu0 0.0
  %259 = vmatmul.mubr.f32.gmra.mrb[0].mxu0 %v89
  %v260 = vpop.f32.mrb[0].mxu0
  %v261 = vadd.f32 %v61, %v260
  %v262 = vpop.f32.mrb[0].mxu0
  %263 = vmatprep.mubr.f32.mxu0 0.0
  %264 = vmatmul.mubr.f32.gmra.mrb[0].mxu0 %v92
  %v265 = vpop.f32.mrb[0].mxu0
  %v266 = vadd.f32 %v61, %v265
  %v267 = vpop.f32.mrb[0].mxu0
  %268 = vmatprep.mubr.f32.mxu0 0.0
  %269 = vmatmul.mubr.f32.gmra.mrb[0].mxu0 %v95
  %v270 = vpop.f32.mrb[0].mxu0
  %v271 = vadd.f32 %v61, %v270
  %v272 = vpop.f32.mrb[0].mxu0
  %273 = vmatprep.mubr.f32.mxu0 0.0
  %274 = vmatmul.mubr.f32.gmra.mrb[0].mxu0 %v98
  %v275 = vpop.f32.mrb[0].mxu0
  %v276 = vadd.f32 %v61, %v275
  %v277 = vpop.f32.mrb[0].mxu0
  %278 = vmatprep.mubr.f32.mxu0 0.0
  %279 = vmatmul.mubr.f32.gmra.mrb[0].mxu0 %v101
  %v280 = vpop.f32.mrb[0].mxu0
  %v281 = vadd.f32 %v61, %v280
  %v282 = vpop.f32.mrb[0].mxu0
  %283 = vmatprep.mubr.f32.mxu0 0.0
  %284 = vmatmul.mubr.f32.gmra.mrb[0].mxu0 %v104
  %v285 = vpop.f32.mrb[0].mxu0
  %v286 = vadd.f32 %v61, %v285
  %v287 = vpop.f32.mrb[0].mxu0
  %288 = vmatprep.mubr.f32.mxu0 0.0
  %289 = vmatmul.mubr.f32.gmra.mrb[0].mxu0 %v107
  %v290 = vpop.f32.mrb[0].mxu0
  %v291 = vadd.f32 %v61, %v290
  %v292 = vpop.f32.mrb[0].mxu0
  %293 = vmatprep.mubr.f32.mxu0 0.0
  %294 = vmatmul.mubr.f32.gmra.mrb[0].mxu0 %v110
  %v295 = vpop.f32.mrb[0].mxu0
  %v296 = vadd.f32 %v61, %v295
  %v297 = vpop.f32.mrb[0].mxu0
  %298 = vmatprep.mubr.f32.mxu0 0.0
  %299 = vmatmul.mubr.f32.gmra.mrb[0].mxu0 %v113
  %v300 = vpop.f32.mrb[0].mxu0
  %v301 = vadd.f32 %v61, %v300
  %v302 = vpop.f32.mrb[0].mxu0
  %303 = vmatprep.mubr.f32.mxu0 0.0
  %304 = vmatmul.mubr.f32.gmra.mrb[0].mxu0 %v116
  %v305 = vpop.f32.mrb[0].mxu0
  %v306 = vadd.f32 %v61, %v305
  %v307 = vpop.f32.mrb[0].mxu0
  %308 = vmatprep.mubr.f32.mxu0 0.0
  %309 = vmatmul.mubr.f32.gmra.mrb[0].mxu0 %v119
  %v310 = vpop.f32.mrb[0].mxu0
  %v311 = vadd.f32 %v61, %v310
  %v312 = vpop.f32.mrb[0].mxu0
  %313 = vmatprep.mubr.f32.mxu0 0.0
  %314 = vmatmul.mubr.f32.gmra.mrb[0].mxu0 %v122
  %v315 = vpop.f32.mrb[0].mxu0
  %v316 = vadd.f32 %v61, %v315
  %v317 = vpop.f32.mrb[0].mxu0
  %318 = vmatprep.mubr.f32.mxu0 0.0
  %319 = vmatmul.mubr.f32.gmra.mrb[0].mxu0 %v125
  %v320 = vpop.f32.mrb[0].mxu0
  %v321 = vadd.f32 %v61, %v320
  %v322 = vpop.f32.mrb[0].mxu0
  %323 = vmatprep.mubr.f32.mxu0 0.0
  %324 = vmatmul.mubr.f32.gmra.mrb[0].mxu0 %v128
  %v325 = vpop.f32.mrb[0].mxu0
  %v326 = vadd.f32 %v61, %v325
  %v327 = vpop.f32.mrb[0].mxu0
  %328 = vmatprep.mubr.f32.mxu0 0.0
  %329 = vmatmul.mubr.f32.gmra.mrb[0].mxu0 %v131
  %v330 = vpop.f32.mrb[0].mxu0
  %v331 = vadd.f32 %v61, %v330
  %v332 = vpop.f32.mrb[0].mxu0
  %333 = vmatprep.mubr.f32.mxu0 0.0
  %334 = vmatmul.mubr.f32.gmra.mrb[0].mxu0 %v134
  %v335 = vpop.f32.mrb[0].mxu0
  %v336 = vadd.f32 %v61, %v335
  %v337 = vpop.f32.mrb[0].mxu0
  %338 = vmatprep.mubr.f32.mxu0 0.0
  %339 = vmatmul.mubr.f32.gmra.mrb[0].mxu0 %v137
  %v340 = vpop.f32.mrb[0].mxu0
  %v341 = vadd.f32 %v61, %v340
  %v342 = vpop.f32.mrb[0].mxu0
  %343 = vmatprep.mubr.f32.mxu0 0.0
  %344 = vmatmul.mubr.f32.gmra.mrb[0].mxu0 %v140
  %v345 = vpop.f32.mrb[0].mxu0
  %v346 = vadd.f32 %v61, %v345
  %v347 = vpop.f32.mrb[0].mxu0
  %348 = vmatprep.mubr.f32.mxu0 0.0
  %349 = vmatmul.mubr.f32.gmra.mrb[0].mxu0 %v143
  %v350 = vpop.f32.mrb[0].mxu0
  %v351 = vadd.f32 %v61, %v350
  %v352 = vpop.f32.mrb[0].mxu0
  %353 = vmatprep.mubr.f32.mxu0 0.0
  %354 = vmatmul.mubr.f32.gmra.mrb[0].mxu0 %v146
  %v355 = vpop.f32.mrb[0].mxu0
  %v356 = vadd.f32 %v61, %v355
  %v357 = vpop.f32.mrb[0].mxu0
  %358 = vmatprep.mubr.f32.mxu0 0.0
  %359 = vmatmul.mubr.f32.gmra.mrb[0].mxu0 %v149
  %v360 = vpop.f32.mrb[0].mxu0
  %v361 = vadd.f32 %v61, %v360
  %v362 = vpop.f32.mrb[0].mxu0
  %363 = vmatprep.mubr.f32.mxu0 0.0
  %364 = vmatmul.mubr.f32.gmra.mrb[0].mxu0 %v152
  %v365 = vpop.f32.mrb[0].mxu0
  %v366 = vadd.f32 %v61, %v365
  %v367 = vpop.f32.mrb[0].mxu0
  %368 = vdwg.mxu0
  %vm369 = vcmask 261120
  %370 = vst.msk [vmem:[#allocation2] sm:$0xff] %vm369, %v221
  %371 = vst.msk [vmem:[#allocation2 + $0x8] sm:$0xff] %vm369, %v226
  %372 = vst.msk [vmem:[#allocation2 + $0x10] sm:$0xff] %vm369, %v231
  %373 = vst.msk [vmem:[#allocation2 + $0x18] sm:$0xff] %vm369, %v236
  %374 = vst.msk [vmem:[#allocation2 + $0x20] sm:$0xff] %vm369, %v241
  %375 = vst.msk [vmem:[#allocation2 + $0x28] sm:$0xff] %vm369, %v246
  %376 = vst.msk [vmem:[#allocation2 + $0x30] sm:$0xff] %vm369, %v251
  %377 = vst.msk [vmem:[#allocation2 + $0x38] sm:$0xff] %vm369, %v256
  %378 = vst.msk [vmem:[#allocation2 + $0x40] sm:$0xff] %vm369, %v261
  %379 = vst.msk [vmem:[#allocation2 + $0x48] sm:$0xff] %vm369, %v266
  %380 = vst.msk [vmem:[#allocation2 + $0x50] sm:$0xff] %vm369, %v271
  %381 = vst.msk [vmem:[#allocation2 + $0x58] sm:$0xff] %vm369, %v276
  %382 = vst.msk [vmem:[#allocation2 + $0x60] sm:$0xff] %vm369, %v281
  %383 = vst.msk [vmem:[#allocation2 + $0x68] sm:$0xff] %vm369, %v286
  %384 = vst.msk [vmem:[#allocation2 + $0x70] sm:$0xff] %vm369, %v291
  %385 = vst.msk [vmem:[#allocation2 + $0x78] sm:$0xff] %vm369, %v296
  %386 = vst.msk [vmem:[#allocation2 + $0x80] sm:$0xff] %vm369, %v301
  %387 = vst.msk [vmem:[#allocation2 + $0x88] sm:$0xff] %vm369, %v306
  %388 = vst.msk [vmem:[#allocation2 + $0x90] sm:$0xff] %vm369, %v311
  %389 = vst.msk [vmem:[#allocation2 + $0x98] sm:$0xff] %vm369, %v316
  %390 = vst.msk [vmem:[#allocation2 + $0xa0] sm:$0xff] %vm369, %v321
  %391 = vst.msk [vmem:[#allocation2 + $0xa8] sm:$0xff] %vm369, %v326
  %392 = vst.msk [vmem:[#allocation2 + $0xb0] sm:$0xff] %vm369, %v331
  %393 = vst.msk [vmem:[#allocation2 + $0xb8] sm:$0xff] %vm369, %v336
  %394 = vst.msk [vmem:[#allocation2 + $0xc0] sm:$0xff] %vm369, %v341
  %395 = vst.msk [vmem:[#allocation2 + $0xc8] sm:$0xff] %vm369, %v346
  %396 = vst.msk [vmem:[#allocation2 + $0xd0] sm:$0xff] %vm369, %v351
  %397 = vst.msk [vmem:[#allocation2 + $0xd8] sm:$0xff] %vm369, %v356
  %398 = vst.msk [vmem:[#allocation2 + $0xe0] sm:$0xff] %vm369, %v361
  %399 = vst.msk [vmem:[#allocation2 + $0xe8] sm:$0xff] %vm369, %v366
  %v400 = vld [vmem:[%s2] sm:$0xff]
  %v401 = vld [vmem:[%s2 + $0x8] sm:$0xff]
  %v402 = vld [vmem:[%s2 + $0x10] sm:$0xff]
  %v403 = vld [vmem:[%s2 + $0x18] sm:$0xff]
  %v404 = vld [vmem:[#allocation2] sm:$0xff]
  %v406 = vsel %vm369, 0.0, 0
  %408 = vmatprep.subr.mxu0 0.0
  %409 = vmatpush1.msra.mxu0 %v400
  %410 = vmatprep.subr.mxu0 0.0
  %411 = vmatpush1.msra.mxu0 %v401
  %412 = vmatprep.subr.mxu0 0.0
  %413 = vmatpush1.msra.mxu0 %v402
  %414 = vmatprep.subr.mxu0 0.0
  %415 = vmatpush1.msra.mxu0 %v403
  %416 = vmatprep.subr.mxu0 0.0
  %417 = vmatpush1.msra.mxu0 0.0
  %418 = vmatprep.subr.mxu0 0.0
  %419 = vmatpush1.msra.mxu0 0.0
  %420 = vmatprep.subr.mxu0 0.0
  %421 = vmatpush1.msra.mxu0 0.0
  %422 = vmatprep.subr.mxu0 0.0
  %423 = vmatpush1.msra.mxu0 0.0
  %424 = vmatprep.subr.mxu0 0.0
  %425 = vmatpush1.msra.mxu0 0.0
  %426 = vmatprep.subr.mxu0 0.0
  %427 = vmatpush1.msra.mxu0 0.0
  %428 = vmatprep.subr.mxu0 0.0
  %429 = vmatpush1.msra.mxu0 0.0
  %430 = vmatprep.subr.mxu0 0.0
  %431 = vmatpush1.msra.mxu0 0.0
  %432 = vmatprep.subr.mxu0 0.0
  %433 = vmatpush1.msra.mxu0 0.0
  %434 = vmatprep.subr.mxu0 0.0
  %435 = vmatpush1.msra.mxu0 0.0
  %436 = vmatprep.subr.mxu0 0.0
  %437 = vmatpush1.msra.mxu0 0.0
  %438 = vmatprep.subr.mxu0 0.0
  %439 = vmatpush1.msra.mxu0 0.0
  %440 = vmatprep.subr.mxu0 0.0
  %441 = vmatpush1.msra.mxu0 0.0
  %442 = vmatprep.subr.mxu0 0.0
  %443 = vmatpush1.msra.mxu0 0.0
  %444 = vmatprep.subr.mxu0 0.0
  %445 = vmatpush1.msra.mxu0 0.0
  %446 = vmatprep.subr.mxu0 0.0
  %447 = vmatpush1.msra.mxu0 0.0
  %448 = vmatprep.subr.mxu0 0.0
  %449 = vmatpush1.msra.mxu0 0.0
  %450 = vmatprep.subr.mxu0 0.0
  %451 = vmatpush1.msra.mxu0 0.0
  %452 = vmatprep.subr.mxu0 0.0
  %453 = vmatpush1.msra.mxu0 0.0
  %454 = vmatprep.subr.mxu0 0.0
  %455 = vmatpush1.msra.mxu0 0.0
  %456 = vmatprep.subr.mxu0 0.0
  %457 = vmatpush1.msra.mxu0 0.0
  %458 = vmatprep.subr.mxu0 0.0
  %459 = vmatpush1.msra.mxu0 0.0
  %460 = vmatprep.subr.mxu0 0.0
  %461 = vmatpush1.msra.mxu0 0.0
  %462 = vmatprep.subr.mxu0 0.0
  %463 = vmatpush1.msra.mxu0 0.0
  %464 = vmatprep.subr.mxu0 0.0
  %465 = vmatpush1.msra.mxu0 0.0
  %466 = vmatprep.subr.mxu0 0.0
  %467 = vmatpush1.msra.mxu0 0.0
  %468 = vmatprep.subr.mxu0 0.0
  %469 = vmatpush1.msra.mxu0 0.0
  %470 = vmatprep.subr.mxu0 0.0
  %471 = vmatpush1.msra.mxu0 0.0
  %472 = vmatprep.mubr.f32.mxu0 0.0
  %473 = vmatmul.mubr.f32.gmra.mrb[0].mxu0 %v406
  %v474 = vpop.f32.mrb[0].mxu0
  %v475 = vadd.f32 0.0, %v474
  %v476 = vpop.f32.mrb[0].mxu0
  %477 = vdwg.mxu0
  %v478 = vadd.f32 %v404, %v475
  %v479 = vmax.f32 %v478, 0.0
  %480 = vst.msk [vmem:[#allocation3] sm:$0xff] %vm369, %v479
  %v481 = vld [vmem:[#allocation2 + $0x8] sm:$0xff]
  %v483 = vsel %vm369, %v479, 0
  %485 = vmatprep.subr.mxu0 0.0
  %486 = vmatpush1.msra.mxu0 %v400
  %487 = vmatprep.subr.mxu0 0.0
  %488 = vmatpush1.msra.mxu0 %v401
  %489 = vmatprep.subr.mxu0 0.0
  %490 = vmatpush1.msra.mxu0 %v402
  %491 = vmatprep.subr.mxu0 0.0
  %492 = vmatpush1.msra.mxu0 %v403
  %493 = vmatprep.subr.mxu0 0.0
  %494 = vmatpush1.msra.mxu0 0.0
  %495 = vmatprep.subr.mxu0 0.0
  %496 = vmatpush1.msra.mxu0 0.0
  %497 = vmatprep.subr.mxu0 0.0
  %498 = vmatpush1.msra.mxu0 0.0
  %499 = vmatprep.subr.mxu0 0.0
  %500 = vmatpush1.msra.mxu0 0.0
  %501 = vmatprep.subr.mxu0 0.0
  %502 = vmatpush1.msra.mxu0 0.0
  %503 = vmatprep.subr.mxu0 0.0
  %504 = vmatpush1.msra.mxu0 0.0
  %505 = vmatprep.subr.mxu0 0.0
  %506 = vmatpush1.msra.mxu0 0.0
  %507 = vmatprep.subr.mxu0 0.0
  %508 = vmatpush1.msra.mxu0 0.0
  %509 = vmatprep.subr.mxu0 0.0
  %510 = vmatpush1.msra.mxu0 0.0
  %511 = vmatprep.subr.mxu0 0.0
  %512 = vmatpush1.msra.mxu0 0.0
  %513 = vmatprep.subr.mxu0 0.0
  %514 = vmatpush1.msra.mxu0 0.0
  %515 = vmatprep.subr.mxu0 0.0
  %516 = vmatpush1.msra.mxu0 0.0
  %517 = vmatprep.subr.mxu0 0.0
  %518 = vmatpush1.msra.mxu0 0.0
  %519 = vmatprep.subr.mxu0 0.0
  %520 = vmatpush1.msra.mxu0 0.0
  %521 = vmatprep.subr.mxu0 0.0
  %522 = vmatpush1.msra.mxu0 0.0
  %523 = vmatprep.subr.mxu0 0.0
  %524 = vmatpush1.msra.mxu0 0.0
  %525 = vmatprep.subr.mxu0 0.0
  %526 = vmatpush1.msra.mxu0 0.0
  %527 = vmatprep.subr.mxu0 0.0
  %528 = vmatpush1.msra.mxu0 0.0
  %529 = vmatprep.subr.mxu0 0.0
  %530 = vmatpush1.msra.mxu0 0.0
  %531 = vmatprep.subr.mxu0 0.0
  %532 = vmatpush1.msra.mxu0 0.0
  %533 = vmatprep.subr.mxu0 0.0
  %534 = vmatpush1.msra.mxu0 0.0
  %535 = vmatprep.subr.mxu0 0.0
  %536 = vmatpush1.msra.mxu0 0.0
  %537 = vmatprep.subr.mxu0 0.0
  %538 = vmatpush1.msra.mxu0 0.0
  %539 = vmatprep.subr.mxu0 0.0
  %540 = vmatpush1.msra.mxu0 0.0
  %541 = vmatprep.subr.mxu0 0.0
  %542 = vmatpush1.msra.mxu0 0.0
  %543 = vmatprep.subr.mxu0 0.0
  %544 = vmatpush1.msra.mxu0 0.0
  %545 = vmatprep.subr.mxu0 0.0
  %546 = vmatpush1.msra.mxu0 0.0
  %547 = vmatprep.subr.mxu0 0.0
  %548 = vmatpush1.msra.mxu0 0.0
  %549 = vmatprep.mubr.f32.mxu0 0.0
  %550 = vmatmul.mubr.f32.gmra.mrb[0].mxu0 %v483
  %v551 = vpop.f32.mrb[0].mxu0
  %v552 = vadd.f32 0.0, %v551
  %v553 = vpop.f32.mrb[0].mxu0
  %554 = vdwg.mxu0
  %v555 = vadd.f32 %v481, %v552
  %v556 = vmax.f32 %v555, 0.0
  %557 = vst.msk [vmem:[#allocation3 + $0x8] sm:$0xff] %vm369, %v556
  %v558 = vld [vmem:[#allocation2 + $0x10] sm:$0xff]
  %v560 = vsel %vm369, %v556, 0
  %562 = vmatprep.subr.mxu0 0.0
  %563 = vmatpush1.msra.mxu0 %v400
  %564 = vmatprep.subr.mxu0 0.0
  %565 = vmatpush1.msra.mxu0 %v401
  %566 = vmatprep.subr.mxu0 0.0
  %567 = vmatpush1.msra.mxu0 %v402
  %568 = vmatprep.subr.mxu0 0.0
  %569 = vmatpush1.msra.mxu0 %v403
  %570 = vmatprep.subr.mxu0 0.0
  %571 = vmatpush1.msra.mxu0 0.0
  %572 = vmatprep.subr.mxu0 0.0
  %573 = vmatpush1.msra.mxu0 0.0
  %574 = vmatprep.subr.mxu0 0.0
  %575 = vmatpush1.msra.mxu0 0.0
  %576 = vmatprep.subr.mxu0 0.0
  %577 = vmatpush1.msra.mxu0 0.0
  %578 = vmatprep.subr.mxu0 0.0
  %579 = vmatpush1.msra.mxu0 0.0
  %580 = vmatprep.subr.mxu0 0.0
  %581 = vmatpush1.msra.mxu0 0.0
  %582 = vmatprep.subr.mxu0 0.0
  %583 = vmatpush1.msra.mxu0 0.0
  %584 = vmatprep.subr.mxu0 0.0
  %585 = vmatpush1.msra.mxu0 0.0
  %586 = vmatprep.subr.mxu0 0.0
  %587 = vmatpush1.msra.mxu0 0.0
  %588 = vmatprep.subr.mxu0 0.0
  %589 = vmatpush1.msra.mxu0 0.0
  %590 = vmatprep.subr.mxu0 0.0
  %591 = vmatpush1.msra.mxu0 0.0
  %592 = vmatprep.subr.mxu0 0.0
  %593 = vmatpush1.msra.mxu0 0.0
  %594 = vmatprep.subr.mxu0 0.0
  %595 = vmatpush1.msra.mxu0 0.0
  %596 = vmatprep.subr.mxu0 0.0
  %597 = vmatpush1.msra.mxu0 0.0
  %598 = vmatprep.subr.mxu0 0.0
  %599 = vmatpush1.msra.mxu0 0.0
  %600 = vmatprep.subr.mxu0 0.0
  %601 = vmatpush1.msra.mxu0 0.0
  %602 = vmatprep.subr.mxu0 0.0
  %603 = vmatpush1.msra.mxu0 0.0
  %604 = vmatprep.subr.mxu0 0.0
  %605 = vmatpush1.msra.mxu0 0.0
  %606 = vmatprep.subr.mxu0 0.0
  %607 = vmatpush1.msra.mxu0 0.0
  %608 = vmatprep.subr.mxu0 0.0
  %609 = vmatpush1.msra.mxu0 0.0
  %610 = vmatprep.subr.mxu0 0.0
  %611 = vmatpush1.msra.mxu0 0.0
  %612 = vmatprep.subr.mxu0 0.0
  %613 = vmatpush1.msra.mxu0 0.0
  %614 = vmatprep.subr.mxu0 0.0
  %615 = vmatpush1.msra.mxu0 0.0
  %616 = vmatprep.subr.mxu0 0.0
  %617 = vmatpush1.msra.mxu0 0.0
  %618 = vmatprep.subr.mxu0 0.0
  %619 = vmatpush1.msra.mxu0 0.0
  %620 = vmatprep.subr.mxu0 0.0
  %621 = vmatpush1.msra.mxu0 0.0
  %622 = vmatprep.subr.mxu0 0.0
  %623 = vmatpush1.msra.mxu0 0.0
  %624 = vmatprep.subr.mxu0 0.0
  %625 = vmatpush1.msra.mxu0 0.0
  %626 = vmatprep.mubr.f32.mxu0 0.0
  %627 = vmatmul.mubr.f32.gmra.mrb[0].mxu0 %v560
  %v628 = vpop.f32.mrb[0].mxu0
  %v629 = vadd.f32 0.0, %v628
  %v630 = vpop.f32.mrb[0].mxu0
  %631 = vdwg.mxu0
  %v632 = vadd.f32 %v558, %v629
  %v633 = vmax.f32 %v632, 0.0
  %634 = vst.msk [vmem:[#allocation3 + $0x10] sm:$0xff] %vm369, %v633
  %v635 = vld [vmem:[#allocation2 + $0x18] sm:$0xff]
  %v637 = vsel %vm369, %v633, 0
  %639 = vmatprep.subr.mxu0 0.0
  %640 = vmatpush1.msra.mxu0 %v400
  %641 = vmatprep.subr.mxu0 0.0
  %642 = vmatpush1.msra.mxu0 %v401
  %643 = vmatprep.subr.mxu0 0.0
  %644 = vmatpush1.msra.mxu0 %v402
  %645 = vmatprep.subr.mxu0 0.0
  %646 = vmatpush1.msra.mxu0 %v403
  %647 = vmatprep.subr.mxu0 0.0
  %648 = vmatpush1.msra.mxu0 0.0
  %649 = vmatprep.subr.mxu0 0.0
  %650 = vmatpush1.msra.mxu0 0.0
  %651 = vmatprep.subr.mxu0 0.0
  %652 = vmatpush1.msra.mxu0 0.0
  %653 = vmatprep.subr.mxu0 0.0
  %654 = vmatpush1.msra.mxu0 0.0
  %655 = vmatprep.subr.mxu0 0.0
  %656 = vmatpush1.msra.mxu0 0.0
  %657 = vmatprep.subr.mxu0 0.0
  %658 = vmatpush1.msra.mxu0 0.0
  %659 = vmatprep.subr.mxu0 0.0
  %660 = vmatpush1.msra.mxu0 0.0
  %661 = vmatprep.subr.mxu0 0.0
  %662 = vmatpush1.msra.mxu0 0.0
  %663 = vmatprep.subr.mxu0 0.0
  %664 = vmatpush1.msra.mxu0 0.0
  %665 = vmatprep.subr.mxu0 0.0
  %666 = vmatpush1.msra.mxu0 0.0
  %667 = vmatprep.subr.mxu0 0.0
  %668 = vmatpush1.msra.mxu0 0.0
  %669 = vmatprep.subr.mxu0 0.0
  %670 = vmatpush1.msra.mxu0 0.0
  %671 = vmatprep.subr.mxu0 0.0
  %672 = vmatpush1.msra.mxu0 0.0
  %673 = vmatprep.subr.mxu0 0.0
  %674 = vmatpush1.msra.mxu0 0.0
  %675 = vmatprep.subr.mxu0 0.0
  %676 = vmatpush1.msra.mxu0 0.0
  %677 = vmatprep.subr.mxu0 0.0
  %678 = vmatpush1.msra.mxu0 0.0
  %679 = vmatprep.subr.mxu0 0.0
  %680 = vmatpush1.msra.mxu0 0.0
  %681 = vmatprep.subr.mxu0 0.0
  %682 = vmatpush1.msra.mxu0 0.0
  %683 = vmatprep.subr.mxu0 0.0
  %684 = vmatpush1.msra.mxu0 0.0
  %685 = vmatprep.subr.mxu0 0.0
  %686 = vmatpush1.msra.mxu0 0.0
  %687 = vmatprep.subr.mxu0 0.0
  %688 = vmatpush1.msra.mxu0 0.0
  %689 = vmatprep.subr.mxu0 0.0
  %690 = vmatpush1.msra.mxu0 0.0
  %691 = vmatprep.subr.mxu0 0.0
  %692 = vmatpush1.msra.mxu0 0.0
  %693 = vmatprep.subr.mxu0 0.0
  %694 = vmatpush1.msra.mxu0 0.0
  %695 = vmatprep.subr.mxu0 0.0
  %696 = vmatpush1.msra.mxu0 0.0
  %697 = vmatprep.subr.mxu0 0.0
  %698 = vmatpush1.msra.mxu0 0.0
  %699 = vmatprep.subr.mxu0 0.0
  %700 = vmatpush1.msra.mxu0 0.0
  %701 = vmatprep.subr.mxu0 0.0
  %702 = vmatpush1.msra.mxu0 0.0
  %703 = vmatprep.mubr.f32.mxu0 0.0
  %704 = vmatmul.mubr.f32.gmra.mrb[0].mxu0 %v637
  %v705 = vpop.f32.mrb[0].mxu0
  %v706 = vadd.f32 0.0, %v705
  %v707 = vpop.f32.mrb[0].mxu0
  %708 = vdwg.mxu0
  %v709 = vadd.f32 %v635, %v706
  %v710 = vmax.f32 %v709, 0.0
  %711 = vst.msk [vmem:[#allocation3 + $0x18] sm:$0xff] %vm369, %v710
  %v712 = vld [vmem:[#allocation2 + $0x20] sm:$0xff]
  %v714 = vsel %vm369, %v710, 0
  %716 = vmatprep.subr.mxu0 0.0
  %717 = vmatpush1.msra.mxu0 %v400
  %718 = vmatprep.subr.mxu0 0.0
  %719 = vmatpush1.msra.mxu0 %v401
  %720 = vmatprep.subr.mxu0 0.0
  %721 = vmatpush1.msra.mxu0 %v402
  %722 = vmatprep.subr.mxu0 0.0
  %723 = vmatpush1.msra.mxu0 %v403
  %724 = vmatprep.subr.mxu0 0.0
  %725 = vmatpush1.msra.mxu0 0.0
  %726 = vmatprep.subr.mxu0 0.0
  %727 = vmatpush1.msra.mxu0 0.0
  %728 = vmatprep.subr.mxu0 0.0
  %729 = vmatpush1.msra.mxu0 0.0
  %730 = vmatprep.subr.mxu0 0.0
  %731 = vmatpush1.msra.mxu0 0.0
  %732 = vmatprep.subr.mxu0 0.0
  %733 = vmatpush1.msra.mxu0 0.0
  %734 = vmatprep.subr.mxu0 0.0
  %735 = vmatpush1.msra.mxu0 0.0
  %736 = vmatprep.subr.mxu0 0.0
  %737 = vmatpush1.msra.mxu0 0.0
  %738 = vmatprep.subr.mxu0 0.0
  %739 = vmatpush1.msra.mxu0 0.0
  %740 = vmatprep.subr.mxu0 0.0
  %741 = vmatpush1.msra.mxu0 0.0
  %742 = vmatprep.subr.mxu0 0.0
  %743 = vmatpush1.msra.mxu0 0.0
  %744 = vmatprep.subr.mxu0 0.0
  %745 = vmatpush1.msra.mxu0 0.0
  %746 = vmatprep.subr.mxu0 0.0
  %747 = vmatpush1.msra.mxu0 0.0
  %748 = vmatprep.subr.mxu0 0.0
  %749 = vmatpush1.msra.mxu0 0.0
  %750 = vmatprep.subr.mxu0 0.0
  %751 = vmatpush1.msra.mxu0 0.0
  %752 = vmatprep.subr.mxu0 0.0
  %753 = vmatpush1.msra.mxu0 0.0
  %754 = vmatprep.subr.mxu0 0.0
  %755 = vmatpush1.msra.mxu0 0.0
  %756 = vmatprep.subr.mxu0 0.0
  %757 = vmatpush1.msra.mxu0 0.0
  %758 = vmatprep.subr.mxu0 0.0
  %759 = vmatpush1.msra.mxu0 0.0
  %760 = vmatprep.subr.mxu0 0.0
  %761 = vmatpush1.msra.mxu0 0.0
  %762 = vmatprep.subr.mxu0 0.0
  %763 = vmatpush1.msra.mxu0 0.0
  %764 = vmatprep.subr.mxu0 0.0
  %765 = vmatpush1.msra.mxu0 0.0
  %766 = vmatprep.subr.mxu0 0.0
  %767 = vmatpush1.msra.mxu0 0.0
  %768 = vmatprep.subr.mxu0 0.0
  %769 = vmatpush1.msra.mxu0 0.0
  %770 = vmatprep.subr.mxu0 0.0
  %771 = vmatpush1.msra.mxu0 0.0
  %772 = vmatprep.subr.mxu0 0.0
  %773 = vmatpush1.msra.mxu0 0.0
  %774 = vmatprep.subr.mxu0 0.0
  %775 = vmatpush1.msra.mxu0 0.0
  %776 = vmatprep.subr.mxu0 0.0
  %777 = vmatpush1.msra.mxu0 0.0
  %778 = vmatprep.subr.mxu0 0.0
  %779 = vmatpush1.msra.mxu0 0.0
  %780 = vmatprep.mubr.f32.mxu0 0.0
  %781 = vmatmul.mubr.f32.gmra.mrb[0].mxu0 %v714
  %v782 = vpop.f32.mrb[0].mxu0
  %v783 = vadd.f32 0.0, %v782
  %v784 = vpop.f32.mrb[0].mxu0
  %785 = vdwg.mxu0
  %v786 = vadd.f32 %v712, %v783
  %v787 = vmax.f32 %v786, 0.0
  %788 = vst.msk [vmem:[#allocation3 + $0x20] sm:$0xff] %vm369, %v787
  %v789 = vld [vmem:[#allocation2 + $0x28] sm:$0xff]
  %v791 = vsel %vm369, %v787, 0
  %793 = vmatprep.subr.mxu0 0.0
  %794 = vmatpush1.msra.mxu0 %v400
  %795 = vmatprep.subr.mxu0 0.0
  %796 = vmatpush1.msra.mxu0 %v401
  %797 = vmatprep.subr.mxu0 0.0
  %798 = vmatpush1.msra.mxu0 %v402
  %799 = vmatprep.subr.mxu0 0.0
  %800 = vmatpush1.msra.mxu0 %v403
  %801 = vmatprep.subr.mxu0 0.0
  %802 = vmatpush1.msra.mxu0 0.0
  %803 = vmatprep.subr.mxu0 0.0
  %804 = vmatpush1.msra.mxu0 0.0
  %805 = vmatprep.subr.mxu0 0.0
  %806 = vmatpush1.msra.mxu0 0.0
  %807 = vmatprep.subr.mxu0 0.0
  %808 = vmatpush1.msra.mxu0 0.0
  %809 = vmatprep.subr.mxu0 0.0
  %810 = vmatpush1.msra.mxu0 0.0
  %811 = vmatprep.subr.mxu0 0.0
  %812 = vmatpush1.msra.mxu0 0.0
  %813 = vmatprep.subr.mxu0 0.0
  %814 = vmatpush1.msra.mxu0 0.0
  %815 = vmatprep.subr.mxu0 0.0
  %816 = vmatpush1.msra.mxu0 0.0
  %817 = vmatprep.subr.mxu0 0.0
  %818 = vmatpush1.msra.mxu0 0.0
  %819 = vmatprep.subr.mxu0 0.0
  %820 = vmatpush1.msra.mxu0 0.0
  %821 = vmatprep.subr.mxu0 0.0
  %822 = vmatpush1.msra.mxu0 0.0
  %823 = vmatprep.subr.mxu0 0.0
  %824 = vmatpush1.msra.mxu0 0.0
  %825 = vmatprep.subr.mxu0 0.0
  %826 = vmatpush1.msra.mxu0 0.0
  %827 = vmatprep.subr.mxu0 0.0
  %828 = vmatpush1.msra.mxu0 0.0
  %829 = vmatprep.subr.mxu0 0.0
  %830 = vmatpush1.msra.mxu0 0.0
  %831 = vmatprep.subr.mxu0 0.0
  %832 = vmatpush1.msra.mxu0 0.0
  %833 = vmatprep.subr.mxu0 0.0
  %834 = vmatpush1.msra.mxu0 0.0
  %835 = vmatprep.subr.mxu0 0.0
  %836 = vmatpush1.msra.mxu0 0.0
  %837 = vmatprep.subr.mxu0 0.0
  %838 = vmatpush1.msra.mxu0 0.0
  %839 = vmatprep.subr.mxu0 0.0
  %840 = vmatpush1.msra.mxu0 0.0
  %841 = vmatprep.subr.mxu0 0.0
  %842 = vmatpush1.msra.mxu0 0.0
  %843 = vmatprep.subr.mxu0 0.0
  %844 = vmatpush1.msra.mxu0 0.0
  %845 = vmatprep.subr.mxu0 0.0
  %846 = vmatpush1.msra.mxu0 0.0
  %847 = vmatprep.subr.mxu0 0.0
  %848 = vmatpush1.msra.mxu0 0.0
  %849 = vmatprep.subr.mxu0 0.0
  %850 = vmatpush1.msra.mxu0 0.0
  %851 = vmatprep.subr.mxu0 0.0
  %852 = vmatpush1.msra.mxu0 0.0
  %853 = vmatprep.subr.mxu0 0.0
  %854 = vmatpush1.msra.mxu0 0.0
  %855 = vmatprep.subr.mxu0 0.0
  %856 = vmatpush1.msra.mxu0 0.0
  %857 = vmatprep.mubr.f32.mxu0 0.0
  %858 = vmatmul.mubr.f32.gmra.mrb[0].mxu0 %v791
  %v859 = vpop.f32.mrb[0].mxu0
  %v860 = vadd.f32 0.0, %v859
  %v861 = vpop.f32.mrb[0].mxu0
  %862 = vdwg.mxu0
  %v863 = vadd.f32 %v789, %v860
  %v864 = vmax.f32 %v863, 0.0
  %865 = vst.msk [vmem:[#allocation3 + $0x28] sm:$0xff] %vm369, %v864
  %v866 = vld [vmem:[#allocation2 + $0x30] sm:$0xff]
  %v868 = vsel %vm369, %v864, 0
  %870 = vmatprep.subr.mxu0 0.0
  %871 = vmatpush1.msra.mxu0 %v400
  %872 = vmatprep.subr.mxu0 0.0
  %873 = vmatpush1.msra.mxu0 %v401
  %874 = vmatprep.subr.mxu0 0.0
  %875 = vmatpush1.msra.mxu0 %v402
  %876 = vmatprep.subr.mxu0 0.0
  %877 = vmatpush1.msra.mxu0 %v403
  %878 = vmatprep.subr.mxu0 0.0
  %879 = vmatpush1.msra.mxu0 0.0
  %880 = vmatprep.subr.mxu0 0.0
  %881 = vmatpush1.msra.mxu0 0.0
  %882 = vmatprep.subr.mxu0 0.0
  %883 = vmatpush1.msra.mxu0 0.0
  %884 = vmatprep.subr.mxu0 0.0
  %885 = vmatpush1.msra.mxu0 0.0
  %886 = vmatprep.subr.mxu0 0.0
  %887 = vmatpush1.msra.mxu0 0.0
  %888 = vmatprep.subr.mxu0 0.0
  %889 = vmatpush1.msra.mxu0 0.0
  %890 = vmatprep.subr.mxu0 0.0
  %891 = vmatpush1.msra.mxu0 0.0
  %892 = vmatprep.subr.mxu0 0.0
  %893 = vmatpush1.msra.mxu0 0.0
  %894 = vmatprep.subr.mxu0 0.0
  %895 = vmatpush1.msra.mxu0 0.0
  %896 = vmatprep.subr.mxu0 0.0
  %897 = vmatpush1.msra.mxu0 0.0
  %898 = vmatprep.subr.mxu0 0.0
  %899 = vmatpush1.msra.mxu0 0.0
  %900 = vmatprep.subr.mxu0 0.0
  %901 = vmatpush1.msra.mxu0 0.0
  %902 = vmatprep.subr.mxu0 0.0
  %903 = vmatpush1.msra.mxu0 0.0
  %904 = vmatprep.subr.mxu0 0.0
  %905 = vmatpush1.msra.mxu0 0.0
  %906 = vmatprep.subr.mxu0 0.0
  %907 = vmatpush1.msra.mxu0 0.0
  %908 = vmatprep.subr.mxu0 0.0
  %909 = vmatpush1.msra.mxu0 0.0
  %910 = vmatprep.subr.mxu0 0.0
  %911 = vmatpush1.msra.mxu0 0.0
  %912 = vmatprep.subr.mxu0 0.0
  %913 = vmatpush1.msra.mxu0 0.0
  %914 = vmatprep.subr.mxu0 0.0
  %915 = vmatpush1.msra.mxu0 0.0
  %916 = vmatprep.subr.mxu0 0.0
  %917 = vmatpush1.msra.mxu0 0.0
  %918 = vmatprep.subr.mxu0 0.0
  %919 = vmatpush1.msra.mxu0 0.0
  %920 = vmatprep.subr.mxu0 0.0
  %921 = vmatpush1.msra.mxu0 0.0
  %922 = vmatprep.subr.mxu0 0.0
  %923 = vmatpush1.msra.mxu0 0.0
  %924 = vmatprep.subr.mxu0 0.0
  %925 = vmatpush1.msra.mxu0 0.0
  %926 = vmatprep.subr.mxu0 0.0
  %927 = vmatpush1.msra.mxu0 0.0
  %928 = vmatprep.subr.mxu0 0.0
  %929 = vmatpush1.msra.mxu0 0.0
  %930 = vmatprep.subr.mxu0 0.0
  %931 = vmatpush1.msra.mxu0 0.0
  %932 = vmatprep.subr.mxu0 0.0
  %933 = vmatpush1.msra.mxu0 0.0
  %934 = vmatprep.mubr.f32.mxu0 0.0
  %935 = vmatmul.mubr.f32.gmra.mrb[0].mxu0 %v868
  %v936 = vpop.f32.mrb[0].mxu0
  %v937 = vadd.f32 0.0, %v936
  %v938 = vpop.f32.mrb[0].mxu0
  %939 = vdwg.mxu0
  %v940 = vadd.f32 %v866, %v937
  %v941 = vmax.f32 %v940, 0.0
  %942 = vst.msk [vmem:[#allocation3 + $0x30] sm:$0xff] %vm369, %v941
  %v943 = vld [vmem:[#allocation2 + $0x38] sm:$0xff]
  %v945 = vsel %vm369, %v941, 0
  %947 = vmatprep.subr.mxu0 0.0
  %948 = vmatpush1.msra.mxu0 %v400
  %949 = vmatprep.subr.mxu0 0.0
  %950 = vmatpush1.msra.mxu0 %v401
  %951 = vmatprep.subr.mxu0 0.0
  %952 = vmatpush1.msra.mxu0 %v402
  %953 = vmatprep.subr.mxu0 0.0
  %954 = vmatpush1.msra.mxu0 %v403
  %955 = vmatprep.subr.mxu0 0.0
  %956 = vmatpush1.msra.mxu0 0.0
  %957 = vmatprep.subr.mxu0 0.0
  %958 = vmatpush1.msra.mxu0 0.0
  %959 = vmatprep.subr.mxu0 0.0
  %960 = vmatpush1.msra.mxu0 0.0
  %961 = vmatprep.subr.mxu0 0.0
  %962 = vmatpush1.msra.mxu0 0.0
  %963 = vmatprep.subr.mxu0 0.0
  %964 = vmatpush1.msra.mxu0 0.0
  %965 = vmatprep.subr.mxu0 0.0
  %966 = vmatpush1.msra.mxu0 0.0
  %967 = vmatprep.subr.mxu0 0.0
  %968 = vmatpush1.msra.mxu0 0.0
  %969 = vmatprep.subr.mxu0 0.0
  %970 = vmatpush1.msra.mxu0 0.0
  %971 = vmatprep.subr.mxu0 0.0
  %972 = vmatpush1.msra.mxu0 0.0
  %973 = vmatprep.subr.mxu0 0.0
  %974 = vmatpush1.msra.mxu0 0.0
  %975 = vmatprep.subr.mxu0 0.0
  %976 = vmatpush1.msra.mxu0 0.0
  %977 = vmatprep.subr.mxu0 0.0
  %978 = vmatpush1.msra.mxu0 0.0
  %979 = vmatprep.subr.mxu0 0.0
  %980 = vmatpush1.msra.mxu0 0.0
  %981 = vmatprep.subr.mxu0 0.0
  %982 = vmatpush1.msra.mxu0 0.0
  %983 = vmatprep.subr.mxu0 0.0
  %984 = vmatpush1.msra.mxu0 0.0
  %985 = vmatprep.subr.mxu0 0.0
  %986 = vmatpush1.msra.mxu0 0.0
  %987 = vmatprep.subr.mxu0 0.0
  %988 = vmatpush1.msra.mxu0 0.0
  %989 = vmatprep.subr.mxu0 0.0
  %990 = vmatpush1.msra.mxu0 0.0
  %991 = vmatprep.subr.mxu0 0.0
  %992 = vmatpush1.msra.mxu0 0.0
  %993 = vmatprep.subr.mxu0 0.0
  %994 = vmatpush1.msra.mxu0 0.0
  %995 = vmatprep.subr.mxu0 0.0
  %996 = vmatpush1.msra.mxu0 0.0
  %997 = vmatprep.subr.mxu0 0.0
  %998 = vmatpush1.msra.mxu0 0.0
  %999 = vmatprep.subr.mxu0 0.0
  %1000 = vmatpush1.msra.mxu0 0.0
  %1001 = vmatprep.subr.mxu0 0.0
  %1002 = vmatpush1.msra.mxu0 0.0
  %1003 = vmatprep.subr.mxu0 0.0
  %1004 = vmatpush1.msra.mxu0 0.0
  %1005 = vmatprep.subr.mxu0 0.0
  %1006 = vmatpush1.msra.mxu0 0.0
  %1007 = vmatprep.subr.mxu0 0.0
  %1008 = vmatpush1.msra.mxu0 0.0
  %1009 = vmatprep.subr.mxu0 0.0
  %1010 = vmatpush1.msra.mxu0 0.0
  %1011 = vmatprep.mubr.f32.mxu0 0.0
  %1012 = vmatmul.mubr.f32.gmra.mrb[0].mxu0 %v945
  %v1013 = vpop.f32.mrb[0].mxu0
  %v1014 = vadd.f32 0.0, %v1013
  %v1015 = vpop.f32.mrb[0].mxu0
  %1016 = vdwg.mxu0
  %v1017 = vadd.f32 %v943, %v1014
  %v1018 = vmax.f32 %v1017, 0.0
  %1019 = vst.msk [vmem:[#allocation3 + $0x38] sm:$0xff] %vm369, %v1018
  %v1020 = vld [vmem:[#allocation2 + $0x40] sm:$0xff]
  %v1022 = vsel %vm369, %v1018, 0
  %1024 = vmatprep.subr.mxu0 0.0
  %1025 = vmatpush1.msra.mxu0 %v400
  %1026 = vmatprep.subr.mxu0 0.0
  %1027 = vmatpush1.msra.mxu0 %v401
  %1028 = vmatprep.subr.mxu0 0.0
  %1029 = vmatpush1.msra.mxu0 %v402
  %1030 = vmatprep.subr.mxu0 0.0
  %1031 = vmatpush1.msra.mxu0 %v403
  %1032 = vmatprep.subr.mxu0 0.0
  %1033 = vmatpush1.msra.mxu0 0.0
  %1034 = vmatprep.subr.mxu0 0.0
  %1035 = vmatpush1.msra.mxu0 0.0
  %1036 = vmatprep.subr.mxu0 0.0
  %1037 = vmatpush1.msra.mxu0 0.0
  %1038 = vmatprep.subr.mxu0 0.0
  %1039 = vmatpush1.msra.mxu0 0.0
  %1040 = vmatprep.subr.mxu0 0.0
  %1041 = vmatpush1.msra.mxu0 0.0
  %1042 = vmatprep.subr.mxu0 0.0
  %1043 = vmatpush1.msra.mxu0 0.0
  %1044 = vmatprep.subr.mxu0 0.0
  %1045 = vmatpush1.msra.mxu0 0.0
  %1046 = vmatprep.subr.mxu0 0.0
  %1047 = vmatpush1.msra.mxu0 0.0
  %1048 = vmatprep.subr.mxu0 0.0
  %1049 = vmatpush1.msra.mxu0 0.0
  %1050 = vmatprep.subr.mxu0 0.0
  %1051 = vmatpush1.msra.mxu0 0.0
  %1052 = vmatprep.subr.mxu0 0.0
  %1053 = vmatpush1.msra.mxu0 0.0
  %1054 = vmatprep.subr.mxu0 0.0
  %1055 = vmatpush1.msra.mxu0 0.0
  %1056 = vmatprep.subr.mxu0 0.0
  %1057 = vmatpush1.msra.mxu0 0.0
  %1058 = vmatprep.subr.mxu0 0.0
  %1059 = vmatpush1.msra.mxu0 0.0
  %1060 = vmatprep.subr.mxu0 0.0
  %1061 = vmatpush1.msra.mxu0 0.0
  %1062 = vmatprep.subr.mxu0 0.0
  %1063 = vmatpush1.msra.mxu0 0.0
  %1064 = vmatprep.subr.mxu0 0.0
  %1065 = vmatpush1.msra.mxu0 0.0
  %1066 = vmatprep.subr.mxu0 0.0
  %1067 = vmatpush1.msra.mxu0 0.0
  %1068 = vmatprep.subr.mxu0 0.0
  %1069 = vmatpush1.msra.mxu0 0.0
  %1070 = vmatprep.subr.mxu0 0.0
  %1071 = vmatpush1.msra.mxu0 0.0
  %1072 = vmatprep.subr.mxu0 0.0
  %1073 = vmatpush1.msra.mxu0 0.0
  %1074 = vmatprep.subr.mxu0 0.0
  %1075 = vmatpush1.msra.mxu0 0.0
  %1076 = vmatprep.subr.mxu0 0.0
  %1077 = vmatpush1.msra.mxu0 0.0
  %1078 = vmatprep.subr.mxu0 0.0
  %1079 = vmatpush1.msra.mxu0 0.0
  %1080 = vmatprep.subr.mxu0 0.0
  %1081 = vmatpush1.msra.mxu0 0.0
  %1082 = vmatprep.subr.mxu0 0.0
  %1083 = vmatpush1.msra.mxu0 0.0
  %1084 = vmatprep.subr.mxu0 0.0
  %1085 = vmatpush1.msra.mxu0 0.0
  %1086 = vmatprep.subr.mxu0 0.0
  %1087 = vmatpush1.msra.mxu0 0.0
  %1088 = vmatprep.mubr.f32.mxu0 0.0
  %1089 = vmatmul.mubr.f32.gmra.mrb[0].mxu0 %v1022
  %v1090 = vpop.f32.mrb[0].mxu0
  %v1091 = vadd.f32 0.0, %v1090
  %v1092 = vpop.f32.mrb[0].mxu0
  %1093 = vdwg.mxu0
  %v1094 = vadd.f32 %v1020, %v1091
  %v1095 = vmax.f32 %v1094, 0.0
  %1096 = vst.msk [vmem:[#allocation3 + $0x40] sm:$0xff] %vm369, %v1095
  %v1097 = vld [vmem:[#allocation2 + $0x48] sm:$0xff]
  %v1099 = vsel %vm369, %v1095, 0
  %1101 = vmatprep.subr.mxu0 0.0
  %1102 = vmatpush1.msra.mxu0 %v400
  %1103 = vmatprep.subr.mxu0 0.0
  %1104 = vmatpush1.msra.mxu0 %v401
  %1105 = vmatprep.subr.mxu0 0.0
  %1106 = vmatpush1.msra.mxu0 %v402
  %1107 = vmatprep.subr.mxu0 0.0
  %1108 = vmatpush1.msra.mxu0 %v403
  %1109 = vmatprep.subr.mxu0 0.0
  %1110 = vmatpush1.msra.mxu0 0.0
  %1111 = vmatprep.subr.mxu0 0.0
  %1112 = vmatpush1.msra.mxu0 0.0
  %1113 = vmatprep.subr.mxu0 0.0
  %1114 = vmatpush1.msra.mxu0 0.0
  %1115 = vmatprep.subr.mxu0 0.0
  %1116 = vmatpush1.msra.mxu0 0.0
  %1117 = vmatprep.subr.mxu0 0.0
  %1118 = vmatpush1.msra.mxu0 0.0
  %1119 = vmatprep.subr.mxu0 0.0
  %1120 = vmatpush1.msra.mxu0 0.0
  %1121 = vmatprep.subr.mxu0 0.0
  %1122 = vmatpush1.msra.mxu0 0.0
  %1123 = vmatprep.subr.mxu0 0.0
  %1124 = vmatpush1.msra.mxu0 0.0
  %1125 = vmatprep.subr.mxu0 0.0
  %1126 = vmatpush1.msra.mxu0 0.0
  %1127 = vmatprep.subr.mxu0 0.0
  %1128 = vmatpush1.msra.mxu0 0.0
  %1129 = vmatprep.subr.mxu0 0.0
  %1130 = vmatpush1.msra.mxu0 0.0
  %1131 = vmatprep.subr.mxu0 0.0
  %1132 = vmatpush1.msra.mxu0 0.0
  %1133 = vmatprep.subr.mxu0 0.0
  %1134 = vmatpush1.msra.mxu0 0.0
  %1135 = vmatprep.subr.mxu0 0.0
  %1136 = vmatpush1.msra.mxu0 0.0
  %1137 = vmatprep.subr.mxu0 0.0
  %1138 = vmatpush1.msra.mxu0 0.0
  %1139 = vmatprep.subr.mxu0 0.0
  %1140 = vmatpush1.msra.mxu0 0.0
  %1141 = vmatprep.subr.mxu0 0.0
  %1142 = vmatpush1.msra.mxu0 0.0
  %1143 = vmatprep.subr.mxu0 0.0
  %1144 = vmatpush1.msra.mxu0 0.0
  %1145 = vmatprep.subr.mxu0 0.0
  %1146 = vmatpush1.msra.mxu0 0.0
  %1147 = vmatprep.subr.mxu0 0.0
  %1148 = vmatpush1.msra.mxu0 0.0
  %1149 = vmatprep.subr.mxu0 0.0
  %1150 = vmatpush1.msra.mxu0 0.0
  %1151 = vmatprep.subr.mxu0 0.0
  %1152 = vmatpush1.msra.mxu0 0.0
  %1153 = vmatprep.subr.mxu0 0.0
  %1154 = vmatpush1.msra.mxu0 0.0
  %1155 = vmatprep.subr.mxu0 0.0
  %1156 = vmatpush1.msra.mxu0 0.0
  %1157 = vmatprep.subr.mxu0 0.0
  %1158 = vmatpush1.msra.mxu0 0.0
  %1159 = vmatprep.subr.mxu0 0.0
  %1160 = vmatpush1.msra.mxu0 0.0
  %1161 = vmatprep.subr.mxu0 0.0
  %1162 = vmatpush1.msra.mxu0 0.0
  %1163 = vmatprep.subr.mxu0 0.0
  %1164 = vmatpush1.msra.mxu0 0.0
  %1165 = vmatprep.mubr.f32.mxu0 0.0
  %1166 = vmatmul.mubr.f32.gmra.mrb[0].mxu0 %v1099
  %v1167 = vpop.f32.mrb[0].mxu0
  %v1168 = vadd.f32 0.0, %v1167
  %v1169 = vpop.f32.mrb[0].mxu0
  %1170 = vdwg.mxu0
  %v1171 = vadd.f32 %v1097, %v1168
  %v1172 = vmax.f32 %v1171, 0.0
  %1173 = vst.msk [vmem:[#allocation3 + $0x48] sm:$0xff] %vm369, %v1172
  %v1174 = vld [vmem:[#allocation2 + $0x50] sm:$0xff]
  %v1176 = vsel %vm369, %v1172, 0
  %1178 = vmatprep.subr.mxu0 0.0
  %1179 = vmatpush1.msra.mxu0 %v400
  %1180 = vmatprep.subr.mxu0 0.0
  %1181 = vmatpush1.msra.mxu0 %v401
  %1182 = vmatprep.subr.mxu0 0.0
  %1183 = vmatpush1.msra.mxu0 %v402
  %1184 = vmatprep.subr.mxu0 0.0
  %1185 = vmatpush1.msra.mxu0 %v403
  %1186 = vmatprep.subr.mxu0 0.0
  %1187 = vmatpush1.msra.mxu0 0.0
  %1188 = vmatprep.subr.mxu0 0.0
  %1189 = vmatpush1.msra.mxu0 0.0
  %1190 = vmatprep.subr.mxu0 0.0
  %1191 = vmatpush1.msra.mxu0 0.0
  %1192 = vmatprep.subr.mxu0 0.0
  %1193 = vmatpush1.msra.mxu0 0.0
  %1194 = vmatprep.subr.mxu0 0.0
  %1195 = vmatpush1.msra.mxu0 0.0
  %1196 = vmatprep.subr.mxu0 0.0
  %1197 = vmatpush1.msra.mxu0 0.0
  %1198 = vmatprep.subr.mxu0 0.0
  %1199 = vmatpush1.msra.mxu0 0.0
  %1200 = vmatprep.subr.mxu0 0.0
  %1201 = vmatpush1.msra.mxu0 0.0
  %1202 = vmatprep.subr.mxu0 0.0
  %1203 = vmatpush1.msra.mxu0 0.0
  %1204 = vmatprep.subr.mxu0 0.0
  %1205 = vmatpush1.msra.mxu0 0.0
  %1206 = vmatprep.subr.mxu0 0.0
  %1207 = vmatpush1.msra.mxu0 0.0
  %1208 = vmatprep.subr.mxu0 0.0
  %1209 = vmatpush1.msra.mxu0 0.0
  %1210 = vmatprep.subr.mxu0 0.0
  %1211 = vmatpush1.msra.mxu0 0.0
  %1212 = vmatprep.subr.mxu0 0.0
  %1213 = vmatpush1.msra.mxu0 0.0
  %1214 = vmatprep.subr.mxu0 0.0
  %1215 = vmatpush1.msra.mxu0 0.0
  %1216 = vmatprep.subr.mxu0 0.0
  %1217 = vmatpush1.msra.mxu0 0.0
  %1218 = vmatprep.subr.mxu0 0.0
  %1219 = vmatpush1.msra.mxu0 0.0
  %1220 = vmatprep.subr.mxu0 0.0
  %1221 = vmatpush1.msra.mxu0 0.0
  %1222 = vmatprep.subr.mxu0 0.0
  %1223 = vmatpush1.msra.mxu0 0.0
  %1224 = vmatprep.subr.mxu0 0.0
  %1225 = vmatpush1.msra.mxu0 0.0
  %1226 = vmatprep.subr.mxu0 0.0
  %1227 = vmatpush1.msra.mxu0 0.0
  %1228 = vmatprep.subr.mxu0 0.0
  %1229 = vmatpush1.msra.mxu0 0.0
  %1230 = vmatprep.subr.mxu0 0.0
  %1231 = vmatpush1.msra.mxu0 0.0
  %1232 = vmatprep.subr.mxu0 0.0
  %1233 = vmatpush1.msra.mxu0 0.0
  %1234 = vmatprep.subr.mxu0 0.0
  %1235 = vmatpush1.msra.mxu0 0.0
  %1236 = vmatprep.subr.mxu0 0.0
  %1237 = vmatpush1.msra.mxu0 0.0
  %1238 = vmatprep.subr.mxu0 0.0
  %1239 = vmatpush1.msra.mxu0 0.0
  %1240 = vmatprep.subr.mxu0 0.0
  %1241 = vmatpush1.msra.mxu0 0.0
  %1242 = vmatprep.mubr.f32.mxu0 0.0
  %1243 = vmatmul.mubr.f32.gmra.mrb[0].mxu0 %v1176
  %v1244 = vpop.f32.mrb[0].mxu0
  %v1245 = vadd.f32 0.0, %v1244
  %v1246 = vpop.f32.mrb[0].mxu0
  %1247 = vdwg.mxu0
  %v1248 = vadd.f32 %v1174, %v1245
  %v1249 = vmax.f32 %v1248, 0.0
  %1250 = vst.msk [vmem:[#allocation3 + $0x50] sm:$0xff] %vm369, %v1249
  %v1251 = vld [vmem:[#allocation2 + $0x58] sm:$0xff]
  %v1253 = vsel %vm369, %v1249, 0
  %1255 = vmatprep.subr.mxu0 0.0
  %1256 = vmatpush1.msra.mxu0 %v400
  %1257 = vmatprep.subr.mxu0 0.0
  %1258 = vmatpush1.msra.mxu0 %v401
  %1259 = vmatprep.subr.mxu0 0.0
  %1260 = vmatpush1.msra.mxu0 %v402
  %1261 = vmatprep.subr.mxu0 0.0
  %1262 = vmatpush1.msra.mxu0 %v403
  %1263 = vmatprep.subr.mxu0 0.0
  %1264 = vmatpush1.msra.mxu0 0.0
  %1265 = vmatprep.subr.mxu0 0.0
  %1266 = vmatpush1.msra.mxu0 0.0
  %1267 = vmatprep.subr.mxu0 0.0
  %1268 = vmatpush1.msra.mxu0 0.0
  %1269 = vmatprep.subr.mxu0 0.0
  %1270 = vmatpush1.msra.mxu0 0.0
  %1271 = vmatprep.subr.mxu0 0.0
  %1272 = vmatpush1.msra.mxu0 0.0
  %1273 = vmatprep.subr.mxu0 0.0
  %1274 = vmatpush1.msra.mxu0 0.0
  %1275 = vmatprep.subr.mxu0 0.0
  %1276 = vmatpush1.msra.mxu0 0.0
  %1277 = vmatprep.subr.mxu0 0.0
  %1278 = vmatpush1.msra.mxu0 0.0
  %1279 = vmatprep.subr.mxu0 0.0
  %1280 = vmatpush1.msra.mxu0 0.0
  %1281 = vmatprep.subr.mxu0 0.0
  %1282 = vmatpush1.msra.mxu0 0.0
  %1283 = vmatprep.subr.mxu0 0.0
  %1284 = vmatpush1.msra.mxu0 0.0
  %1285 = vmatprep.subr.mxu0 0.0
  %1286 = vmatpush1.msra.mxu0 0.0
  %1287 = vmatprep.subr.mxu0 0.0
  %1288 = vmatpush1.msra.mxu0 0.0
  %1289 = vmatprep.subr.mxu0 0.0
  %1290 = vmatpush1.msra.mxu0 0.0
  %1291 = vmatprep.subr.mxu0 0.0
  %1292 = vmatpush1.msra.mxu0 0.0
  %1293 = vmatprep.subr.mxu0 0.0
  %1294 = vmatpush1.msra.mxu0 0.0
  %1295 = vmatprep.subr.mxu0 0.0
  %1296 = vmatpush1.msra.mxu0 0.0
  %1297 = vmatprep.subr.mxu0 0.0
  %1298 = vmatpush1.msra.mxu0 0.0
  %1299 = vmatprep.subr.mxu0 0.0
  %1300 = vmatpush1.msra.mxu0 0.0
  %1301 = vmatprep.subr.mxu0 0.0
  %1302 = vmatpush1.msra.mxu0 0.0
  %1303 = vmatprep.subr.mxu0 0.0
  %1304 = vmatpush1.msra.mxu0 0.0
  %1305 = vmatprep.subr.mxu0 0.0
  %1306 = vmatpush1.msra.mxu0 0.0
  %1307 = vmatprep.subr.mxu0 0.0
  %1308 = vmatpush1.msra.mxu0 0.0
  %1309 = vmatprep.subr.mxu0 0.0
  %1310 = vmatpush1.msra.mxu0 0.0
  %1311 = vmatprep.subr.mxu0 0.0
  %1312 = vmatpush1.msra.mxu0 0.0
  %1313 = vmatprep.subr.mxu0 0.0
  %1314 = vmatpush1.msra.mxu0 0.0
  %1315 = vmatprep.subr.mxu0 0.0
  %1316 = vmatpush1.msra.mxu0 0.0
  %1317 = vmatprep.subr.mxu0 0.0
  %1318 = vmatpush1.msra.mxu0 0.0
  %1319 = vmatprep.mubr.f32.mxu0 0.0
  %1320 = vmatmul.mubr.f32.gmra.mrb[0].mxu0 %v1253
  %v1321 = vpop.f32.mrb[0].mxu0
  %v1322 = vadd.f32 0.0, %v1321
  %v1323 = vpop.f32.mrb[0].mxu0
  %1324 = vdwg.mxu0
  %v1325 = vadd.f32 %v1251, %v1322
  %v1326 = vmax.f32 %v1325, 0.0
  %1327 = vst.msk [vmem:[#allocation3 + $0x58] sm:$0xff] %vm369, %v1326
  %v1328 = vld [vmem:[#allocation2 + $0x60] sm:$0xff]
  %v1330 = vsel %vm369, %v1326, 0
  %1332 = vmatprep.subr.mxu0 0.0
  %1333 = vmatpush1.msra.mxu0 %v400
  %1334 = vmatprep.subr.mxu0 0.0
  %1335 = vmatpush1.msra.mxu0 %v401
  %1336 = vmatprep.subr.mxu0 0.0
  %1337 = vmatpush1.msra.mxu0 %v402
  %1338 = vmatprep.subr.mxu0 0.0
  %1339 = vmatpush1.msra.mxu0 %v403
  %1340 = vmatprep.subr.mxu0 0.0
  %1341 = vmatpush1.msra.mxu0 0.0
  %1342 = vmatprep.subr.mxu0 0.0
  %1343 = vmatpush1.msra.mxu0 0.0
  %1344 = vmatprep.subr.mxu0 0.0
  %1345 = vmatpush1.msra.mxu0 0.0
  %1346 = vmatprep.subr.mxu0 0.0
  %1347 = vmatpush1.msra.mxu0 0.0
  %1348 = vmatprep.subr.mxu0 0.0
  %1349 = vmatpush1.msra.mxu0 0.0
  %1350 = vmatprep.subr.mxu0 0.0
  %1351 = vmatpush1.msra.mxu0 0.0
  %1352 = vmatprep.subr.mxu0 0.0
  %1353 = vmatpush1.msra.mxu0 0.0
  %1354 = vmatprep.subr.mxu0 0.0
  %1355 = vmatpush1.msra.mxu0 0.0
  %1356 = vmatprep.subr.mxu0 0.0
  %1357 = vmatpush1.msra.mxu0 0.0
  %1358 = vmatprep.subr.mxu0 0.0
  %1359 = vmatpush1.msra.mxu0 0.0
  %1360 = vmatprep.subr.mxu0 0.0
  %1361 = vmatpush1.msra.mxu0 0.0
  %1362 = vmatprep.subr.mxu0 0.0
  %1363 = vmatpush1.msra.mxu0 0.0
  %1364 = vmatprep.subr.mxu0 0.0
  %1365 = vmatpush1.msra.mxu0 0.0
  %1366 = vmatprep.subr.mxu0 0.0
  %1367 = vmatpush1.msra.mxu0 0.0
  %1368 = vmatprep.subr.mxu0 0.0
  %1369 = vmatpush1.msra.mxu0 0.0
  %1370 = vmatprep.subr.mxu0 0.0
  %1371 = vmatpush1.msra.mxu0 0.0
  %1372 = vmatprep.subr.mxu0 0.0
  %1373 = vmatpush1.msra.mxu0 0.0
  %1374 = vmatprep.subr.mxu0 0.0
  %1375 = vmatpush1.msra.mxu0 0.0
  %1376 = vmatprep.subr.mxu0 0.0
  %1377 = vmatpush1.msra.mxu0 0.0
  %1378 = vmatprep.subr.mxu0 0.0
  %1379 = vmatpush1.msra.mxu0 0.0
  %1380 = vmatprep.subr.mxu0 0.0
  %1381 = vmatpush1.msra.mxu0 0.0
  %1382 = vmatprep.subr.mxu0 0.0
  %1383 = vmatpush1.msra.mxu0 0.0
  %1384 = vmatprep.subr.mxu0 0.0
  %1385 = vmatpush1.msra.mxu0 0.0
  %1386 = vmatprep.subr.mxu0 0.0
  %1387 = vmatpush1.msra.mxu0 0.0
  %1388 = vmatprep.subr.mxu0 0.0
  %1389 = vmatpush1.msra.mxu0 0.0
  %1390 = vmatprep.subr.mxu0 0.0
  %1391 = vmatpush1.msra.mxu0 0.0
  %1392 = vmatprep.subr.mxu0 0.0
  %1393 = vmatpush1.msra.mxu0 0.0
  %1394 = vmatprep.subr.mxu0 0.0
  %1395 = vmatpush1.msra.mxu0 0.0
  %1396 = vmatprep.mubr.f32.mxu0 0.0
  %1397 = vmatmul.mubr.f32.gmra.mrb[0].mxu0 %v1330
  %v1398 = vpop.f32.mrb[0].mxu0
  %v1399 = vadd.f32 0.0, %v1398
  %v1400 = vpop.f32.mrb[0].mxu0
  %1401 = vdwg.mxu0
  %v1402 = vadd.f32 %v1328, %v1399
  %v1403 = vmax.f32 %v1402, 0.0
  %1404 = vst.msk [vmem:[#allocation3 + $0x60] sm:$0xff] %vm369, %v1403
  %v1405 = vld [vmem:[#allocation2 + $0x68] sm:$0xff]
  %v1407 = vsel %vm369, %v1403, 0
  %1409 = vmatprep.subr.mxu0 0.0
  %1410 = vmatpush1.msra.mxu0 %v400
  %1411 = vmatprep.subr.mxu0 0.0
  %1412 = vmatpush1.msra.mxu0 %v401
  %1413 = vmatprep.subr.mxu0 0.0
  %1414 = vmatpush1.msra.mxu0 %v402
  %1415 = vmatprep.subr.mxu0 0.0
  %1416 = vmatpush1.msra.mxu0 %v403
  %1417 = vmatprep.subr.mxu0 0.0
  %1418 = vmatpush1.msra.mxu0 0.0
  %1419 = vmatprep.subr.mxu0 0.0
  %1420 = vmatpush1.msra.mxu0 0.0
  %1421 = vmatprep.subr.mxu0 0.0
  %1422 = vmatpush1.msra.mxu0 0.0
  %1423 = vmatprep.subr.mxu0 0.0
  %1424 = vmatpush1.msra.mxu0 0.0
  %1425 = vmatprep.subr.mxu0 0.0
  %1426 = vmatpush1.msra.mxu0 0.0
  %1427 = vmatprep.subr.mxu0 0.0
  %1428 = vmatpush1.msra.mxu0 0.0
  %1429 = vmatprep.subr.mxu0 0.0
  %1430 = vmatpush1.msra.mxu0 0.0
  %1431 = vmatprep.subr.mxu0 0.0
  %1432 = vmatpush1.msra.mxu0 0.0
  %1433 = vmatprep.subr.mxu0 0.0
  %1434 = vmatpush1.msra.mxu0 0.0
  %1435 = vmatprep.subr.mxu0 0.0
  %1436 = vmatpush1.msra.mxu0 0.0
  %1437 = vmatprep.subr.mxu0 0.0
  %1438 = vmatpush1.msra.mxu0 0.0
  %1439 = vmatprep.subr.mxu0 0.0
  %1440 = vmatpush1.msra.mxu0 0.0
  %1441 = vmatprep.subr.mxu0 0.0
  %1442 = vmatpush1.msra.mxu0 0.0
  %1443 = vmatprep.subr.mxu0 0.0
  %1444 = vmatpush1.msra.mxu0 0.0
  %1445 = vmatprep.subr.mxu0 0.0
  %1446 = vmatpush1.msra.mxu0 0.0
  %1447 = vmatprep.subr.mxu0 0.0
  %1448 = vmatpush1.msra.mxu0 0.0
  %1449 = vmatprep.subr.mxu0 0.0
  %1450 = vmatpush1.msra.mxu0 0.0
  %1451 = vmatprep.subr.mxu0 0.0
  %1452 = vmatpush1.msra.mxu0 0.0
  %1453 = vmatprep.subr.mxu0 0.0
  %1454 = vmatpush1.msra.mxu0 0.0
  %1455 = vmatprep.subr.mxu0 0.0
  %1456 = vmatpush1.msra.mxu0 0.0
  %1457 = vmatprep.subr.mxu0 0.0
  %1458 = vmatpush1.msra.mxu0 0.0
  %1459 = vmatprep.subr.mxu0 0.0
  %1460 = vmatpush1.msra.mxu0 0.0
  %1461 = vmatprep.subr.mxu0 0.0
  %1462 = vmatpush1.msra.mxu0 0.0
  %1463 = vmatprep.subr.mxu0 0.0
  %1464 = vmatpush1.msra.mxu0 0.0
  %1465 = vmatprep.subr.mxu0 0.0
  %1466 = vmatpush1.msra.mxu0 0.0
  %1467 = vmatprep.subr.mxu0 0.0
  %1468 = vmatpush1.msra.mxu0 0.0
  %1469 = vmatprep.subr.mxu0 0.0
  %1470 = vmatpush1.msra.mxu0 0.0
  %1471 = vmatprep.subr.mxu0 0.0
  %1472 = vmatpush1.msra.mxu0 0.0
  %1473 = vmatprep.mubr.f32.mxu0 0.0
  %1474 = vmatmul.mubr.f32.gmra.mrb[0].mxu0 %v1407
  %v1475 = vpop.f32.mrb[0].mxu0
  %v1476 = vadd.f32 0.0, %v1475
  %v1477 = vpop.f32.mrb[0].mxu0
  %1478 = vdwg.mxu0
  %v1479 = vadd.f32 %v1405, %v1476
  %v1480 = vmax.f32 %v1479, 0.0
  %1481 = vst.msk [vmem:[#allocation3 + $0x68] sm:$0xff] %vm369, %v1480
  %v1482 = vld [vmem:[#allocation2 + $0x70] sm:$0xff]
  %v1484 = vsel %vm369, %v1480, 0
  %1486 = vmatprep.subr.mxu0 0.0
  %1487 = vmatpush1.msra.mxu0 %v400
  %1488 = vmatprep.subr.mxu0 0.0
  %1489 = vmatpush1.msra.mxu0 %v401
  %1490 = vmatprep.subr.mxu0 0.0
  %1491 = vmatpush1.msra.mxu0 %v402
  %1492 = vmatprep.subr.mxu0 0.0
  %1493 = vmatpush1.msra.mxu0 %v403
  %1494 = vmatprep.subr.mxu0 0.0
  %1495 = vmatpush1.msra.mxu0 0.0
  %1496 = vmatprep.subr.mxu0 0.0
  %1497 = vmatpush1.msra.mxu0 0.0
  %1498 = vmatprep.subr.mxu0 0.0
  %1499 = vmatpush1.msra.mxu0 0.0
  %1500 = vmatprep.subr.mxu0 0.0
  %1501 = vmatpush1.msra.mxu0 0.0
  %1502 = vmatprep.subr.mxu0 0.0
  %1503 = vmatpush1.msra.mxu0 0.0
  %1504 = vmatprep.subr.mxu0 0.0
  %1505 = vmatpush1.msra.mxu0 0.0
  %1506 = vmatprep.subr.mxu0 0.0
  %1507 = vmatpush1.msra.mxu0 0.0
  %1508 = vmatprep.subr.mxu0 0.0
  %1509 = vmatpush1.msra.mxu0 0.0
  %1510 = vmatprep.subr.mxu0 0.0
  %1511 = vmatpush1.msra.mxu0 0.0
  %1512 = vmatprep.subr.mxu0 0.0
  %1513 = vmatpush1.msra.mxu0 0.0
  %1514 = vmatprep.subr.mxu0 0.0
  %1515 = vmatpush1.msra.mxu0 0.0
  %1516 = vmatprep.subr.mxu0 0.0
  %1517 = vmatpush1.msra.mxu0 0.0
  %1518 = vmatprep.subr.mxu0 0.0
  %1519 = vmatpush1.msra.mxu0 0.0
  %1520 = vmatprep.subr.mxu0 0.0
  %1521 = vmatpush1.msra.mxu0 0.0
  %1522 = vmatprep.subr.mxu0 0.0
  %1523 = vmatpush1.msra.mxu0 0.0
  %1524 = vmatprep.subr.mxu0 0.0
  %1525 = vmatpush1.msra.mxu0 0.0
  %1526 = vmatprep.subr.mxu0 0.0
  %1527 = vmatpush1.msra.mxu0 0.0
  %1528 = vmatprep.subr.mxu0 0.0
  %1529 = vmatpush1.msra.mxu0 0.0
  %1530 = vmatprep.subr.mxu0 0.0
  %1531 = vmatpush1.msra.mxu0 0.0
  %1532 = vmatprep.subr.mxu0 0.0
  %1533 = vmatpush1.msra.mxu0 0.0
  %1534 = vmatprep.subr.mxu0 0.0
  %1535 = vmatpush1.msra.mxu0 0.0
  %1536 = vmatprep.subr.mxu0 0.0
  %1537 = vmatpush1.msra.mxu0 0.0
  %1538 = vmatprep.subr.mxu0 0.0
  %1539 = vmatpush1.msra.mxu0 0.0
  %1540 = vmatprep.subr.mxu0 0.0
  %1541 = vmatpush1.msra.mxu0 0.0
  %1542 = vmatprep.subr.mxu0 0.0
  %1543 = vmatpush1.msra.mxu0 0.0
  %1544 = vmatprep.subr.mxu0 0.0
  %1545 = vmatpush1.msra.mxu0 0.0
  %1546 = vmatprep.subr.mxu0 0.0
  %1547 = vmatpush1.msra.mxu0 0.0
  %1548 = vmatprep.subr.mxu0 0.0
  %1549 = vmatpush1.msra.mxu0 0.0
  %1550 = vmatprep.mubr.f32.mxu0 0.0
  %1551 = vmatmul.mubr.f32.gmra.mrb[0].mxu0 %v1484
  %v1552 = vpop.f32.mrb[0].mxu0
  %v1553 = vadd.f32 0.0, %v1552
  %v1554 = vpop.f32.mrb[0].mxu0
  %1555 = vdwg.mxu0
  %v1556 = vadd.f32 %v1482, %v1553
  %v1557 = vmax.f32 %v1556, 0.0
  %1558 = vst.msk [vmem:[#allocation3 + $0x70] sm:$0xff] %vm369, %v1557
  %v1559 = vld [vmem:[#allocation2 + $0x78] sm:$0xff]
  %v1561 = vsel %vm369, %v1557, 0
  %1563 = vmatprep.subr.mxu0 0.0
  %1564 = vmatpush1.msra.mxu0 %v400
  %1565 = vmatprep.subr.mxu0 0.0
  %1566 = vmatpush1.msra.mxu0 %v401
  %1567 = vmatprep.subr.mxu0 0.0
  %1568 = vmatpush1.msra.mxu0 %v402
  %1569 = vmatprep.subr.mxu0 0.0
  %1570 = vmatpush1.msra.mxu0 %v403
  %1571 = vmatprep.subr.mxu0 0.0
  %1572 = vmatpush1.msra.mxu0 0.0
  %1573 = vmatprep.subr.mxu0 0.0
  %1574 = vmatpush1.msra.mxu0 0.0
  %1575 = vmatprep.subr.mxu0 0.0
  %1576 = vmatpush1.msra.mxu0 0.0
  %1577 = vmatprep.subr.mxu0 0.0
  %1578 = vmatpush1.msra.mxu0 0.0
  %1579 = vmatprep.subr.mxu0 0.0
  %1580 = vmatpush1.msra.mxu0 0.0
  %1581 = vmatprep.subr.mxu0 0.0
  %1582 = vmatpush1.msra.mxu0 0.0
  %1583 = vmatprep.subr.mxu0 0.0
  %1584 = vmatpush1.msra.mxu0 0.0
  %1585 = vmatprep.subr.mxu0 0.0
  %1586 = vmatpush1.msra.mxu0 0.0
  %1587 = vmatprep.subr.mxu0 0.0
  %1588 = vmatpush1.msra.mxu0 0.0
  %1589 = vmatprep.subr.mxu0 0.0
  %1590 = vmatpush1.msra.mxu0 0.0
  %1591 = vmatprep.subr.mxu0 0.0
  %1592 = vmatpush1.msra.mxu0 0.0
  %1593 = vmatprep.subr.mxu0 0.0
  %1594 = vmatpush1.msra.mxu0 0.0
  %1595 = vmatprep.subr.mxu0 0.0
  %1596 = vmatpush1.msra.mxu0 0.0
  %1597 = vmatprep.subr.mxu0 0.0
  %1598 = vmatpush1.msra.mxu0 0.0
  %1599 = vmatprep.subr.mxu0 0.0
  %1600 = vmatpush1.msra.mxu0 0.0
  %1601 = vmatprep.subr.mxu0 0.0
  %1602 = vmatpush1.msra.mxu0 0.0
  %1603 = vmatprep.subr.mxu0 0.0
  %1604 = vmatpush1.msra.mxu0 0.0
  %1605 = vmatprep.subr.mxu0 0.0
  %1606 = vmatpush1.msra.mxu0 0.0
  %1607 = vmatprep.subr.mxu0 0.0
  %1608 = vmatpush1.msra.mxu0 0.0
  %1609 = vmatprep.subr.mxu0 0.0
  %1610 = vmatpush1.msra.mxu0 0.0
  %1611 = vmatprep.subr.mxu0 0.0
  %1612 = vmatpush1.msra.mxu0 0.0
  %1613 = vmatprep.subr.mxu0 0.0
  %1614 = vmatpush1.msra.mxu0 0.0
  %1615 = vmatprep.subr.mxu0 0.0
  %1616 = vmatpush1.msra.mxu0 0.0
  %1617 = vmatprep.subr.mxu0 0.0
  %1618 = vmatpush1.msra.mxu0 0.0
  %1619 = vmatprep.subr.mxu0 0.0
  %1620 = vmatpush1.msra.mxu0 0.0
  %1621 = vmatprep.subr.mxu0 0.0
  %1622 = vmatpush1.msra.mxu0 0.0
  %1623 = vmatprep.subr.mxu0 0.0
  %1624 = vmatpush1.msra.mxu0 0.0
  %1625 = vmatprep.subr.mxu0 0.0
  %1626 = vmatpush1.msra.mxu0 0.0
  %1627 = vmatprep.mubr.f32.mxu0 0.0
  %1628 = vmatmul.mubr.f32.gmra.mrb[0].mxu0 %v1561
  %v1629 = vpop.f32.mrb[0].mxu0
  %v1630 = vadd.f32 0.0, %v1629
  %v1631 = vpop.f32.mrb[0].mxu0
  %1632 = vdwg.mxu0
  %v1633 = vadd.f32 %v1559, %v1630
  %v1634 = vmax.f32 %v1633, 0.0
  %1635 = vst.msk [vmem:[#allocation3 + $0x78] sm:$0xff] %vm369, %v1634
  %v1636 = vld [vmem:[#allocation2 + $0x80] sm:$0xff]
  %v1638 = vsel %vm369, %v1634, 0
  %1640 = vmatprep.subr.mxu0 0.0
  %1641 = vmatpush1.msra.mxu0 %v400
  %1642 = vmatprep.subr.mxu0 0.0
  %1643 = vmatpush1.msra.mxu0 %v401
  %1644 = vmatprep.subr.mxu0 0.0
  %1645 = vmatpush1.msra.mxu0 %v402
  %1646 = vmatprep.subr.mxu0 0.0
  %1647 = vmatpush1.msra.mxu0 %v403
  %1648 = vmatprep.subr.mxu0 0.0
  %1649 = vmatpush1.msra.mxu0 0.0
  %1650 = vmatprep.subr.mxu0 0.0
  %1651 = vmatpush1.msra.mxu0 0.0
  %1652 = vmatprep.subr.mxu0 0.0
  %1653 = vmatpush1.msra.mxu0 0.0
  %1654 = vmatprep.subr.mxu0 0.0
  %1655 = vmatpush1.msra.mxu0 0.0
  %1656 = vmatprep.subr.mxu0 0.0
  %1657 = vmatpush1.msra.mxu0 0.0
  %1658 = vmatprep.subr.mxu0 0.0
  %1659 = vmatpush1.msra.mxu0 0.0
  %1660 = vmatprep.subr.mxu0 0.0
  %1661 = vmatpush1.msra.mxu0 0.0
  %1662 = vmatprep.subr.mxu0 0.0
  %1663 = vmatpush1.msra.mxu0 0.0
  %1664 = vmatprep.subr.mxu0 0.0
  %1665 = vmatpush1.msra.mxu0 0.0
  %1666 = vmatprep.subr.mxu0 0.0
  %1667 = vmatpush1.msra.mxu0 0.0
  %1668 = vmatprep.subr.mxu0 0.0
  %1669 = vmatpush1.msra.mxu0 0.0
  %1670 = vmatprep.subr.mxu0 0.0
  %1671 = vmatpush1.msra.mxu0 0.0
  %1672 = vmatprep.subr.mxu0 0.0
  %1673 = vmatpush1.msra.mxu0 0.0
  %1674 = vmatprep.subr.mxu0 0.0
  %1675 = vmatpush1.msra.mxu0 0.0
  %1676 = vmatprep.subr.mxu0 0.0
  %1677 = vmatpush1.msra.mxu0 0.0
  %1678 = vmatprep.subr.mxu0 0.0
  %1679 = vmatpush1.msra.mxu0 0.0
  %1680 = vmatprep.subr.mxu0 0.0
  %1681 = vmatpush1.msra.mxu0 0.0
  %1682 = vmatprep.subr.mxu0 0.0
  %1683 = vmatpush1.msra.mxu0 0.0
  %1684 = vmatprep.subr.mxu0 0.0
  %1685 = vmatpush1.msra.mxu0 0.0
  %1686 = vmatprep.subr.mxu0 0.0
  %1687 = vmatpush1.msra.mxu0 0.0
  %1688 = vmatprep.subr.mxu0 0.0
  %1689 = vmatpush1.msra.mxu0 0.0
  %1690 = vmatprep.subr.mxu0 0.0
  %1691 = vmatpush1.msra.mxu0 0.0
  %1692 = vmatprep.subr.mxu0 0.0
  %1693 = vmatpush1.msra.mxu0 0.0
  %1694 = vmatprep.subr.mxu0 0.0
  %1695 = vmatpush1.msra.mxu0 0.0
  %1696 = vmatprep.subr.mxu0 0.0
  %1697 = vmatpush1.msra.mxu0 0.0
  %1698 = vmatprep.subr.mxu0 0.0
  %1699 = vmatpush1.msra.mxu0 0.0
  %1700 = vmatprep.subr.mxu0 0.0
  %1701 = vmatpush1.msra.mxu0 0.0
  %1702 = vmatprep.subr.mxu0 0.0
  %1703 = vmatpush1.msra.mxu0 0.0
  %1704 = vmatprep.mubr.f32.mxu0 0.0
  %1705 = vmatmul.mubr.f32.gmra.mrb[0].mxu0 %v1638
  %v1706 = vpop.f32.mrb[0].mxu0
  %v1707 = vadd.f32 0.0, %v1706
  %v1708 = vpop.f32.mrb[0].mxu0
  %1709 = vdwg.mxu0
  %v1710 = vadd.f32 %v1636, %v1707
  %v1711 = vmax.f32 %v1710, 0.0
  %1712 = vst.msk [vmem:[#allocation3 + $0x80] sm:$0xff] %vm369, %v1711
  %v1713 = vld [vmem:[#allocation2 + $0x88] sm:$0xff]
  %v1715 = vsel %vm369, %v1711, 0
  %1717 = vmatprep.subr.mxu0 0.0
  %1718 = vmatpush1.msra.mxu0 %v400
  %1719 = vmatprep.subr.mxu0 0.0
  %1720 = vmatpush1.msra.mxu0 %v401
  %1721 = vmatprep.subr.mxu0 0.0
  %1722 = vmatpush1.msra.mxu0 %v402
  %1723 = vmatprep.subr.mxu0 0.0
  %1724 = vmatpush1.msra.mxu0 %v403
  %1725 = vmatprep.subr.mxu0 0.0
  %1726 = vmatpush1.msra.mxu0 0.0
  %1727 = vmatprep.subr.mxu0 0.0
  %1728 = vmatpush1.msra.mxu0 0.0
  %1729 = vmatprep.subr.mxu0 0.0
  %1730 = vmatpush1.msra.mxu0 0.0
  %1731 = vmatprep.subr.mxu0 0.0
  %1732 = vmatpush1.msra.mxu0 0.0
  %1733 = vmatprep.subr.mxu0 0.0
  %1734 = vmatpush1.msra.mxu0 0.0
  %1735 = vmatprep.subr.mxu0 0.0
  %1736 = vmatpush1.msra.mxu0 0.0
  %1737 = vmatprep.subr.mxu0 0.0
  %1738 = vmatpush1.msra.mxu0 0.0
  %1739 = vmatprep.subr.mxu0 0.0
  %1740 = vmatpush1.msra.mxu0 0.0
  %1741 = vmatprep.subr.mxu0 0.0
  %1742 = vmatpush1.msra.mxu0 0.0
  %1743 = vmatprep.subr.mxu0 0.0
  %1744 = vmatpush1.msra.mxu0 0.0
  %1745 = vmatprep.subr.mxu0 0.0
  %1746 = vmatpush1.msra.mxu0 0.0
  %1747 = vmatprep.subr.mxu0 0.0
  %1748 = vmatpush1.msra.mxu0 0.0
  %1749 = vmatprep.subr.mxu0 0.0
  %1750 = vmatpush1.msra.mxu0 0.0
  %1751 = vmatprep.subr.mxu0 0.0
  %1752 = vmatpush1.msra.mxu0 0.0
  %1753 = vmatprep.subr.mxu0 0.0
  %1754 = vmatpush1.msra.mxu0 0.0
  %1755 = vmatprep.subr.mxu0 0.0
  %1756 = vmatpush1.msra.mxu0 0.0
  %1757 = vmatprep.subr.mxu0 0.0
  %1758 = vmatpush1.msra.mxu0 0.0
  %1759 = vmatprep.subr.mxu0 0.0
  %1760 = vmatpush1.msra.mxu0 0.0
  %1761 = vmatprep.subr.mxu0 0.0
  %1762 = vmatpush1.msra.mxu0 0.0
  %1763 = vmatprep.subr.mxu0 0.0
  %1764 = vmatpush1.msra.mxu0 0.0
  %1765 = vmatprep.subr.mxu0 0.0
  %1766 = vmatpush1.msra.mxu0 0.0
  %1767 = vmatprep.subr.mxu0 0.0
  %1768 = vmatpush1.msra.mxu0 0.0
  %1769 = vmatprep.subr.mxu0 0.0
  %1770 = vmatpush1.msra.mxu0 0.0
  %1771 = vmatprep.subr.mxu0 0.0
  %1772 = vmatpush1.msra.mxu0 0.0
  %1773 = vmatprep.subr.mxu0 0.0
  %1774 = vmatpush1.msra.mxu0 0.0
  %1775 = vmatprep.subr.mxu0 0.0
  %1776 = vmatpush1.msra.mxu0 0.0
  %1777 = vmatprep.subr.mxu0 0.0
  %1778 = vmatpush1.msra.mxu0 0.0
  %1779 = vmatprep.subr.mxu0 0.0
  %1780 = vmatpush1.msra.mxu0 0.0
  %1781 = vmatprep.mubr.f32.mxu0 0.0
  %1782 = vmatmul.mubr.f32.gmra.mrb[0].mxu0 %v1715
  %v1783 = vpop.f32.mrb[0].mxu0
  %v1784 = vadd.f32 0.0, %v1783
  %v1785 = vpop.f32.mrb[0].mxu0
  %1786 = vdwg.mxu0
  %v1787 = vadd.f32 %v1713, %v1784
  %v1788 = vmax.f32 %v1787, 0.0
  %1789 = vst.msk [vmem:[#allocation3 + $0x88] sm:$0xff] %vm369, %v1788
  %v1790 = vld [vmem:[#allocation2 + $0x90] sm:$0xff]
  %v1792 = vsel %vm369, %v1788, 0
  %1794 = vmatprep.subr.mxu0 0.0
  %1795 = vmatpush1.msra.mxu0 %v400
  %1796 = vmatprep.subr.mxu0 0.0
  %1797 = vmatpush1.msra.mxu0 %v401
  %1798 = vmatprep.subr.mxu0 0.0
  %1799 = vmatpush1.msra.mxu0 %v402
  %1800 = vmatprep.subr.mxu0 0.0
  %1801 = vmatpush1.msra.mxu0 %v403
  %1802 = vmatprep.subr.mxu0 0.0
  %1803 = vmatpush1.msra.mxu0 0.0
  %1804 = vmatprep.subr.mxu0 0.0
  %1805 = vmatpush1.msra.mxu0 0.0
  %1806 = vmatprep.subr.mxu0 0.0
  %1807 = vmatpush1.msra.mxu0 0.0
  %1808 = vmatprep.subr.mxu0 0.0
  %1809 = vmatpush1.msra.mxu0 0.0
  %1810 = vmatprep.subr.mxu0 0.0
  %1811 = vmatpush1.msra.mxu0 0.0
  %1812 = vmatprep.subr.mxu0 0.0
  %1813 = vmatpush1.msra.mxu0 0.0
  %1814 = vmatprep.subr.mxu0 0.0
  %1815 = vmatpush1.msra.mxu0 0.0
  %1816 = vmatprep.subr.mxu0 0.0
  %1817 = vmatpush1.msra.mxu0 0.0
  %1818 = vmatprep.subr.mxu0 0.0
  %1819 = vmatpush1.msra.mxu0 0.0
  %1820 = vmatprep.subr.mxu0 0.0
  %1821 = vmatpush1.msra.mxu0 0.0
  %1822 = vmatprep.subr.mxu0 0.0
  %1823 = vmatpush1.msra.mxu0 0.0
  %1824 = vmatprep.subr.mxu0 0.0
  %1825 = vmatpush1.msra.mxu0 0.0
  %1826 = vmatprep.subr.mxu0 0.0
  %1827 = vmatpush1.msra.mxu0 0.0
  %1828 = vmatprep.subr.mxu0 0.0
  %1829 = vmatpush1.msra.mxu0 0.0
  %1830 = vmatprep.subr.mxu0 0.0
  %1831 = vmatpush1.msra.mxu0 0.0
  %1832 = vmatprep.subr.mxu0 0.0
  %1833 = vmatpush1.msra.mxu0 0.0
  %1834 = vmatprep.subr.mxu0 0.0
  %1835 = vmatpush1.msra.mxu0 0.0
  %1836 = vmatprep.subr.mxu0 0.0
  %1837 = vmatpush1.msra.mxu0 0.0
  %1838 = vmatprep.subr.mxu0 0.0
  %1839 = vmatpush1.msra.mxu0 0.0
  %1840 = vmatprep.subr.mxu0 0.0
  %1841 = vmatpush1.msra.mxu0 0.0
  %1842 = vmatprep.subr.mxu0 0.0
  %1843 = vmatpush1.msra.mxu0 0.0
  %1844 = vmatprep.subr.mxu0 0.0
  %1845 = vmatpush1.msra.mxu0 0.0
  %1846 = vmatprep.subr.mxu0 0.0
  %1847 = vmatpush1.msra.mxu0 0.0
  %1848 = vmatprep.subr.mxu0 0.0
  %1849 = vmatpush1.msra.mxu0 0.0
  %1850 = vmatprep.subr.mxu0 0.0
  %1851 = vmatpush1.msra.mxu0 0.0
  %1852 = vmatprep.subr.mxu0 0.0
  %1853 = vmatpush1.msra.mxu0 0.0
  %1854 = vmatprep.subr.mxu0 0.0
  %1855 = vmatpush1.msra.mxu0 0.0
  %1856 = vmatprep.subr.mxu0 0.0
  %1857 = vmatpush1.msra.mxu0 0.0
  %1858 = vmatprep.mubr.f32.mxu0 0.0
  %1859 = vmatmul.mubr.f32.gmra.mrb[0].mxu0 %v1792
  %v1860 = vpop.f32.mrb[0].mxu0
  %v1861 = vadd.f32 0.0, %v1860
  %v1862 = vpop.f32.mrb[0].mxu0
  %1863 = vdwg.mxu0
  %v1864 = vadd.f32 %v1790, %v1861
  %v1865 = vmax.f32 %v1864, 0.0
  %1866 = vst.msk [vmem:[#allocation3 + $0x90] sm:$0xff] %vm369, %v1865
  %v1867 = vld [vmem:[#allocation2 + $0x98] sm:$0xff]
  %v1869 = vsel %vm369, %v1865, 0
  %1871 = vmatprep.subr.mxu0 0.0
  %1872 = vmatpush1.msra.mxu0 %v400
  %1873 = vmatprep.subr.mxu0 0.0
  %1874 = vmatpush1.msra.mxu0 %v401
  %1875 = vmatprep.subr.mxu0 0.0
  %1876 = vmatpush1.msra.mxu0 %v402
  %1877 = vmatprep.subr.mxu0 0.0
  %1878 = vmatpush1.msra.mxu0 %v403
  %1879 = vmatprep.subr.mxu0 0.0
  %1880 = vmatpush1.msra.mxu0 0.0
  %1881 = vmatprep.subr.mxu0 0.0
  %1882 = vmatpush1.msra.mxu0 0.0
  %1883 = vmatprep.subr.mxu0 0.0
  %1884 = vmatpush1.msra.mxu0 0.0
  %1885 = vmatprep.subr.mxu0 0.0
  %1886 = vmatpush1.msra.mxu0 0.0
  %1887 = vmatprep.subr.mxu0 0.0
  %1888 = vmatpush1.msra.mxu0 0.0
  %1889 = vmatprep.subr.mxu0 0.0
  %1890 = vmatpush1.msra.mxu0 0.0
  %1891 = vmatprep.subr.mxu0 0.0
  %1892 = vmatpush1.msra.mxu0 0.0
  %1893 = vmatprep.subr.mxu0 0.0
  %1894 = vmatpush1.msra.mxu0 0.0
  %1895 = vmatprep.subr.mxu0 0.0
  %1896 = vmatpush1.msra.mxu0 0.0
  %1897 = vmatprep.subr.mxu0 0.0
  %1898 = vmatpush1.msra.mxu0 0.0
  %1899 = vmatprep.subr.mxu0 0.0
  %1900 = vmatpush1.msra.mxu0 0.0
  %1901 = vmatprep.subr.mxu0 0.0
  %1902 = vmatpush1.msra.mxu0 0.0
  %1903 = vmatprep.subr.mxu0 0.0
  %1904 = vmatpush1.msra.mxu0 0.0
  %1905 = vmatprep.subr.mxu0 0.0
  %1906 = vmatpush1.msra.mxu0 0.0
  %1907 = vmatprep.subr.mxu0 0.0
  %1908 = vmatpush1.msra.mxu0 0.0
  %1909 = vmatprep.subr.mxu0 0.0
  %1910 = vmatpush1.msra.mxu0 0.0
  %1911 = vmatprep.subr.mxu0 0.0
  %1912 = vmatpush1.msra.mxu0 0.0
  %1913 = vmatprep.subr.mxu0 0.0
  %1914 = vmatpush1.msra.mxu0 0.0
  %1915 = vmatprep.subr.mxu0 0.0
  %1916 = vmatpush1.msra.mxu0 0.0
  %1917 = vmatprep.subr.mxu0 0.0
  %1918 = vmatpush1.msra.mxu0 0.0
  %1919 = vmatprep.subr.mxu0 0.0
  %1920 = vmatpush1.msra.mxu0 0.0
  %1921 = vmatprep.subr.mxu0 0.0
  %1922 = vmatpush1.msra.mxu0 0.0
  %1923 = vmatprep.subr.mxu0 0.0
  %1924 = vmatpush1.msra.mxu0 0.0
  %1925 = vmatprep.subr.mxu0 0.0
  %1926 = vmatpush1.msra.mxu0 0.0
  %1927 = vmatprep.subr.mxu0 0.0
  %1928 = vmatpush1.msra.mxu0 0.0
  %1929 = vmatprep.subr.mxu0 0.0
  %1930 = vmatpush1.msra.mxu0 0.0
  %1931 = vmatprep.subr.mxu0 0.0
  %1932 = vmatpush1.msra.mxu0 0.0
  %1933 = vmatprep.subr.mxu0 0.0
  %1934 = vmatpush1.msra.mxu0 0.0
  %1935 = vmatprep.mubr.f32.mxu0 0.0
  %1936 = vmatmul.mubr.f32.gmra.mrb[0].mxu0 %v1869
  %v1937 = vpop.f32.mrb[0].mxu0
  %v1938 = vadd.f32 0.0, %v1937
  %v1939 = vpop.f32.mrb[0].mxu0
  %1940 = vdwg.mxu0
  %v1941 = vadd.f32 %v1867, %v1938
  %v1942 = vmax.f32 %v1941, 0.0
  %1943 = vst.msk [vmem:[#allocation3 + $0x98] sm:$0xff] %vm369, %v1942
  %v1944 = vld [vmem:[#allocation2 + $0xa0] sm:$0xff]
  %v1946 = vsel %vm369, %v1942, 0
  %1948 = vmatprep.subr.mxu0 0.0
  %1949 = vmatpush1.msra.mxu0 %v400
  %1950 = vmatprep.subr.mxu0 0.0
  %1951 = vmatpush1.msra.mxu0 %v401
  %1952 = vmatprep.subr.mxu0 0.0
  %1953 = vmatpush1.msra.mxu0 %v402
  %1954 = vmatprep.subr.mxu0 0.0
  %1955 = vmatpush1.msra.mxu0 %v403
  %1956 = vmatprep.subr.mxu0 0.0
  %1957 = vmatpush1.msra.mxu0 0.0
  %1958 = vmatprep.subr.mxu0 0.0
  %1959 = vmatpush1.msra.mxu0 0.0
  %1960 = vmatprep.subr.mxu0 0.0
  %1961 = vmatpush1.msra.mxu0 0.0
  %1962 = vmatprep.subr.mxu0 0.0
  %1963 = vmatpush1.msra.mxu0 0.0
  %1964 = vmatprep.subr.mxu0 0.0
  %1965 = vmatpush1.msra.mxu0 0.0
  %1966 = vmatprep.subr.mxu0 0.0
  %1967 = vmatpush1.msra.mxu0 0.0
  %1968 = vmatprep.subr.mxu0 0.0
  %1969 = vmatpush1.msra.mxu0 0.0
  %1970 = vmatprep.subr.mxu0 0.0
  %1971 = vmatpush1.msra.mxu0 0.0
  %1972 = vmatprep.subr.mxu0 0.0
  %1973 = vmatpush1.msra.mxu0 0.0
  %1974 = vmatprep.subr.mxu0 0.0
  %1975 = vmatpush1.msra.mxu0 0.0
  %1976 = vmatprep.subr.mxu0 0.0
  %1977 = vmatpush1.msra.mxu0 0.0
  %1978 = vmatprep.subr.mxu0 0.0
  %1979 = vmatpush1.msra.mxu0 0.0
  %1980 = vmatprep.subr.mxu0 0.0
  %1981 = vmatpush1.msra.mxu0 0.0
  %1982 = vmatprep.subr.mxu0 0.0
  %1983 = vmatpush1.msra.mxu0 0.0
  %1984 = vmatprep.subr.mxu0 0.0
  %1985 = vmatpush1.msra.mxu0 0.0
  %1986 = vmatprep.subr.mxu0 0.0
  %1987 = vmatpush1.msra.mxu0 0.0
  %1988 = vmatprep.subr.mxu0 0.0
  %1989 = vmatpush1.msra.mxu0 0.0
  %1990 = vmatprep.subr.mxu0 0.0
  %1991 = vmatpush1.msra.mxu0 0.0
  %1992 = vmatprep.subr.mxu0 0.0
  %1993 = vmatpush1.msra.mxu0 0.0
  %1994 = vmatprep.subr.mxu0 0.0
  %1995 = vmatpush1.msra.mxu0 0.0
  %1996 = vmatprep.subr.mxu0 0.0
  %1997 = vmatpush1.msra.mxu0 0.0
  %1998 = vmatprep.subr.mxu0 0.0
  %1999 = vmatpush1.msra.mxu0 0.0
  %2000 = vmatprep.subr.mxu0 0.0
  %2001 = vmatpush1.msra.mxu0 0.0
  %2002 = vmatprep.subr.mxu0 0.0
  %2003 = vmatpush1.msra.mxu0 0.0
  %2004 = vmatprep.subr.mxu0 0.0
  %2005 = vmatpush1.msra.mxu0 0.0
  %2006 = vmatprep.subr.mxu0 0.0
  %2007 = vmatpush1.msra.mxu0 0.0
  %2008 = vmatprep.subr.mxu0 0.0
  %2009 = vmatpush1.msra.mxu0 0.0
  %2010 = vmatprep.subr.mxu0 0.0
  %2011 = vmatpush1.msra.mxu0 0.0
  %2012 = vmatprep.mubr.f32.mxu0 0.0
  %2013 = vmatmul.mubr.f32.gmra.mrb[0].mxu0 %v1946
  %v2014 = vpop.f32.mrb[0].mxu0
  %v2015 = vadd.f32 0.0, %v2014
  %v2016 = vpop.f32.mrb[0].mxu0
  %2017 = vdwg.mxu0
  %v2018 = vadd.f32 %v1944, %v2015
  %v2019 = vmax.f32 %v2018, 0.0
  %2020 = vst.msk [vmem:[#allocation3 + $0xa0] sm:$0xff] %vm369, %v2019
  %v2021 = vld [vmem:[#allocation2 + $0xa8] sm:$0xff]
  %v2023 = vsel %vm369, %v2019, 0
  %2025 = vmatprep.subr.mxu0 0.0
  %2026 = vmatpush1.msra.mxu0 %v400
  %2027 = vmatprep.subr.mxu0 0.0
  %2028 = vmatpush1.msra.mxu0 %v401
  %2029 = vmatprep.subr.mxu0 0.0
  %2030 = vmatpush1.msra.mxu0 %v402
  %2031 = vmatprep.subr.mxu0 0.0
  %2032 = vmatpush1.msra.mxu0 %v403
  %2033 = vmatprep.subr.mxu0 0.0
  %2034 = vmatpush1.msra.mxu0 0.0
  %2035 = vmatprep.subr.mxu0 0.0
  %2036 = vmatpush1.msra.mxu0 0.0
  %2037 = vmatprep.subr.mxu0 0.0
  %2038 = vmatpush1.msra.mxu0 0.0
  %2039 = vmatprep.subr.mxu0 0.0
  %2040 = vmatpush1.msra.mxu0 0.0
  %2041 = vmatprep.subr.mxu0 0.0
  %2042 = vmatpush1.msra.mxu0 0.0
  %2043 = vmatprep.subr.mxu0 0.0
  %2044 = vmatpush1.msra.mxu0 0.0
  %2045 = vmatprep.subr.mxu0 0.0
  %2046 = vmatpush1.msra.mxu0 0.0
  %2047 = vmatprep.subr.mxu0 0.0
  %2048 = vmatpush1.msra.mxu0 0.0
  %2049 = vmatprep.subr.mxu0 0.0
  %2050 = vmatpush1.msra.mxu0 0.0
  %2051 = vmatprep.subr.mxu0 0.0
  %2052 = vmatpush1.msra.mxu0 0.0
  %2053 = vmatprep.subr.mxu0 0.0
  %2054 = vmatpush1.msra.mxu0 0.0
  %2055 = vmatprep.subr.mxu0 0.0
  %2056 = vmatpush1.msra.mxu0 0.0
  %2057 = vmatprep.subr.mxu0 0.0
  %2058 = vmatpush1.msra.mxu0 0.0
  %2059 = vmatprep.subr.mxu0 0.0
  %2060 = vmatpush1.msra.mxu0 0.0
  %2061 = vmatprep.subr.mxu0 0.0
  %2062 = vmatpush1.msra.mxu0 0.0
  %2063 = vmatprep.subr.mxu0 0.0
  %2064 = vmatpush1.msra.mxu0 0.0
  %2065 = vmatprep.subr.mxu0 0.0
  %2066 = vmatpush1.msra.mxu0 0.0
  %2067 = vmatprep.subr.mxu0 0.0
  %2068 = vmatpush1.msra.mxu0 0.0
  %2069 = vmatprep.subr.mxu0 0.0
  %2070 = vmatpush1.msra.mxu0 0.0
  %2071 = vmatprep.subr.mxu0 0.0
  %2072 = vmatpush1.msra.mxu0 0.0
  %2073 = vmatprep.subr.mxu0 0.0
  %2074 = vmatpush1.msra.mxu0 0.0
  %2075 = vmatprep.subr.mxu0 0.0
  %2076 = vmatpush1.msra.mxu0 0.0
  %2077 = vmatprep.subr.mxu0 0.0
  %2078 = vmatpush1.msra.mxu0 0.0
  %2079 = vmatprep.subr.mxu0 0.0
  %2080 = vmatpush1.msra.mxu0 0.0
  %2081 = vmatprep.subr.mxu0 0.0
  %2082 = vmatpush1.msra.mxu0 0.0
  %2083 = vmatprep.subr.mxu0 0.0
  %2084 = vmatpush1.msra.mxu0 0.0
  %2085 = vmatprep.subr.mxu0 0.0
  %2086 = vmatpush1.msra.mxu0 0.0
  %2087 = vmatprep.subr.mxu0 0.0
  %2088 = vmatpush1.msra.mxu0 0.0
  %2089 = vmatprep.mubr.f32.mxu0 0.0
  %2090 = vmatmul.mubr.f32.gmra.mrb[0].mxu0 %v2023
  %v2091 = vpop.f32.mrb[0].mxu0
  %v2092 = vadd.f32 0.0, %v2091
  %v2093 = vpop.f32.mrb[0].mxu0
  %2094 = vdwg.mxu0
  %v2095 = vadd.f32 %v2021, %v2092
  %v2096 = vmax.f32 %v2095, 0.0
  %2097 = vst.msk [vmem:[#allocation3 + $0xa8] sm:$0xff] %vm369, %v2096
  %v2098 = vld [vmem:[#allocation2 + $0xb0] sm:$0xff]
  %v2100 = vsel %vm369, %v2096, 0
  %2102 = vmatprep.subr.mxu0 0.0
  %2103 = vmatpush1.msra.mxu0 %v400
  %2104 = vmatprep.subr.mxu0 0.0
  %2105 = vmatpush1.msra.mxu0 %v401
  %2106 = vmatprep.subr.mxu0 0.0
  %2107 = vmatpush1.msra.mxu0 %v402
  %2108 = vmatprep.subr.mxu0 0.0
  %2109 = vmatpush1.msra.mxu0 %v403
  %2110 = vmatprep.subr.mxu0 0.0
  %2111 = vmatpush1.msra.mxu0 0.0
  %2112 = vmatprep.subr.mxu0 0.0
  %2113 = vmatpush1.msra.mxu0 0.0
  %2114 = vmatprep.subr.mxu0 0.0
  %2115 = vmatpush1.msra.mxu0 0.0
  %2116 = vmatprep.subr.mxu0 0.0
  %2117 = vmatpush1.msra.mxu0 0.0
  %2118 = vmatprep.subr.mxu0 0.0
  %2119 = vmatpush1.msra.mxu0 0.0
  %2120 = vmatprep.subr.mxu0 0.0
  %2121 = vmatpush1.msra.mxu0 0.0
  %2122 = vmatprep.subr.mxu0 0.0
  %2123 = vmatpush1.msra.mxu0 0.0
  %2124 = vmatprep.subr.mxu0 0.0
  %2125 = vmatpush1.msra.mxu0 0.0
  %2126 = vmatprep.subr.mxu0 0.0
  %2127 = vmatpush1.msra.mxu0 0.0
  %2128 = vmatprep.subr.mxu0 0.0
  %2129 = vmatpush1.msra.mxu0 0.0
  %2130 = vmatprep.subr.mxu0 0.0
  %2131 = vmatpush1.msra.mxu0 0.0
  %2132 = vmatprep.subr.mxu0 0.0
  %2133 = vmatpush1.msra.mxu0 0.0
  %2134 = vmatprep.subr.mxu0 0.0
  %2135 = vmatpush1.msra.mxu0 0.0
  %2136 = vmatprep.subr.mxu0 0.0
  %2137 = vmatpush1.msra.mxu0 0.0
  %2138 = vmatprep.subr.mxu0 0.0
  %2139 = vmatpush1.msra.mxu0 0.0
  %2140 = vmatprep.subr.mxu0 0.0
  %2141 = vmatpush1.msra.mxu0 0.0
  %2142 = vmatprep.subr.mxu0 0.0
  %2143 = vmatpush1.msra.mxu0 0.0
  %2144 = vmatprep.subr.mxu0 0.0
  %2145 = vmatpush1.msra.mxu0 0.0
  %2146 = vmatprep.subr.mxu0 0.0
  %2147 = vmatpush1.msra.mxu0 0.0
  %2148 = vmatprep.subr.mxu0 0.0
  %2149 = vmatpush1.msra.mxu0 0.0
  %2150 = vmatprep.subr.mxu0 0.0
  %2151 = vmatpush1.msra.mxu0 0.0
  %2152 = vmatprep.subr.mxu0 0.0
  %2153 = vmatpush1.msra.mxu0 0.0
  %2154 = vmatprep.subr.mxu0 0.0
  %2155 = vmatpush1.msra.mxu0 0.0
  %2156 = vmatprep.subr.mxu0 0.0
  %2157 = vmatpush1.msra.mxu0 0.0
  %2158 = vmatprep.subr.mxu0 0.0
  %2159 = vmatpush1.msra.mxu0 0.0
  %2160 = vmatprep.subr.mxu0 0.0
  %2161 = vmatpush1.msra.mxu0 0.0
  %2162 = vmatprep.subr.mxu0 0.0
  %2163 = vmatpush1.msra.mxu0 0.0
  %2164 = vmatprep.subr.mxu0 0.0
  %2165 = vmatpush1.msra.mxu0 0.0
  %2166 = vmatprep.mubr.f32.mxu0 0.0
  %2167 = vmatmul.mubr.f32.gmra.mrb[0].mxu0 %v2100
  %v2168 = vpop.f32.mrb[0].mxu0
  %v2169 = vadd.f32 0.0, %v2168
  %v2170 = vpop.f32.mrb[0].mxu0
  %2171 = vdwg.mxu0
  %v2172 = vadd.f32 %v2098, %v2169
  %v2173 = vmax.f32 %v2172, 0.0
  %2174 = vst.msk [vmem:[#allocation3 + $0xb0] sm:$0xff] %vm369, %v2173
  %v2175 = vld [vmem:[#allocation2 + $0xb8] sm:$0xff]
  %v2177 = vsel %vm369, %v2173, 0
  %2179 = vmatprep.subr.mxu0 0.0
  %2180 = vmatpush1.msra.mxu0 %v400
  %2181 = vmatprep.subr.mxu0 0.0
  %2182 = vmatpush1.msra.mxu0 %v401
  %2183 = vmatprep.subr.mxu0 0.0
  %2184 = vmatpush1.msra.mxu0 %v402
  %2185 = vmatprep.subr.mxu0 0.0
  %2186 = vmatpush1.msra.mxu0 %v403
  %2187 = vmatprep.subr.mxu0 0.0
  %2188 = vmatpush1.msra.mxu0 0.0
  %2189 = vmatprep.subr.mxu0 0.0
  %2190 = vmatpush1.msra.mxu0 0.0
  %2191 = vmatprep.subr.mxu0 0.0
  %2192 = vmatpush1.msra.mxu0 0.0
  %2193 = vmatprep.subr.mxu0 0.0
  %2194 = vmatpush1.msra.mxu0 0.0
  %2195 = vmatprep.subr.mxu0 0.0
  %2196 = vmatpush1.msra.mxu0 0.0
  %2197 = vmatprep.subr.mxu0 0.0
  %2198 = vmatpush1.msra.mxu0 0.0
  %2199 = vmatprep.subr.mxu0 0.0
  %2200 = vmatpush1.msra.mxu0 0.0
  %2201 = vmatprep.subr.mxu0 0.0
  %2202 = vmatpush1.msra.mxu0 0.0
  %2203 = vmatprep.subr.mxu0 0.0
  %2204 = vmatpush1.msra.mxu0 0.0
  %2205 = vmatprep.subr.mxu0 0.0
  %2206 = vmatpush1.msra.mxu0 0.0
  %2207 = vmatprep.subr.mxu0 0.0
  %2208 = vmatpush1.msra.mxu0 0.0
  %2209 = vmatprep.subr.mxu0 0.0
  %2210 = vmatpush1.msra.mxu0 0.0
  %2211 = vmatprep.subr.mxu0 0.0
  %2212 = vmatpush1.msra.mxu0 0.0
  %2213 = vmatprep.subr.mxu0 0.0
  %2214 = vmatpush1.msra.mxu0 0.0
  %2215 = vmatprep.subr.mxu0 0.0
  %2216 = vmatpush1.msra.mxu0 0.0
  %2217 = vmatprep.subr.mxu0 0.0
  %2218 = vmatpush1.msra.mxu0 0.0
  %2219 = vmatprep.subr.mxu0 0.0
  %2220 = vmatpush1.msra.mxu0 0.0
  %2221 = vmatprep.subr.mxu0 0.0
  %2222 = vmatpush1.msra.mxu0 0.0
  %2223 = vmatprep.subr.mxu0 0.0
  %2224 = vmatpush1.msra.mxu0 0.0
  %2225 = vmatprep.subr.mxu0 0.0
  %2226 = vmatpush1.msra.mxu0 0.0
  %2227 = vmatprep.subr.mxu0 0.0
  %2228 = vmatpush1.msra.mxu0 0.0
  %2229 = vmatprep.subr.mxu0 0.0
  %2230 = vmatpush1.msra.mxu0 0.0
  %2231 = vmatprep.subr.mxu0 0.0
  %2232 = vmatpush1.msra.mxu0 0.0
  %2233 = vmatprep.subr.mxu0 0.0
  %2234 = vmatpush1.msra.mxu0 0.0
  %2235 = vmatprep.subr.mxu0 0.0
  %2236 = vmatpush1.msra.mxu0 0.0
  %2237 = vmatprep.subr.mxu0 0.0
  %2238 = vmatpush1.msra.mxu0 0.0
  %2239 = vmatprep.subr.mxu0 0.0
  %2240 = vmatpush1.msra.mxu0 0.0
  %2241 = vmatprep.subr.mxu0 0.0
  %2242 = vmatpush1.msra.mxu0 0.0
  %2243 = vmatprep.mubr.f32.mxu0 0.0
  %2244 = vmatmul.mubr.f32.gmra.mrb[0].mxu0 %v2177
  %v2245 = vpop.f32.mrb[0].mxu0
  %v2246 = vadd.f32 0.0, %v2245
  %v2247 = vpop.f32.mrb[0].mxu0
  %2248 = vdwg.mxu0
  %v2249 = vadd.f32 %v2175, %v2246
  %v2250 = vmax.f32 %v2249, 0.0
  %2251 = vst.msk [vmem:[#allocation3 + $0xb8] sm:$0xff] %vm369, %v2250
  %v2252 = vld [vmem:[#allocation2 + $0xc0] sm:$0xff]
  %v2254 = vsel %vm369, %v2250, 0
  %2256 = vmatprep.subr.mxu0 0.0
  %2257 = vmatpush1.msra.mxu0 %v400
  %2258 = vmatprep.subr.mxu0 0.0
  %2259 = vmatpush1.msra.mxu0 %v401
  %2260 = vmatprep.subr.mxu0 0.0
  %2261 = vmatpush1.msra.mxu0 %v402
  %2262 = vmatprep.subr.mxu0 0.0
  %2263 = vmatpush1.msra.mxu0 %v403
  %2264 = vmatprep.subr.mxu0 0.0
  %2265 = vmatpush1.msra.mxu0 0.0
  %2266 = vmatprep.subr.mxu0 0.0
  %2267 = vmatpush1.msra.mxu0 0.0
  %2268 = vmatprep.subr.mxu0 0.0
  %2269 = vmatpush1.msra.mxu0 0.0
  %2270 = vmatprep.subr.mxu0 0.0
  %2271 = vmatpush1.msra.mxu0 0.0
  %2272 = vmatprep.subr.mxu0 0.0
  %2273 = vmatpush1.msra.mxu0 0.0
  %2274 = vmatprep.subr.mxu0 0.0
  %2275 = vmatpush1.msra.mxu0 0.0
  %2276 = vmatprep.subr.mxu0 0.0
  %2277 = vmatpush1.msra.mxu0 0.0
  %2278 = vmatprep.subr.mxu0 0.0
  %2279 = vmatpush1.msra.mxu0 0.0
  %2280 = vmatprep.subr.mxu0 0.0
  %2281 = vmatpush1.msra.mxu0 0.0
  %2282 = vmatprep.subr.mxu0 0.0
  %2283 = vmatpush1.msra.mxu0 0.0
  %2284 = vmatprep.subr.mxu0 0.0
  %2285 = vmatpush1.msra.mxu0 0.0
  %2286 = vmatprep.subr.mxu0 0.0
  %2287 = vmatpush1.msra.mxu0 0.0
  %2288 = vmatprep.subr.mxu0 0.0
  %2289 = vmatpush1.msra.mxu0 0.0
  %2290 = vmatprep.subr.mxu0 0.0
  %2291 = vmatpush1.msra.mxu0 0.0
  %2292 = vmatprep.subr.mxu0 0.0
  %2293 = vmatpush1.msra.mxu0 0.0
  %2294 = vmatprep.subr.mxu0 0.0
  %2295 = vmatpush1.msra.mxu0 0.0
  %2296 = vmatprep.subr.mxu0 0.0
  %2297 = vmatpush1.msra.mxu0 0.0
  %2298 = vmatprep.subr.mxu0 0.0
  %2299 = vmatpush1.msra.mxu0 0.0
  %2300 = vmatprep.subr.mxu0 0.0
  %2301 = vmatpush1.msra.mxu0 0.0
  %2302 = vmatprep.subr.mxu0 0.0
  %2303 = vmatpush1.msra.mxu0 0.0
  %2304 = vmatprep.subr.mxu0 0.0
  %2305 = vmatpush1.msra.mxu0 0.0
  %2306 = vmatprep.subr.mxu0 0.0
  %2307 = vmatpush1.msra.mxu0 0.0
  %2308 = vmatprep.subr.mxu0 0.0
  %2309 = vmatpush1.msra.mxu0 0.0
  %2310 = vmatprep.subr.mxu0 0.0
  %2311 = vmatpush1.msra.mxu0 0.0
  %2312 = vmatprep.subr.mxu0 0.0
  %2313 = vmatpush1.msra.mxu0 0.0
  %2314 = vmatprep.subr.mxu0 0.0
  %2315 = vmatpush1.msra.mxu0 0.0
  %2316 = vmatprep.subr.mxu0 0.0
  %2317 = vmatpush1.msra.mxu0 0.0
  %2318 = vmatprep.subr.mxu0 0.0
  %2319 = vmatpush1.msra.mxu0 0.0
  %2320 = vmatprep.mubr.f32.mxu0 0.0
  %2321 = vmatmul.mubr.f32.gmra.mrb[0].mxu0 %v2254
  %v2322 = vpop.f32.mrb[0].mxu0
  %v2323 = vadd.f32 0.0, %v2322
  %v2324 = vpop.f32.mrb[0].mxu0
  %2325 = vdwg.mxu0
  %v2326 = vadd.f32 %v2252, %v2323
  %v2327 = vmax.f32 %v2326, 0.0
  %2328 = vst.msk [vmem:[#allocation3 + $0xc0] sm:$0xff] %vm369, %v2327
  %v2329 = vld [vmem:[#allocation2 + $0xc8] sm:$0xff]
  %v2331 = vsel %vm369, %v2327, 0
  %2333 = vmatprep.subr.mxu0 0.0
  %2334 = vmatpush1.msra.mxu0 %v400
  %2335 = vmatprep.subr.mxu0 0.0
  %2336 = vmatpush1.msra.mxu0 %v401
  %2337 = vmatprep.subr.mxu0 0.0
  %2338 = vmatpush1.msra.mxu0 %v402
  %2339 = vmatprep.subr.mxu0 0.0
  %2340 = vmatpush1.msra.mxu0 %v403
  %2341 = vmatprep.subr.mxu0 0.0
  %2342 = vmatpush1.msra.mxu0 0.0
  %2343 = vmatprep.subr.mxu0 0.0
  %2344 = vmatpush1.msra.mxu0 0.0
  %2345 = vmatprep.subr.mxu0 0.0
  %2346 = vmatpush1.msra.mxu0 0.0
  %2347 = vmatprep.subr.mxu0 0.0
  %2348 = vmatpush1.msra.mxu0 0.0
  %2349 = vmatprep.subr.mxu0 0.0
  %2350 = vmatpush1.msra.mxu0 0.0
  %2351 = vmatprep.subr.mxu0 0.0
  %2352 = vmatpush1.msra.mxu0 0.0
  %2353 = vmatprep.subr.mxu0 0.0
  %2354 = vmatpush1.msra.mxu0 0.0
  %2355 = vmatprep.subr.mxu0 0.0
  %2356 = vmatpush1.msra.mxu0 0.0
  %2357 = vmatprep.subr.mxu0 0.0
  %2358 = vmatpush1.msra.mxu0 0.0
  %2359 = vmatprep.subr.mxu0 0.0
  %2360 = vmatpush1.msra.mxu0 0.0
  %2361 = vmatprep.subr.mxu0 0.0
  %2362 = vmatpush1.msra.mxu0 0.0
  %2363 = vmatprep.subr.mxu0 0.0
  %2364 = vmatpush1.msra.mxu0 0.0
  %2365 = vmatprep.subr.mxu0 0.0
  %2366 = vmatpush1.msra.mxu0 0.0
  %2367 = vmatprep.subr.mxu0 0.0
  %2368 = vmatpush1.msra.mxu0 0.0
  %2369 = vmatprep.subr.mxu0 0.0
  %2370 = vmatpush1.msra.mxu0 0.0
  %2371 = vmatprep.subr.mxu0 0.0
  %2372 = vmatpush1.msra.mxu0 0.0
  %2373 = vmatprep.subr.mxu0 0.0
  %2374 = vmatpush1.msra.mxu0 0.0
  %2375 = vmatprep.subr.mxu0 0.0
  %2376 = vmatpush1.msra.mxu0 0.0
  %2377 = vmatprep.subr.mxu0 0.0
  %2378 = vmatpush1.msra.mxu0 0.0
  %2379 = vmatprep.subr.mxu0 0.0
  %2380 = vmatpush1.msra.mxu0 0.0
  %2381 = vmatprep.subr.mxu0 0.0
  %2382 = vmatpush1.msra.mxu0 0.0
  %2383 = vmatprep.subr.mxu0 0.0
  %2384 = vmatpush1.msra.mxu0 0.0
  %2385 = vmatprep.subr.mxu0 0.0
  %2386 = vmatpush1.msra.mxu0 0.0
  %2387 = vmatprep.subr.mxu0 0.0
  %2388 = vmatpush1.msra.mxu0 0.0
  %2389 = vmatprep.subr.mxu0 0.0
  %2390 = vmatpush1.msra.mxu0 0.0
  %2391 = vmatprep.subr.mxu0 0.0
  %2392 = vmatpush1.msra.mxu0 0.0
  %2393 = vmatprep.subr.mxu0 0.0
  %2394 = vmatpush1.msra.mxu0 0.0
  %2395 = vmatprep.subr.mxu0 0.0
  %2396 = vmatpush1.msra.mxu0 0.0
  %2397 = vmatprep.mubr.f32.mxu0 0.0
  %2398 = vmatmul.mubr.f32.gmra.mrb[0].mxu0 %v2331
  %v2399 = vpop.f32.mrb[0].mxu0
  %v2400 = vadd.f32 0.0, %v2399
  %v2401 = vpop.f32.mrb[0].mxu0
  %2402 = vdwg.mxu0
  %v2403 = vadd.f32 %v2329, %v2400
  %v2404 = vmax.f32 %v2403, 0.0
  %2405 = vst.msk [vmem:[#allocation3 + $0xc8] sm:$0xff] %vm369, %v2404
  %v2406 = vld [vmem:[#allocation2 + $0xd0] sm:$0xff]
  %v2408 = vsel %vm369, %v2404, 0
  %2410 = vmatprep.subr.mxu0 0.0
  %2411 = vmatpush1.msra.mxu0 %v400
  %2412 = vmatprep.subr.mxu0 0.0
  %2413 = vmatpush1.msra.mxu0 %v401
  %2414 = vmatprep.subr.mxu0 0.0
  %2415 = vmatpush1.msra.mxu0 %v402
  %2416 = vmatprep.subr.mxu0 0.0
  %2417 = vmatpush1.msra.mxu0 %v403
  %2418 = vmatprep.subr.mxu0 0.0
  %2419 = vmatpush1.msra.mxu0 0.0
  %2420 = vmatprep.subr.mxu0 0.0
  %2421 = vmatpush1.msra.mxu0 0.0
  %2422 = vmatprep.subr.mxu0 0.0
  %2423 = vmatpush1.msra.mxu0 0.0
  %2424 = vmatprep.subr.mxu0 0.0
  %2425 = vmatpush1.msra.mxu0 0.0
  %2426 = vmatprep.subr.mxu0 0.0
  %2427 = vmatpush1.msra.mxu0 0.0
  %2428 = vmatprep.subr.mxu0 0.0
  %2429 = vmatpush1.msra.mxu0 0.0
  %2430 = vmatprep.subr.mxu0 0.0
  %2431 = vmatpush1.msra.mxu0 0.0
  %2432 = vmatprep.subr.mxu0 0.0
  %2433 = vmatpush1.msra.mxu0 0.0
  %2434 = vmatprep.subr.mxu0 0.0
  %2435 = vmatpush1.msra.mxu0 0.0
  %2436 = vmatprep.subr.mxu0 0.0
  %2437 = vmatpush1.msra.mxu0 0.0
  %2438 = vmatprep.subr.mxu0 0.0
  %2439 = vmatpush1.msra.mxu0 0.0
  %2440 = vmatprep.subr.mxu0 0.0
  %2441 = vmatpush1.msra.mxu0 0.0
  %2442 = vmatprep.subr.mxu0 0.0
  %2443 = vmatpush1.msra.mxu0 0.0
  %2444 = vmatprep.subr.mxu0 0.0
  %2445 = vmatpush1.msra.mxu0 0.0
  %2446 = vmatprep.subr.mxu0 0.0
  %2447 = vmatpush1.msra.mxu0 0.0
  %2448 = vmatprep.subr.mxu0 0.0
  %2449 = vmatpush1.msra.mxu0 0.0
  %2450 = vmatprep.subr.mxu0 0.0
  %2451 = vmatpush1.msra.mxu0 0.0
  %2452 = vmatprep.subr.mxu0 0.0
  %2453 = vmatpush1.msra.mxu0 0.0
  %2454 = vmatprep.subr.mxu0 0.0
  %2455 = vmatpush1.msra.mxu0 0.0
  %2456 = vmatprep.subr.mxu0 0.0
  %2457 = vmatpush1.msra.mxu0 0.0
  %2458 = vmatprep.subr.mxu0 0.0
  %2459 = vmatpush1.msra.mxu0 0.0
  %2460 = vmatprep.subr.mxu0 0.0
  %2461 = vmatpush1.msra.mxu0 0.0
  %2462 = vmatprep.subr.mxu0 0.0
  %2463 = vmatpush1.msra.mxu0 0.0
  %2464 = vmatprep.subr.mxu0 0.0
  %2465 = vmatpush1.msra.mxu0 0.0
  %2466 = vmatprep.subr.mxu0 0.0
  %2467 = vmatpush1.msra.mxu0 0.0
  %2468 = vmatprep.subr.mxu0 0.0
  %2469 = vmatpush1.msra.mxu0 0.0
  %2470 = vmatprep.subr.mxu0 0.0
  %2471 = vmatpush1.msra.mxu0 0.0
  %2472 = vmatprep.subr.mxu0 0.0
  %2473 = vmatpush1.msra.mxu0 0.0
  %2474 = vmatprep.mubr.f32.mxu0 0.0
  %2475 = vmatmul.mubr.f32.gmra.mrb[0].mxu0 %v2408
  %v2476 = vpop.f32.mrb[0].mxu0
  %v2477 = vadd.f32 0.0, %v2476
  %v2478 = vpop.f32.mrb[0].mxu0
  %2479 = vdwg.mxu0
  %v2480 = vadd.f32 %v2406, %v2477
  %v2481 = vmax.f32 %v2480, 0.0
  %2482 = vst.msk [vmem:[#allocation3 + $0xd0] sm:$0xff] %vm369, %v2481
  %v2483 = vld [vmem:[#allocation2 + $0xd8] sm:$0xff]
  %v2485 = vsel %vm369, %v2481, 0
  %2487 = vmatprep.subr.mxu0 0.0
  %2488 = vmatpush1.msra.mxu0 %v400
  %2489 = vmatprep.subr.mxu0 0.0
  %2490 = vmatpush1.msra.mxu0 %v401
  %2491 = vmatprep.subr.mxu0 0.0
  %2492 = vmatpush1.msra.mxu0 %v402
  %2493 = vmatprep.subr.mxu0 0.0
  %2494 = vmatpush1.msra.mxu0 %v403
  %2495 = vmatprep.subr.mxu0 0.0
  %2496 = vmatpush1.msra.mxu0 0.0
  %2497 = vmatprep.subr.mxu0 0.0
  %2498 = vmatpush1.msra.mxu0 0.0
  %2499 = vmatprep.subr.mxu0 0.0
  %2500 = vmatpush1.msra.mxu0 0.0
  %2501 = vmatprep.subr.mxu0 0.0
  %2502 = vmatpush1.msra.mxu0 0.0
  %2503 = vmatprep.subr.mxu0 0.0
  %2504 = vmatpush1.msra.mxu0 0.0
  %2505 = vmatprep.subr.mxu0 0.0
  %2506 = vmatpush1.msra.mxu0 0.0
  %2507 = vmatprep.subr.mxu0 0.0
  %2508 = vmatpush1.msra.mxu0 0.0
  %2509 = vmatprep.subr.mxu0 0.0
  %2510 = vmatpush1.msra.mxu0 0.0
  %2511 = vmatprep.subr.mxu0 0.0
  %2512 = vmatpush1.msra.mxu0 0.0
  %2513 = vmatprep.subr.mxu0 0.0
  %2514 = vmatpush1.msra.mxu0 0.0
  %2515 = vmatprep.subr.mxu0 0.0
  %2516 = vmatpush1.msra.mxu0 0.0
  %2517 = vmatprep.subr.mxu0 0.0
  %2518 = vmatpush1.msra.mxu0 0.0
  %2519 = vmatprep.subr.mxu0 0.0
  %2520 = vmatpush1.msra.mxu0 0.0
  %2521 = vmatprep.subr.mxu0 0.0
  %2522 = vmatpush1.msra.mxu0 0.0
  %2523 = vmatprep.subr.mxu0 0.0
  %2524 = vmatpush1.msra.mxu0 0.0
  %2525 = vmatprep.subr.mxu0 0.0
  %2526 = vmatpush1.msra.mxu0 0.0
  %2527 = vmatprep.subr.mxu0 0.0
  %2528 = vmatpush1.msra.mxu0 0.0
  %2529 = vmatprep.subr.mxu0 0.0
  %2530 = vmatpush1.msra.mxu0 0.0
  %2531 = vmatprep.subr.mxu0 0.0
  %2532 = vmatpush1.msra.mxu0 0.0
  %2533 = vmatprep.subr.mxu0 0.0
  %2534 = vmatpush1.msra.mxu0 0.0
  %2535 = vmatprep.subr.mxu0 0.0
  %2536 = vmatpush1.msra.mxu0 0.0
  %2537 = vmatprep.subr.mxu0 0.0
  %2538 = vmatpush1.msra.mxu0 0.0
  %2539 = vmatprep.subr.mxu0 0.0
  %2540 = vmatpush1.msra.mxu0 0.0
  %2541 = vmatprep.subr.mxu0 0.0
  %2542 = vmatpush1.msra.mxu0 0.0
  %2543 = vmatprep.subr.mxu0 0.0
  %2544 = vmatpush1.msra.mxu0 0.0
  %2545 = vmatprep.subr.mxu0 0.0
  %2546 = vmatpush1.msra.mxu0 0.0
  %2547 = vmatprep.subr.mxu0 0.0
  %2548 = vmatpush1.msra.mxu0 0.0
  %2549 = vmatprep.subr.mxu0 0.0
  %2550 = vmatpush1.msra.mxu0 0.0
  %2551 = vmatprep.mubr.f32.mxu0 0.0
  %2552 = vmatmul.mubr.f32.gmra.mrb[0].mxu0 %v2485
  %v2553 = vpop.f32.mrb[0].mxu0
  %v2554 = vadd.f32 0.0, %v2553
  %v2555 = vpop.f32.mrb[0].mxu0
  %2556 = vdwg.mxu0
  %v2557 = vadd.f32 %v2483, %v2554
  %v2558 = vmax.f32 %v2557, 0.0
  %2559 = vst.msk [vmem:[#allocation3 + $0xd8] sm:$0xff] %vm369, %v2558
  %v2560 = vld [vmem:[#allocation2 + $0xe0] sm:$0xff]
  %v2562 = vsel %vm369, %v2558, 0
  %2564 = vmatprep.subr.mxu0 0.0
  %2565 = vmatpush1.msra.mxu0 %v400
  %2566 = vmatprep.subr.mxu0 0.0
  %2567 = vmatpush1.msra.mxu0 %v401
  %2568 = vmatprep.subr.mxu0 0.0
  %2569 = vmatpush1.msra.mxu0 %v402
  %2570 = vmatprep.subr.mxu0 0.0
  %2571 = vmatpush1.msra.mxu0 %v403
  %2572 = vmatprep.subr.mxu0 0.0
  %2573 = vmatpush1.msra.mxu0 0.0
  %2574 = vmatprep.subr.mxu0 0.0
  %2575 = vmatpush1.msra.mxu0 0.0
  %2576 = vmatprep.subr.mxu0 0.0
  %2577 = vmatpush1.msra.mxu0 0.0
  %2578 = vmatprep.subr.mxu0 0.0
  %2579 = vmatpush1.msra.mxu0 0.0
  %2580 = vmatprep.subr.mxu0 0.0
  %2581 = vmatpush1.msra.mxu0 0.0
  %2582 = vmatprep.subr.mxu0 0.0
  %2583 = vmatpush1.msra.mxu0 0.0
  %2584 = vmatprep.subr.mxu0 0.0
  %2585 = vmatpush1.msra.mxu0 0.0
  %2586 = vmatprep.subr.mxu0 0.0
  %2587 = vmatpush1.msra.mxu0 0.0
  %2588 = vmatprep.subr.mxu0 0.0
  %2589 = vmatpush1.msra.mxu0 0.0
  %2590 = vmatprep.subr.mxu0 0.0
  %2591 = vmatpush1.msra.mxu0 0.0
  %2592 = vmatprep.subr.mxu0 0.0
  %2593 = vmatpush1.msra.mxu0 0.0
  %2594 = vmatprep.subr.mxu0 0.0
  %2595 = vmatpush1.msra.mxu0 0.0
  %2596 = vmatprep.subr.mxu0 0.0
  %2597 = vmatpush1.msra.mxu0 0.0
  %2598 = vmatprep.subr.mxu0 0.0
  %2599 = vmatpush1.msra.mxu0 0.0
  %2600 = vmatprep.subr.mxu0 0.0
  %2601 = vmatpush1.msra.mxu0 0.0
  %2602 = vmatprep.subr.mxu0 0.0
  %2603 = vmatpush1.msra.mxu0 0.0
  %2604 = vmatprep.subr.mxu0 0.0
  %2605 = vmatpush1.msra.mxu0 0.0
  %2606 = vmatprep.subr.mxu0 0.0
  %2607 = vmatpush1.msra.mxu0 0.0
  %2608 = vmatprep.subr.mxu0 0.0
  %2609 = vmatpush1.msra.mxu0 0.0
  %2610 = vmatprep.subr.mxu0 0.0
  %2611 = vmatpush1.msra.mxu0 0.0
  %2612 = vmatprep.subr.mxu0 0.0
  %2613 = vmatpush1.msra.mxu0 0.0
  %2614 = vmatprep.subr.mxu0 0.0
  %2615 = vmatpush1.msra.mxu0 0.0
  %2616 = vmatprep.subr.mxu0 0.0
  %2617 = vmatpush1.msra.mxu0 0.0
  %2618 = vmatprep.subr.mxu0 0.0
  %2619 = vmatpush1.msra.mxu0 0.0
  %2620 = vmatprep.subr.mxu0 0.0
  %2621 = vmatpush1.msra.mxu0 0.0
  %2622 = vmatprep.subr.mxu0 0.0
  %2623 = vmatpush1.msra.mxu0 0.0
  %2624 = vmatprep.subr.mxu0 0.0
  %2625 = vmatpush1.msra.mxu0 0.0
  %2626 = vmatprep.subr.mxu0 0.0
  %2627 = vmatpush1.msra.mxu0 0.0
  %2628 = vmatprep.mubr.f32.mxu0 0.0
  %2629 = vmatmul.mubr.f32.gmra.mrb[0].mxu0 %v2562
  %v2630 = vpop.f32.mrb[0].mxu0
  %v2631 = vadd.f32 0.0, %v2630
  %v2632 = vpop.f32.mrb[0].mxu0
  %2633 = vdwg.mxu0
  %v2634 = vadd.f32 %v2560, %v2631
  %v2635 = vmax.f32 %v2634, 0.0
  %2636 = vst.msk [vmem:[#allocation3 + $0xe0] sm:$0xff] %vm369, %v2635
  %v2637 = vld [vmem:[#allocation2 + $0xe8] sm:$0xff]
  %v2639 = vsel %vm369, %v2635, 0
  %2641 = vmatprep.subr.mxu0 0.0
  %2642 = vmatpush1.msra.mxu0 %v400
  %2643 = vmatprep.subr.mxu0 0.0
  %2644 = vmatpush1.msra.mxu0 %v401
  %2645 = vmatprep.subr.mxu0 0.0
  %2646 = vmatpush1.msra.mxu0 %v402
  %2647 = vmatprep.subr.mxu0 0.0
  %2648 = vmatpush1.msra.mxu0 %v403
  %2649 = vmatprep.subr.mxu0 0.0
  %2650 = vmatpush1.msra.mxu0 0.0
  %2651 = vmatprep.subr.mxu0 0.0
  %2652 = vmatpush1.msra.mxu0 0.0
  %2653 = vmatprep.subr.mxu0 0.0
  %2654 = vmatpush1.msra.mxu0 0.0
  %2655 = vmatprep.subr.mxu0 0.0
  %2656 = vmatpush1.msra.mxu0 0.0
  %2657 = vmatprep.subr.mxu0 0.0
  %2658 = vmatpush1.msra.mxu0 0.0
  %2659 = vmatprep.subr.mxu0 0.0
  %2660 = vmatpush1.msra.mxu0 0.0
  %2661 = vmatprep.subr.mxu0 0.0
  %2662 = vmatpush1.msra.mxu0 0.0
  %2663 = vmatprep.subr.mxu0 0.0
  %2664 = vmatpush1.msra.mxu0 0.0
  %2665 = vmatprep.subr.mxu0 0.0
  %2666 = vmatpush1.msra.mxu0 0.0
  %2667 = vmatprep.subr.mxu0 0.0
  %2668 = vmatpush1.msra.mxu0 0.0
  %2669 = vmatprep.subr.mxu0 0.0
  %2670 = vmatpush1.msra.mxu0 0.0
  %2671 = vmatprep.subr.mxu0 0.0
  %2672 = vmatpush1.msra.mxu0 0.0
  %2673 = vmatprep.subr.mxu0 0.0
  %2674 = vmatpush1.msra.mxu0 0.0
  %2675 = vmatprep.subr.mxu0 0.0
  %2676 = vmatpush1.msra.mxu0 0.0
  %2677 = vmatprep.subr.mxu0 0.0
  %2678 = vmatpush1.msra.mxu0 0.0
  %2679 = vmatprep.subr.mxu0 0.0
  %2680 = vmatpush1.msra.mxu0 0.0
  %2681 = vmatprep.subr.mxu0 0.0
  %2682 = vmatpush1.msra.mxu0 0.0
  %2683 = vmatprep.subr.mxu0 0.0
  %2684 = vmatpush1.msra.mxu0 0.0
  %2685 = vmatprep.subr.mxu0 0.0
  %2686 = vmatpush1.msra.mxu0 0.0
  %2687 = vmatprep.subr.mxu0 0.0
  %2688 = vmatpush1.msra.mxu0 0.0
  %2689 = vmatprep.subr.mxu0 0.0
  %2690 = vmatpush1.msra.mxu0 0.0
  %2691 = vmatprep.subr.mxu0 0.0
  %2692 = vmatpush1.msra.mxu0 0.0
  %2693 = vmatprep.subr.mxu0 0.0
  %2694 = vmatpush1.msra.mxu0 0.0
  %2695 = vmatprep.subr.mxu0 0.0
  %2696 = vmatpush1.msra.mxu0 0.0
  %2697 = vmatprep.subr.mxu0 0.0
  %2698 = vmatpush1.msra.mxu0 0.0
  %2699 = vmatprep.subr.mxu0 0.0
  %2700 = vmatpush1.msra.mxu0 0.0
  %2701 = vmatprep.subr.mxu0 0.0
  %2702 = vmatpush1.msra.mxu0 0.0
  %2703 = vmatprep.subr.mxu0 0.0
  %2704 = vmatpush1.msra.mxu0 0.0
  %2705 = vmatprep.mubr.f32.mxu0 0.0
  %2706 = vmatmul.mubr.f32.gmra.mrb[0].mxu0 %v2639
  %v2707 = vpop.f32.mrb[0].mxu0
  %v2708 = vadd.f32 0.0, %v2707
  %v2709 = vpop.f32.mrb[0].mxu0
  %2710 = vdwg.mxu0
  %v2711 = vadd.f32 %v2637, %v2708
  %v2712 = vmax.f32 %v2711, 0.0
  %2713 = vst.msk [vmem:[#allocation3 + $0xe8] sm:$0xff] %vm369, %v2712
  %2714 = vst.msk [vmem:[%s7] sm:$0xff] %vm369, %v2712
  %v2715 = vld [vmem:[#allocation3] sm:$0xff]
  %v2716 = vld [vmem:[#allocation3 + $0x8] sm:$0xff]
  %v2717 = vld [vmem:[#allocation3 + $0x10] sm:$0xff]
  %v2718 = vld [vmem:[#allocation3 + $0x18] sm:$0xff]
  %v2719 = vld [vmem:[#allocation3 + $0x20] sm:$0xff]
  %v2720 = vld [vmem:[#allocation3 + $0x28] sm:$0xff]
  %v2721 = vld [vmem:[#allocation3 + $0x30] sm:$0xff]
  %v2722 = vld [vmem:[#allocation3 + $0x38] sm:$0xff]
  %v2723 = vld [vmem:[#allocation3 + $0x40] sm:$0xff]
  %v2724 = vld [vmem:[#allocation3 + $0x48] sm:$0xff]
  %v2725 = vld [vmem:[#allocation3 + $0x50] sm:$0xff]
  %v2726 = vld [vmem:[#allocation3 + $0x58] sm:$0xff]
  %v2727 = vld [vmem:[#allocation3 + $0x60] sm:$0xff]
  %v2728 = vld [vmem:[#allocation3 + $0x68] sm:$0xff]
  %v2729 = vld [vmem:[#allocation3 + $0x70] sm:$0xff]
  %v2730 = vld [vmem:[#allocation3 + $0x78] sm:$0xff]
  %v2731 = vld [vmem:[#allocation3 + $0x80] sm:$0xff]
  %v2732 = vld [vmem:[#allocation3 + $0x88] sm:$0xff]
  %v2733 = vld [vmem:[#allocation3 + $0x90] sm:$0xff]
  %v2734 = vld [vmem:[#allocation3 + $0x98] sm:$0xff]
  %v2735 = vld [vmem:[#allocation3 + $0xa0] sm:$0xff]
  %v2736 = vld [vmem:[#allocation3 + $0xa8] sm:$0xff]
  %v2737 = vld [vmem:[#allocation3 + $0xb0] sm:$0xff]
  %v2738 = vld [vmem:[#allocation3 + $0xb8] sm:$0xff]
  %v2739 = vld [vmem:[#allocation3 + $0xc0] sm:$0xff]
  %v2740 = vld [vmem:[#allocation3 + $0xc8] sm:$0xff]
  %v2741 = vld [vmem:[#allocation3 + $0xd0] sm:$0xff]
  %v2742 = vld [vmem:[#allocation3 + $0xd8] sm:$0xff]
  %v2743 = vld [vmem:[#allocation3 + $0xe0] sm:$0xff]
  %v2744 = vld [vmem:[#allocation3 + $0xe8] sm:$0xff]
  %v2745 = vld [vmem:[%s4] sm:$0xff]
  %v2746 = vld [vmem:[%s4 + $0x8] sm:$0xff]
  %v2747 = vld [vmem:[%s4 + $0x10] sm:$0xff]
  %v2748 = vld [vmem:[%s4 + $0x18] sm:$0xff]
  %v2749 = vld [vmem:[%s5] sm:$0x1]
  %v2751 = vlaneseq
  %v2752 = vshrl.u32 %v2751, 7
  %v2753 = vsub.s32 0, %v2752
  %v2754 = vrot.slane %v2749, %v2753
  %v2757 = vsel %vm369, %v2715, 0
  %v2760 = vsel %vm369, %v2716, 0
  %v2763 = vsel %vm369, %v2717, 0
  %v2766 = vsel %vm369, %v2718, 0
  %v2769 = vsel %vm369, %v2719, 0
  %v2772 = vsel %vm369, %v2720, 0
  %v2775 = vsel %vm369, %v2721, 0
  %v2778 = vsel %vm369, %v2722, 0
  %v2781 = vsel %vm369, %v2723, 0
  %v2784 = vsel %vm369, %v2724, 0
  %v2787 = vsel %vm369, %v2725, 0
  %v2790 = vsel %vm369, %v2726, 0
  %v2793 = vsel %vm369, %v2727, 0
  %v2796 = vsel %vm369, %v2728, 0
  %v2799 = vsel %vm369, %v2729, 0
  %v2802 = vsel %vm369, %v2730, 0
  %v2805 = vsel %vm369, %v2731, 0
  %v2808 = vsel %vm369, %v2732, 0
  %v2811 = vsel %vm369, %v2733, 0
  %v2814 = vsel %vm369, %v2734, 0
  %v2817 = vsel %vm369, %v2735, 0
  %v2820 = vsel %vm369, %v2736, 0
  %v2823 = vsel %vm369, %v2737, 0
  %v2826 = vsel %vm369, %v2738, 0
  %v2829 = vsel %vm369, %v2739, 0
  %v2832 = vsel %vm369, %v2740, 0
  %v2835 = vsel %vm369, %v2741, 0
  %v2838 = vsel %vm369, %v2742, 0
  %v2841 = vsel %vm369, %v2743, 0
  %v2844 = vsel %vm369, %v2744, 0
  %2846 = vmatprep.subr.mxu0 0.0
  %2847 = vmatpush1.msra.mxu0 %v2745
  %2848 = vmatprep.subr.mxu0 0.0
  %2849 = vmatpush1.msra.mxu0 %v2746
  %2850 = vmatprep.subr.mxu0 0.0
  %2851 = vmatpush1.msra.mxu0 %v2747
  %2852 = vmatprep.subr.mxu0 0.0
  %2853 = vmatpush1.msra.mxu0 %v2748
  %2854 = vmatprep.subr.mxu0 0.0
  %2855 = vmatpush1.msra.mxu0 0.0
  %2856 = vmatprep.subr.mxu0 0.0
  %2857 = vmatpush1.msra.mxu0 0.0
  %2858 = vmatprep.subr.mxu0 0.0
  %2859 = vmatpush1.msra.mxu0 0.0
  %2860 = vmatprep.subr.mxu0 0.0
  %2861 = vmatpush1.msra.mxu0 0.0
  %2862 = vmatprep.subr.mxu0 0.0
  %2863 = vmatpush1.msra.mxu0 0.0
  %2864 = vmatprep.subr.mxu0 0.0
  %2865 = vmatpush1.msra.mxu0 0.0
  %2866 = vmatprep.subr.mxu0 0.0
  %2867 = vmatpush1.msra.mxu0 0.0
  %2868 = vmatprep.subr.mxu0 0.0
  %2869 = vmatpush1.msra.mxu0 0.0
  %2870 = vmatprep.subr.mxu0 0.0
  %2871 = vmatpush1.msra.mxu0 0.0
  %2872 = vmatprep.subr.mxu0 0.0
  %2873 = vmatpush1.msra.mxu0 0.0
  %2874 = vmatprep.subr.mxu0 0.0
  %2875 = vmatpush1.msra.mxu0 0.0
  %2876 = vmatprep.subr.mxu0 0.0
  %2877 = vmatpush1.msra.mxu0 0.0
  %2878 = vmatprep.subr.mxu0 0.0
  %2879 = vmatpush1.msra.mxu0 0.0
  %2880 = vmatprep.subr.mxu0 0.0
  %2881 = vmatpush1.msra.mxu0 0.0
  %2882 = vmatprep.subr.mxu0 0.0
  %2883 = vmatpush1.msra.mxu0 0.0
  %2884 = vmatprep.subr.mxu0 0.0
  %2885 = vmatpush1.msra.mxu0 0.0
  %2886 = vmatprep.subr.mxu0 0.0
  %2887 = vmatpush1.msra.mxu0 0.0
  %2888 = vmatprep.subr.mxu0 0.0
  %2889 = vmatpush1.msra.mxu0 0.0
  %2890 = vmatprep.subr.mxu0 0.0
  %2891 = vmatpush1.msra.mxu0 0.0
  %2892 = vmatprep.subr.mxu0 0.0
  %2893 = vmatpush1.msra.mxu0 0.0
  %2894 = vmatprep.subr.mxu0 0.0
  %2895 = vmatpush1.msra.mxu0 0.0
  %2896 = vmatprep.subr.mxu0 0.0
  %2897 = vmatpush1.msra.mxu0 0.0
  %2898 = vmatprep.subr.mxu0 0.0
  %2899 = vmatpush1.msra.mxu0 0.0
  %2900 = vmatprep.subr.mxu0 0.0
  %2901 = vmatpush1.msra.mxu0 0.0
  %2902 = vmatprep.subr.mxu0 0.0
  %2903 = vmatpush1.msra.mxu0 0.0
  %2904 = vmatprep.subr.mxu0 0.0
  %2905 = vmatpush1.msra.mxu0 0.0
  %2906 = vmatprep.subr.mxu0 0.0
  %2907 = vmatpush1.msra.mxu0 0.0
  %2908 = vmatprep.subr.mxu0 0.0
  %2909 = vmatpush1.msra.mxu0 0.0
  %2910 = vmatprep.mubr.f32.mxu0 0.0
  %2911 = vmatmul.mubr.f32.gmra.mrb[0].mxu0 %v2757
  %v2912 = vpop.f32.mrb[0].mxu0
  %v2913 = vadd.f32 %v2754, %v2912
  %v2914 = vpop.f32.mrb[0].mxu0
  %2915 = vmatprep.mubr.f32.mxu0 0.0
  %2916 = vmatmul.mubr.f32.gmra.mrb[0].mxu0 %v2760
  %v2917 = vpop.f32.mrb[0].mxu0
  %v2918 = vadd.f32 %v2754, %v2917
  %v2919 = vpop.f32.mrb[0].mxu0
  %2920 = vmatprep.mubr.f32.mxu0 0.0
  %2921 = vmatmul.mubr.f32.gmra.mrb[0].mxu0 %v2763
  %v2922 = vpop.f32.mrb[0].mxu0
  %v2923 = vadd.f32 %v2754, %v2922
  %v2924 = vpop.f32.mrb[0].mxu0
  %2925 = vmatprep.mubr.f32.mxu0 0.0
  %2926 = vmatmul.mubr.f32.gmra.mrb[0].mxu0 %v2766
  %v2927 = vpop.f32.mrb[0].mxu0
  %v2928 = vadd.f32 %v2754, %v2927
  %v2929 = vpop.f32.mrb[0].mxu0
  %2930 = vmatprep.mubr.f32.mxu0 0.0
  %2931 = vmatmul.mubr.f32.gmra.mrb[0].mxu0 %v2769
  %v2932 = vpop.f32.mrb[0].mxu0
  %v2933 = vadd.f32 %v2754, %v2932
  %v2934 = vpop.f32.mrb[0].mxu0
  %2935 = vmatprep.mubr.f32.mxu0 0.0
  %2936 = vmatmul.mubr.f32.gmra.mrb[0].mxu0 %v2772
  %v2937 = vpop.f32.mrb[0].mxu0
  %v2938 = vadd.f32 %v2754, %v2937
  %v2939 = vpop.f32.mrb[0].mxu0
  %2940 = vmatprep.mubr.f32.mxu0 0.0
  %2941 = vmatmul.mubr.f32.gmra.mrb[0].mxu0 %v2775
  %v2942 = vpop.f32.mrb[0].mxu0
  %v2943 = vadd.f32 %v2754, %v2942
  %v2944 = vpop.f32.mrb[0].mxu0
  %2945 = vmatprep.mubr.f32.mxu0 0.0
  %2946 = vmatmul.mubr.f32.gmra.mrb[0].mxu0 %v2778
  %v2947 = vpop.f32.mrb[0].mxu0
  %v2948 = vadd.f32 %v2754, %v2947
  %v2949 = vpop.f32.mrb[0].mxu0
  %2950 = vmatprep.mubr.f32.mxu0 0.0
  %2951 = vmatmul.mubr.f32.gmra.mrb[0].mxu0 %v2781
  %v2952 = vpop.f32.mrb[0].mxu0
  %v2953 = vadd.f32 %v2754, %v2952
  %v2954 = vpop.f32.mrb[0].mxu0
  %2955 = vmatprep.mubr.f32.mxu0 0.0
  %2956 = vmatmul.mubr.f32.gmra.mrb[0].mxu0 %v2784
  %v2957 = vpop.f32.mrb[0].mxu0
  %v2958 = vadd.f32 %v2754, %v2957
  %v2959 = vpop.f32.mrb[0].mxu0
  %2960 = vmatprep.mubr.f32.mxu0 0.0
  %2961 = vmatmul.mubr.f32.gmra.mrb[0].mxu0 %v2787
  %v2962 = vpop.f32.mrb[0].mxu0
  %v2963 = vadd.f32 %v2754, %v2962
  %v2964 = vpop.f32.mrb[0].mxu0
  %2965 = vmatprep.mubr.f32.mxu0 0.0
  %2966 = vmatmul.mubr.f32.gmra.mrb[0].mxu0 %v2790
  %v2967 = vpop.f32.mrb[0].mxu0
  %v2968 = vadd.f32 %v2754, %v2967
  %v2969 = vpop.f32.mrb[0].mxu0
  %2970 = vmatprep.mubr.f32.mxu0 0.0
  %2971 = vmatmul.mubr.f32.gmra.mrb[0].mxu0 %v2793
  %v2972 = vpop.f32.mrb[0].mxu0
  %v2973 = vadd.f32 %v2754, %v2972
  %v2974 = vpop.f32.mrb[0].mxu0
  %2975 = vmatprep.mubr.f32.mxu0 0.0
  %2976 = vmatmul.mubr.f32.gmra.mrb[0].mxu0 %v2796
  %v2977 = vpop.f32.mrb[0].mxu0
  %v2978 = vadd.f32 %v2754, %v2977
  %v2979 = vpop.f32.mrb[0].mxu0
  %2980 = vmatprep.mubr.f32.mxu0 0.0
  %2981 = vmatmul.mubr.f32.gmra.mrb[0].mxu0 %v2799
  %v2982 = vpop.f32.mrb[0].mxu0
  %v2983 = vadd.f32 %v2754, %v2982
  %v2984 = vpop.f32.mrb[0].mxu0
  %2985 = vmatprep.mubr.f32.mxu0 0.0
  %2986 = vmatmul.mubr.f32.gmra.mrb[0].mxu0 %v2802
  %v2987 = vpop.f32.mrb[0].mxu0
  %v2988 = vadd.f32 %v2754, %v2987
  %v2989 = vpop.f32.mrb[0].mxu0
  %2990 = vmatprep.mubr.f32.mxu0 0.0
  %2991 = vmatmul.mubr.f32.gmra.mrb[0].mxu0 %v2805
  %v2992 = vpop.f32.mrb[0].mxu0
  %v2993 = vadd.f32 %v2754, %v2992
  %v2994 = vpop.f32.mrb[0].mxu0
  %2995 = vmatprep.mubr.f32.mxu0 0.0
  %2996 = vmatmul.mubr.f32.gmra.mrb[0].mxu0 %v2808
  %v2997 = vpop.f32.mrb[0].mxu0
  %v2998 = vadd.f32 %v2754, %v2997
  %v2999 = vpop.f32.mrb[0].mxu0
  %3000 = vmatprep.mubr.f32.mxu0 0.0
  %3001 = vmatmul.mubr.f32.gmra.mrb[0].mxu0 %v2811
  %v3002 = vpop.f32.mrb[0].mxu0
  %v3003 = vadd.f32 %v2754, %v3002
  %v3004 = vpop.f32.mrb[0].mxu0
  %3005 = vmatprep.mubr.f32.mxu0 0.0
  %3006 = vmatmul.mubr.f32.gmra.mrb[0].mxu0 %v2814
  %v3007 = vpop.f32.mrb[0].mxu0
  %v3008 = vadd.f32 %v2754, %v3007
  %v3009 = vpop.f32.mrb[0].mxu0
  %3010 = vmatprep.mubr.f32.mxu0 0.0
  %3011 = vmatmul.mubr.f32.gmra.mrb[0].mxu0 %v2817
  %v3012 = vpop.f32.mrb[0].mxu0
  %v3013 = vadd.f32 %v2754, %v3012
  %v3014 = vpop.f32.mrb[0].mxu0
  %3015 = vmatprep.mubr.f32.mxu0 0.0
  %3016 = vmatmul.mubr.f32.gmra.mrb[0].mxu0 %v2820
  %v3017 = vpop.f32.mrb[0].mxu0
  %v3018 = vadd.f32 %v2754, %v3017
  %v3019 = vpop.f32.mrb[0].mxu0
  %3020 = vmatprep.mubr.f32.mxu0 0.0
  %3021 = vmatmul.mubr.f32.gmra.mrb[0].mxu0 %v2823
  %v3022 = vpop.f32.mrb[0].mxu0
  %v3023 = vadd.f32 %v2754, %v3022
  %v3024 = vpop.f32.mrb[0].mxu0
  %3025 = vmatprep.mubr.f32.mxu0 0.0
  %3026 = vmatmul.mubr.f32.gmra.mrb[0].mxu0 %v2826
  %v3027 = vpop.f32.mrb[0].mxu0
  %v3028 = vadd.f32 %v2754, %v3027
  %v3029 = vpop.f32.mrb[0].mxu0
  %3030 = vmatprep.mubr.f32.mxu0 0.0
  %3031 = vmatmul.mubr.f32.gmra.mrb[0].mxu0 %v2829
  %v3032 = vpop.f32.mrb[0].mxu0
  %v3033 = vadd.f32 %v2754, %v3032
  %v3034 = vpop.f32.mrb[0].mxu0
  %3035 = vmatprep.mubr.f32.mxu0 0.0
  %3036 = vmatmul.mubr.f32.gmra.mrb[0].mxu0 %v2832
  %v3037 = vpop.f32.mrb[0].mxu0
  %v3038 = vadd.f32 %v2754, %v3037
  %v3039 = vpop.f32.mrb[0].mxu0
  %3040 = vmatprep.mubr.f32.mxu0 0.0
  %3041 = vmatmul.mubr.f32.gmra.mrb[0].mxu0 %v2835
  %v3042 = vpop.f32.mrb[0].mxu0
  %v3043 = vadd.f32 %v2754, %v3042
  %v3044 = vpop.f32.mrb[0].mxu0
  %3045 = vmatprep.mubr.f32.mxu0 0.0
  %3046 = vmatmul.mubr.f32.gmra.mrb[0].mxu0 %v2838
  %v3047 = vpop.f32.mrb[0].mxu0
  %v3048 = vadd.f32 %v2754, %v3047
  %v3049 = vpop.f32.mrb[0].mxu0
  %3050 = vmatprep.mubr.f32.mxu0 0.0
  %3051 = vmatmul.mubr.f32.gmra.mrb[0].mxu0 %v2841
  %v3052 = vpop.f32.mrb[0].mxu0
  %v3053 = vadd.f32 %v2754, %v3052
  %v3054 = vpop.f32.mrb[0].mxu0
  %3055 = vmatprep.mubr.f32.mxu0 0.0
  %3056 = vmatmul.mubr.f32.gmra.mrb[0].mxu0 %v2844
  %v3057 = vpop.f32.mrb[0].mxu0
  %v3058 = vadd.f32 %v2754, %v3057
  %v3059 = vpop.f32.mrb[0].mxu0
  %3060 = vdwg.mxu0
  %vm3061 = vcmask 130048
  %v3062 = vsel %vm3061, %v2913, -inf
  %3063 = vmax.xlane.f32.xlu0 %v3062
  %v3064 = vpop.xlane.xlu0 %3063
  %v3065 = vsel %vm3061, %v2918, -inf
  %3066 = vmax.xlane.f32.xlu0 %v3065
  %v3067 = vpop.xlane.xlu0 %3066
  %v3068 = vsel %vm3061, %v2923, -inf
  %3069 = vmax.xlane.f32.xlu0 %v3068
  %v3070 = vpop.xlane.xlu0 %3069
  %v3071 = vsel %vm3061, %v2928, -inf
  %3072 = vmax.xlane.f32.xlu0 %v3071
  %v3073 = vpop.xlane.xlu0 %3072
  %v3074 = vsel %vm3061, %v2933, -inf
  %3075 = vmax.xlane.f32.xlu0 %v3074
  %v3076 = vpop.xlane.xlu0 %3075
  %v3077 = vsel %vm3061, %v2938, -inf
  %3078 = vmax.xlane.f32.xlu0 %v3077
  %v3079 = vpop.xlane.xlu0 %3078
  %v3080 = vsel %vm3061, %v2943, -inf
  %3081 = vmax.xlane.f32.xlu0 %v3080
  %v3082 = vpop.xlane.xlu0 %3081
  %v3083 = vsel %vm3061, %v2948, -inf
  %3084 = vmax.xlane.f32.xlu0 %v3083
  %v3085 = vpop.xlane.xlu0 %3084
  %v3086 = vsel %vm3061, %v2953, -inf
  %3087 = vmax.xlane.f32.xlu0 %v3086
  %v3088 = vpop.xlane.xlu0 %3087
  %v3089 = vsel %vm3061, %v2958, -inf
  %3090 = vmax.xlane.f32.xlu0 %v3089
  %v3091 = vpop.xlane.xlu0 %3090
  %v3092 = vsel %vm3061, %v2963, -inf
  %3093 = vmax.xlane.f32.xlu0 %v3092
  %v3094 = vpop.xlane.xlu0 %3093
  %v3095 = vsel %vm3061, %v2968, -inf
  %3096 = vmax.xlane.f32.xlu0 %v3095
  %v3097 = vpop.xlane.xlu0 %3096
  %v3098 = vsel %vm3061, %v2973, -inf
  %3099 = vmax.xlane.f32.xlu0 %v3098
  %v3100 = vpop.xlane.xlu0 %3099
  %v3101 = vsel %vm3061, %v2978, -inf
  %3102 = vmax.xlane.f32.xlu0 %v3101
  %v3103 = vpop.xlane.xlu0 %3102
  %v3104 = vsel %vm3061, %v2983, -inf
  %3105 = vmax.xlane.f32.xlu0 %v3104
  %v3106 = vpop.xlane.xlu0 %3105
  %v3107 = vsel %vm3061, %v2988, -inf
  %3108 = vmax.xlane.f32.xlu0 %v3107
  %v3109 = vpop.xlane.xlu0 %3108
  %v3110 = vsel %vm3061, %v2993, -inf
  %3111 = vmax.xlane.f32.xlu0 %v3110
  %v3112 = vpop.xlane.xlu0 %3111
  %v3113 = vsel %vm3061, %v2998, -inf
  %3114 = vmax.xlane.f32.xlu0 %v3113
  %v3115 = vpop.xlane.xlu0 %3114
  %v3116 = vsel %vm3061, %v3003, -inf
  %3117 = vmax.xlane.f32.xlu0 %v3116
  %v3118 = vpop.xlane.xlu0 %3117
  %v3119 = vsel %vm3061, %v3008, -inf
  %3120 = vmax.xlane.f32.xlu0 %v3119
  %v3121 = vpop.xlane.xlu0 %3120
  %v3122 = vsel %vm3061, %v3013, -inf
  %3123 = vmax.xlane.f32.xlu0 %v3122
  %v3124 = vpop.xlane.xlu0 %3123
  %v3125 = vsel %vm3061, %v3018, -inf
  %3126 = vmax.xlane.f32.xlu0 %v3125
  %v3127 = vpop.xlane.xlu0 %3126
  %v3128 = vsel %vm3061, %v3023, -inf
  %3129 = vmax.xlane.f32.xlu0 %v3128
  %v3130 = vpop.xlane.xlu0 %3129
  %v3131 = vsel %vm3061, %v3028, -inf
  %3132 = vmax.xlane.f32.xlu0 %v3131
  %v3133 = vpop.xlane.xlu0 %3132
  %v3134 = vsel %vm3061, %v3033, -inf
  %3135 = vmax.xlane.f32.xlu0 %v3134
  %v3136 = vpop.xlane.xlu0 %3135
  %v3137 = vsel %vm3061, %v3038, -inf
  %3138 = vmax.xlane.f32.xlu0 %v3137
  %v3139 = vpop.xlane.xlu0 %3138
  %v3140 = vsel %vm3061, %v3043, -inf
  %3141 = vmax.xlane.f32.xlu0 %v3140
  %v3142 = vpop.xlane.xlu0 %3141
  %v3143 = vsel %vm3061, %v3048, -inf
  %3144 = vmax.xlane.f32.xlu0 %v3143
  %v3145 = vpop.xlane.xlu0 %3144
  %v3146 = vsel %vm3061, %v3053, -inf
  %3147 = vmax.xlane.f32.xlu0 %v3146
  %v3148 = vpop.xlane.xlu0 %3147
  %v3149 = vsel %vm3061, %v3058, -inf
  %3150 = vmax.xlane.f32.xlu0 %v3149
  %v3151 = vpop.xlane.xlu0 %3150
  %v3152 = vsub.f32 %v2913, %v3064
  %v3153 = vsub.f32 %v2918, %v3067
  %v3154 = vsub.f32 %v2923, %v3070
  %v3155 = vsub.f32 %v2928, %v3073
  %v3156 = vsub.f32 %v2933, %v3076
  %v3157 = vsub.f32 %v2938, %v3079
  %v3158 = vsub.f32 %v2943, %v3082
  %v3159 = vsub.f32 %v2948, %v3085
  %v3160 = vsub.f32 %v2953, %v3088
  %v3161 = vsub.f32 %v2958, %v3091
  %v3162 = vsub.f32 %v2963, %v3094
  %v3163 = vsub.f32 %v2968, %v3097
  %v3164 = vsub.f32 %v2973, %v3100
  %v3165 = vsub.f32 %v2978, %v3103
  %v3166 = vsub.f32 %v2983, %v3106
  %v3167 = vsub.f32 %v2988, %v3109
  %v3168 = vsub.f32 %v2993, %v3112
  %v3169 = vsub.f32 %v2998, %v3115
  %v3170 = vsub.f32 %v3003, %v3118
  %v3171 = vsub.f32 %v3008, %v3121
  %v3172 = vsub.f32 %v3013, %v3124
  %v3173 = vsub.f32 %v3018, %v3127
  %v3174 = vsub.f32 %v3023, %v3130
  %v3175 = vsub.f32 %v3028, %v3133
  %v3176 = vsub.f32 %v3033, %v3136
  %v3177 = vsub.f32 %v3038, %v3139
  %v3178 = vsub.f32 %v3043, %v3142
  %v3179 = vsub.f32 %v3048, %v3145
  %v3180 = vsub.f32 %v3053, %v3148
  %v3181 = vsub.f32 %v3058, %v3151
  %v3182 = vmul.f32 %v3152, 1.442695
  %v3183 = vpow.pop %v3182
  %v3184 = vmul.f32 %v3153, 1.442695
  %v3185 = vpow.pop %v3184
  %v3186 = vmul.f32 %v3154, 1.442695
  %v3187 = vpow.pop %v3186
  %v3188 = vmul.f32 %v3155, 1.442695
  %v3189 = vpow.pop %v3188
  %v3190 = vmul.f32 %v3156, 1.442695
  %v3191 = vpow.pop %v3190
  %v3192 = vmul.f32 %v3157, 1.442695
  %v3193 = vpow.pop %v3192
  %v3194 = vmul.f32 %v3158, 1.442695
  %v3195 = vpow.pop %v3194
  %v3196 = vmul.f32 %v3159, 1.442695
  %v3197 = vpow.pop %v3196
  %v3198 = vmul.f32 %v3160, 1.442695
  %v3199 = vpow.pop %v3198
  %v3200 = vmul.f32 %v3161, 1.442695
  %v3201 = vpow.pop %v3200
  %v3202 = vmul.f32 %v3162, 1.442695
  %v3203 = vpow.pop %v3202
  %v3204 = vmul.f32 %v3163, 1.442695
  %v3205 = vpow.pop %v3204
  %v3206 = vmul.f32 %v3164, 1.442695
  %v3207 = vpow.pop %v3206
  %v3208 = vmul.f32 %v3165, 1.442695
  %v3209 = vpow.pop %v3208
  %v3210 = vmul.f32 %v3166, 1.442695
  %v3211 = vpow.pop %v3210
  %v3212 = vmul.f32 %v3167, 1.442695
  %v3213 = vpow.pop %v3212
  %v3214 = vmul.f32 %v3168, 1.442695
  %v3215 = vpow.pop %v3214
  %v3216 = vmul.f32 %v3169, 1.442695
  %v3217 = vpow.pop %v3216
  %v3218 = vmul.f32 %v3170, 1.442695
  %v3219 = vpow.pop %v3218
  %v3220 = vmul.f32 %v3171, 1.442695
  %v3221 = vpow.pop %v3220
  %v3222 = vmul.f32 %v3172, 1.442695
  %v3223 = vpow.pop %v3222
  %v3224 = vmul.f32 %v3173, 1.442695
  %v3225 = vpow.pop %v3224
  %v3226 = vmul.f32 %v3174, 1.442695
  %v3227 = vpow.pop %v3226
  %v3228 = vmul.f32 %v3175, 1.442695
  %v3229 = vpow.pop %v3228
  %v3230 = vmul.f32 %v3176, 1.442695
  %v3231 = vpow.pop %v3230
  %v3232 = vmul.f32 %v3177, 1.442695
  %v3233 = vpow.pop %v3232
  %v3234 = vmul.f32 %v3178, 1.442695
  %v3235 = vpow.pop %v3234
  %v3236 = vmul.f32 %v3179, 1.442695
  %v3237 = vpow.pop %v3236
  %v3238 = vmul.f32 %v3180, 1.442695
  %v3239 = vpow.pop %v3238
  %v3240 = vmul.f32 %v3181, 1.442695
  %v3241 = vpow.pop %v3240
  %v3242 = vsel %vm3061, %v3183, 0.0
  %3243 = vadd.xlane.f32.xlu0 %v3242
  %v3244 = vpop.xlane.xlu0 %3243
  %v3245 = vsel %vm3061, %v3185, 0.0
  %3246 = vadd.xlane.f32.xlu0 %v3245
  %v3247 = vpop.xlane.xlu0 %3246
  %v3248 = vsel %vm3061, %v3187, 0.0
  %3249 = vadd.xlane.f32.xlu0 %v3248
  %v3250 = vpop.xlane.xlu0 %3249
  %v3251 = vsel %vm3061, %v3189, 0.0
  %3252 = vadd.xlane.f32.xlu0 %v3251
  %v3253 = vpop.xlane.xlu0 %3252
  %v3254 = vsel %vm3061, %v3191, 0.0
  %3255 = vadd.xlane.f32.xlu0 %v3254
  %v3256 = vpop.xlane.xlu0 %3255
  %v3257 = vsel %vm3061, %v3193, 0.0
  %3258 = vadd.xlane.f32.xlu0 %v3257
  %v3259 = vpop.xlane.xlu0 %3258
  %v3260 = vsel %vm3061, %v3195, 0.0
  %3261 = vadd.xlane.f32.xlu0 %v3260
  %v3262 = vpop.xlane.xlu0 %3261
  %v3263 = vsel %vm3061, %v3197, 0.0
  %3264 = vadd.xlane.f32.xlu0 %v3263
  %v3265 = vpop.xlane.xlu0 %3264
  %v3266 = vsel %vm3061, %v3199, 0.0
  %3267 = vadd.xlane.f32.xlu0 %v3266
  %v3268 = vpop.xlane.xlu0 %3267
  %v3269 = vsel %vm3061, %v3201, 0.0
  %3270 = vadd.xlane.f32.xlu0 %v3269
  %v3271 = vpop.xlane.xlu0 %3270
  %v3272 = vsel %vm3061, %v3203, 0.0
  %3273 = vadd.xlane.f32.xlu0 %v3272
  %v3274 = vpop.xlane.xlu0 %3273
  %v3275 = vsel %vm3061, %v3205, 0.0
  %3276 = vadd.xlane.f32.xlu0 %v3275
  %v3277 = vpop.xlane.xlu0 %3276
  %v3278 = vsel %vm3061, %v3207, 0.0
  %3279 = vadd.xlane.f32.xlu0 %v3278
  %v3280 = vpop.xlane.xlu0 %3279
  %v3281 = vsel %vm3061, %v3209, 0.0
  %3282 = vadd.xlane.f32.xlu0 %v3281
  %v3283 = vpop.xlane.xlu0 %3282
  %v3284 = vsel %vm3061, %v3211, 0.0
  %3285 = vadd.xlane.f32.xlu0 %v3284
  %v3286 = vpop.xlane.xlu0 %3285
  %v3287 = vsel %vm3061, %v3213, 0.0
  %3288 = vadd.xlane.f32.xlu0 %v3287
  %v3289 = vpop.xlane.xlu0 %3288
  %v3290 = vsel %vm3061, %v3215, 0.0
  %3291 = vadd.xlane.f32.xlu0 %v3290
  %v3292 = vpop.xlane.xlu0 %3291
  %v3293 = vsel %vm3061, %v3217, 0.0
  %3294 = vadd.xlane.f32.xlu0 %v3293
  %v3295 = vpop.xlane.xlu0 %3294
  %v3296 = vsel %vm3061, %v3219, 0.0
  %3297 = vadd.xlane.f32.xlu0 %v3296
  %v3298 = vpop.xlane.xlu0 %3297
  %v3299 = vsel %vm3061, %v3221, 0.0
  %3300 = vadd.xlane.f32.xlu0 %v3299
  %v3301 = vpop.xlane.xlu0 %3300
  %v3302 = vsel %vm3061, %v3223, 0.0
  %3303 = vadd.xlane.f32.xlu0 %v3302
  %v3304 = vpop.xlane.xlu0 %3303
  %v3305 = vsel %vm3061, %v3225, 0.0
  %3306 = vadd.xlane.f32.xlu0 %v3305
  %v3307 = vpop.xlane.xlu0 %3306
  %v3308 = vsel %vm3061, %v3227, 0.0
  %3309 = vadd.xlane.f32.xlu0 %v3308
  %v3310 = vpop.xlane.xlu0 %3309
  %v3311 = vsel %vm3061, %v3229, 0.0
  %3312 = vadd.xlane.f32.xlu0 %v3311
  %v3313 = vpop.xlane.xlu0 %3312
  %v3314 = vsel %vm3061, %v3231, 0.0
  %3315 = vadd.xlane.f32.xlu0 %v3314
  %v3316 = vpop.xlane.xlu0 %3315
  %v3317 = vsel %vm3061, %v3233, 0.0
  %3318 = vadd.xlane.f32.xlu0 %v3317
  %v3319 = vpop.xlane.xlu0 %3318
  %v3320 = vsel %vm3061, %v3235, 0.0
  %3321 = vadd.xlane.f32.xlu0 %v3320
  %v3322 = vpop.xlane.xlu0 %3321
  %v3323 = vsel %vm3061, %v3237, 0.0
  %3324 = vadd.xlane.f32.xlu0 %v3323
  %v3325 = vpop.xlane.xlu0 %3324
  %v3326 = vsel %vm3061, %v3239, 0.0
  %3327 = vadd.xlane.f32.xlu0 %v3326
  %v3328 = vpop.xlane.xlu0 %3327
  %v3329 = vsel %vm3061, %v3241, 0.0
  %3330 = vadd.xlane.f32.xlu0 %v3329
  %v3331 = vpop.xlane.xlu0 %3330
  %v3332 = vlog2.pop %v3244
  %v3333 = vmul.f32 %v3332, 0.6931472
  %v3334 = vlog2.pop %v3247
  %v3335 = vmul.f32 %v3334, 0.6931472
  %v3336 = vlog2.pop %v3250
  %v3337 = vmul.f32 %v3336, 0.6931472
  %v3338 = vlog2.pop %v3253
  %v3339 = vmul.f32 %v3338, 0.6931472
  %v3340 = vlog2.pop %v3256
  %v3341 = vmul.f32 %v3340, 0.6931472
  %v3342 = vlog2.pop %v3259
  %v3343 = vmul.f32 %v3342, 0.6931472
  %v3344 = vlog2.pop %v3262
  %v3345 = vmul.f32 %v3344, 0.6931472
  %v3346 = vlog2.pop %v3265
  %v3347 = vmul.f32 %v3346, 0.6931472
  %v3348 = vlog2.pop %v3268
  %v3349 = vmul.f32 %v3348, 0.6931472
  %v3350 = vlog2.pop %v3271
  %v3351 = vmul.f32 %v3350, 0.6931472
  %v3352 = vlog2.pop %v3274
  %v3353 = vmul.f32 %v3352, 0.6931472
  %v3354 = vlog2.pop %v3277
  %v3355 = vmul.f32 %v3354, 0.6931472
  %v3356 = vlog2.pop %v3280
  %v3357 = vmul.f32 %v3356, 0.6931472
  %v3358 = vlog2.pop %v3283
  %v3359 = vmul.f32 %v3358, 0.6931472
  %v3360 = vlog2.pop %v3286
  %v3361 = vmul.f32 %v3360, 0.6931472
  %v3362 = vlog2.pop %v3289
  %v3363 = vmul.f32 %v3362, 0.6931472
  %v3364 = vlog2.pop %v3292
  %v3365 = vmul.f32 %v3364, 0.6931472
  %v3366 = vlog2.pop %v3295
  %v3367 = vmul.f32 %v3366, 0.6931472
  %v3368 = vlog2.pop %v3298
  %v3369 = vmul.f32 %v3368, 0.6931472
  %v3370 = vlog2.pop %v3301
  %v3371 = vmul.f32 %v3370, 0.6931472
  %v3372 = vlog2.pop %v3304
  %v3373 = vmul.f32 %v3372, 0.6931472
  %v3374 = vlog2.pop %v3307
  %v3375 = vmul.f32 %v3374, 0.6931472
  %v3376 = vlog2.pop %v3310
  %v3377 = vmul.f32 %v3376, 0.6931472
  %v3378 = vlog2.pop %v3313
  %v3379 = vmul.f32 %v3378, 0.6931472
  %v3380 = vlog2.pop %v3316
  %v3381 = vmul.f32 %v3380, 0.6931472
  %v3382 = vlog2.pop %v3319
  %v3383 = vmul.f32 %v3382, 0.6931472
  %v3384 = vlog2.pop %v3322
  %v3385 = vmul.f32 %v3384, 0.6931472
  %v3386 = vlog2.pop %v3325
  %v3387 = vmul.f32 %v3386, 0.6931472
  %v3388 = vlog2.pop %v3328
  %v3389 = vmul.f32 %v3388, 0.6931472
  %v3390 = vlog2.pop %v3331
  %v3391 = vmul.f32 %v3390, 0.6931472
  %v3392 = vadd.f32 %v3333, %v3064
  %v3393 = vadd.f32 %v3335, %v3067
  %v3394 = vadd.f32 %v3337, %v3070
  %v3395 = vadd.f32 %v3339, %v3073
  %v3396 = vadd.f32 %v3341, %v3076
  %v3397 = vadd.f32 %v3343, %v3079
  %v3398 = vadd.f32 %v3345, %v3082
  %v3399 = vadd.f32 %v3347, %v3085
  %v3400 = vadd.f32 %v3349, %v3088
  %v3401 = vadd.f32 %v3351, %v3091
  %v3402 = vadd.f32 %v3353, %v3094
  %v3403 = vadd.f32 %v3355, %v3097
  %v3404 = vadd.f32 %v3357, %v3100
  %v3405 = vadd.f32 %v3359, %v3103
  %v3406 = vadd.f32 %v3361, %v3106
  %v3407 = vadd.f32 %v3363, %v3109
  %v3408 = vadd.f32 %v3365, %v3112
  %v3409 = vadd.f32 %v3367, %v3115
  %v3410 = vadd.f32 %v3369, %v3118
  %v3411 = vadd.f32 %v3371, %v3121
  %v3412 = vadd.f32 %v3373, %v3124
  %v3413 = vadd.f32 %v3375, %v3127
  %v3414 = vadd.f32 %v3377, %v3130
  %v3415 = vadd.f32 %v3379, %v3133
  %v3416 = vadd.f32 %v3381, %v3136
  %v3417 = vadd.f32 %v3383, %v3139
  %v3418 = vadd.f32 %v3385, %v3142
  %v3419 = vadd.f32 %v3387, %v3145
  %v3420 = vadd.f32 %v3389, %v3148
  %v3421 = vadd.f32 %v3391, %v3151
  %v3422 = vsub.f32 %v2913, %v3392
  %v3423 = vsub.f32 %v2918, %v3393
  %v3424 = vsub.f32 %v2923, %v3394
  %v3425 = vsub.f32 %v2928, %v3395
  %v3426 = vsub.f32 %v2933, %v3396
  %v3427 = vsub.f32 %v2938, %v3397
  %v3428 = vsub.f32 %v2943, %v3398
  %v3429 = vsub.f32 %v2948, %v3399
  %v3430 = vsub.f32 %v2953, %v3400
  %v3431 = vsub.f32 %v2958, %v3401
  %v3432 = vsub.f32 %v2963, %v3402
  %v3433 = vsub.f32 %v2968, %v3403
  %v3434 = vsub.f32 %v2973, %v3404
  %v3435 = vsub.f32 %v2978, %v3405
  %v3436 = vsub.f32 %v2983, %v3406
  %v3437 = vsub.f32 %v2988, %v3407
  %v3438 = vsub.f32 %v2993, %v3408
  %v3439 = vsub.f32 %v2998, %v3409
  %v3440 = vsub.f32 %v3003, %v3410
  %v3441 = vsub.f32 %v3008, %v3411
  %v3442 = vsub.f32 %v3013, %v3412
  %v3443 = vsub.f32 %v3018, %v3413
  %v3444 = vsub.f32 %v3023, %v3414
  %v3445 = vsub.f32 %v3028, %v3415
  %v3446 = vsub.f32 %v3033, %v3416
  %v3447 = vsub.f32 %v3038, %v3417
  %v3448 = vsub.f32 %v3043, %v3418
  %v3449 = vsub.f32 %v3048, %v3419
  %v3450 = vsub.f32 %v3053, %v3420
  %v3451 = vsub.f32 %v3058, %v3421
  %3452 = vst.msk [vmem:[%s6] sm:$0xff] %vm3061, %v3422
  %3453 = vst.msk [vmem:[%s6 + $0x8] sm:$0xff] %vm3061, %v3423
  %3454 = vst.msk [vmem:[%s6 + $0x10] sm:$0xff] %vm3061, %v3424
  %3455 = vst.msk [vmem:[%s6 + $0x18] sm:$0xff] %vm3061, %v3425
  %3456 = vst.msk [vmem:[%s6 + $0x20] sm:$0xff] %vm3061, %v3426
  %3457 = vst.msk [vmem:[%s6 + $0x28] sm:$0xff] %vm3061, %v3427
  %3458 = vst.msk [vmem:[%s6 + $0x30] sm:$0xff] %vm3061, %v3428
  %3459 = vst.msk [vmem:[%s6 + $0x38] sm:$0xff] %vm3061, %v3429
  %3460 = vst.msk [vmem:[%s6 + $0x40] sm:$0xff] %vm3061, %v3430
  %3461 = vst.msk [vmem:[%s6 + $0x48] sm:$0xff] %vm3061, %v3431
  %3462 = vst.msk [vmem:[%s6 + $0x50] sm:$0xff] %vm3061, %v3432
  %3463 = vst.msk [vmem:[%s6 + $0x58] sm:$0xff] %vm3061, %v3433
  %3464 = vst.msk [vmem:[%s6 + $0x60] sm:$0xff] %vm3061, %v3434
  %3465 = vst.msk [vmem:[%s6 + $0x68] sm:$0xff] %vm3061, %v3435
  %3466 = vst.msk [vmem:[%s6 + $0x70] sm:$0xff] %vm3061, %v3436
  %3467 = vst.msk [vmem:[%s6 + $0x78] sm:$0xff] %vm3061, %v3437
  %3468 = vst.msk [vmem:[%s6 + $0x80] sm:$0xff] %vm3061, %v3438
  %3469 = vst.msk [vmem:[%s6 + $0x88] sm:$0xff] %vm3061, %v3439
  %3470 = vst.msk [vmem:[%s6 + $0x90] sm:$0xff] %vm3061, %v3440
  %3471 = vst.msk [vmem:[%s6 + $0x98] sm:$0xff] %vm3061, %v3441
  %3472 = vst.msk [vmem:[%s6 + $0xa0] sm:$0xff] %vm3061, %v3442
  %3473 = vst.msk [vmem:[%s6 + $0xa8] sm:$0xff] %vm3061, %v3443
  %3474 = vst.msk [vmem:[%s6 + $0xb0] sm:$0xff] %vm3061, %v3444
  %3475 = vst.msk [vmem:[%s6 + $0xb8] sm:$0xff] %vm3061, %v3445
  %3476 = vst.msk [vmem:[%s6 + $0xc0] sm:$0xff] %vm3061, %v3446
  %3477 = vst.msk [vmem:[%s6 + $0xc8] sm:$0xff] %vm3061, %v3447
  %3478 = vst.msk [vmem:[%s6 + $0xd0] sm:$0xff] %vm3061, %v3448
  %3479 = vst.msk [vmem:[%s6 + $0xd8] sm:$0xff] %vm3061, %v3449
  %3480 = vst.msk [vmem:[%s6 + $0xe0] sm:$0xff] %vm3061, %v3450
  %3481 = vst.msk [vmem:[%s6 + $0xe8] sm:$0xff] %vm3061, %v3451
  // Predicated region
  $region26: #{rnn_forward.1} parent=0 // pred_check
    _
  $region27: #{rnn_forward.1} parent=0 // pred_check_branch
    %3483 = sbr.rel (0) target = $region29
  $region28: #{rnn_forward.1} parent=0 // pred_region
    _
  $region29: #{rnn_forward.1} parent=0 // pred_fallthru
    _
  // Predicated region
  $region30: #{rnn_forward.1} parent=0 // pred_check
    _
  $region31: #{rnn_forward.1} parent=0 // pred_check_branch
    %3485 = sbr.rel (0) target = $region33
  $region32: #{rnn_forward.1} parent=0 // pred_region
    _
  $region33: #{rnn_forward.1} parent=0 // pred_fallthru
    _
  // Predicated region
  $region34: #{rnn_forward.1} parent=0 // pred_check
    _
  $region35: #{rnn_forward.1} parent=0 // pred_check_branch
    %3487 = sbr.rel (0) target = $region37
  $region36: #{rnn_forward.1} parent=0 // pred_region
    _
  $region37: #{rnn_forward.1} parent=0 // pred_fallthru
    _
  // Predicated region
  $region38: #{rnn_forward.1} parent=0 // pred_check
    _
  $region39: #{rnn_forward.1} parent=0 // pred_check_branch
    %3489 = sbr.rel (0) target = $region41
  $region40: #{rnn_forward.1} parent=0 // pred_region
    _
  $region41: #{rnn_forward.1} parent=0 // pred_fallthru
    _

</llo_original>
